<compile_context>
chip_gen: v6e
topology: v6e:2x2x1
jax: 0.10.0
libtpu: 0.0.40
codegen_flags: <defaults>
</compile_context>

<pallas_src>
import functools

import jax
import jax.numpy as jnp
from jax.experimental import pallas as pl
from jax.experimental.pallas import tpu as pltpu


# ----------------------------------------------------------------------------
# Fused Pallas kernel: conv1 -> conv2 (stride 2) -> L2 norm -> bilinear sample
# ----------------------------------------------------------------------------

def _fused_kernel(x_ref, coords_ref, w1_ref, b1_ref, w2_ref, b2_ref, o_ref,
                  a1pad_ref, *, h, w, c_in, c1, f):
    hw = h * w

    # ---- layer 1: 3x3 conv, stride 1, pad 1, ReLU (implicit GEMM in VMEM) ----
    # 9 shifted slices of the padded input tile -> 9 accumulating MXU matmuls.
    acc1 = jnp.zeros((hw, c1), jnp.float32)
    for t in range(9):
        dy, dx = t // 3, t % 3
        patch = x_ref[dy:dy + h, dx:dx + w, :].reshape(hw, c_in)   # f32 [hw, c_in]
        acc1 = acc1 + jnp.dot(patch.astype(jnp.bfloat16), w1_ref[t],
                              preferred_element_type=jnp.float32)
    a1 = jnp.maximum(acc1 + b1_ref[...], 0.0)                      # f32 epilogue

    # Keep the zero-padded layer-1 activation in VMEM scratch (no HBM round-trip).
    a1pad_ref[...] = jnp.zeros_like(a1pad_ref)
    a1pad_ref[1:h + 1, 1:w + 1, :] = a1.reshape(h, w, c1)

    # ---- layer 2: 3x3 conv, pad 1 (computed dense; stride-2 handled below) ----
    acc2 = jnp.zeros((hw, f), jnp.float32)
    for t in range(9):
        dy, dx = t // 3, t % 3
        patch = a1pad_ref[dy:dy + h, dx:dx + w, :].reshape(hw, c1)
        acc2 = acc2 + jnp.dot(patch.astype(jnp.bfloat16), w2_ref[t],
                              preferred_element_type=jnp.float32)
    y2 = acc2 + b2_ref[...]                                        # [hw, f]

    # Channel-wise L2 normalize (per spatial location, so normalizing the dense
    # map and sampling only the stride-2 (even, even) locations is exact).
    inv = jax.lax.rsqrt(jnp.maximum(jnp.sum(y2 * y2, axis=-1, keepdims=True), 1e-12))
    feat = y2 * inv                                                # f32 [hw, f]

    # ---- bilinear grid_sample (zeros padding) as ONE MXU matmul ----
    # Single fused weight matrix: separable tent weights against feature-map
    # coordinates; odd rows/cols (not part of the stride-2 feature map) and
    # out-of-bounds corners get weight exactly 0.
    coords = coords_ref[...]                                       # [ntot, 2] (xs, ys)
    xs = coords[:, 0:1]
    ys = coords[:, 1:2]
    col = jax.lax.broadcasted_iota(jnp.int32, (1, hw), 1).astype(jnp.float32)
    yy = jnp.floor(col / float(w))                                 # dense-map row
    xx = col - yy * float(w)                                       # dense-map col
    cyh = yy * 0.5                                                 # feature-map coords
    cxh = xx * 0.5
    even = jnp.logical_and(cxh == jnp.floor(cxh), cyh == jnp.floor(cyh))
    wx = jnp.maximum(1.0 - jnp.abs(xs - cxh), 0.0)                 # [ntot, hw]
    wy = jnp.maximum(1.0 - jnp.abs(ys - cyh), 0.0)
    wmat = jnp.where(even, wx * wy, 0.0)                           # <=4 nonzeros / row
    o_ref[...] = jnp.dot(wmat.astype(jnp.bfloat16), feat.astype(jnp.bfloat16),
                         preferred_element_type=jnp.float32).astype(o_ref.dtype)


# ----------------------------------------------------------------------------
# Wrapper glue (cheap XLA: stacking, padding, weight packing, coord transform)
# ----------------------------------------------------------------------------

def _pack_tap_weights(wgt):
    """[cout, cin, 3, 3] -> [9 (taps, dy*3+dx), cin, cout], bf16 for the MXU."""
    cout, cin = wgt.shape[0], wgt.shape[1]
    return jnp.transpose(wgt, (2, 3, 1, 0)).reshape(9, cin, cout).astype(jnp.bfloat16)


def _source_coords(pts, img_w, hf, wf):
    """Image-pixel (x, y) -> grid_sample source coords in feature-map pixels."""
    # Reference uses width only: pool_num = img.shape[-1] // feats.shape[-1].
    pool_num = img_w // wf
    x = pts[..., 0]
    y = pts[..., 1]
    xw = (x + 0.5) / float(pool_num) - 0.5
    yw = (y + 0.5) / float(pool_num) - 0.5
    # TODO(synk): normalize_coordinates not provided; GIFT-style divide by (dim-1)/2.
    xn = xw / ((wf - 1) * 0.5) - 1.0
    yn = yw / ((hf - 1) * 0.5) - 1.0
    # grid_sample align_corners=False un-normalization.
    xs = ((xn + 1.0) * wf - 1.0) * 0.5
    ys = ((yn + 1.0) * hf - 1.0) * 0.5
    return jnp.stack([xs, ys], axis=-1).astype(jnp.float32)


def fused_extract_and_sample(imgs, coords, params):
    """imgs: [bt, 3, h, w], coords: [bt, ntot, 2] -> sampled feats [bt, ntot, f]."""
    bt, c_in, h, w = imgs.shape
    c1 = params["w1"].shape[0]
    f = params["w2"].shape[0]
    ntot = coords.shape[1]

    # NHWC + spatial zero-pad (pad=1, k=3) for the in-kernel implicit GEMM.
    xpad = jnp.pad(imgs.transpose(0, 2, 3, 1), ((0, 0), (1, 1), (1, 1), (0, 0)))
    w1 = _pack_tap_weights(params["w1"])
    w2 = _pack_tap_weights(params["w2"])
    b1 = params["b1"].reshape(1, c1).astype(jnp.float32)
    b2 = params["b2"].reshape(1, f).astype(jnp.float32)

    kernel = functools.partial(_fused_kernel, h=h, w=w, c_in=c_in, c1=c1, f=f)
    return pl.pallas_call(
        kernel,
        out_shape=jax.ShapeDtypeStruct((bt, ntot, f), jnp.float32),
        grid=(bt,),
        in_specs=[
            pl.BlockSpec((None, h + 2, w + 2, c_in), lambda i: (i, 0, 0, 0)),  # image
            pl.BlockSpec((None, ntot, 2), lambda i: (i, 0, 0)),                # coords
            pl.BlockSpec((9, c_in, c1), lambda i: (0, 0, 0)),                  # w1
            pl.BlockSpec((1, c1), lambda i: (0, 0)),                           # b1
            pl.BlockSpec((9, c1, f), lambda i: (0, 0, 0)),                     # w2
            pl.BlockSpec((1, f), lambda i: (0, 0)),                            # b2
        ],
        out_specs=pl.BlockSpec((None, ntot, f), lambda i: (i, 0, 0)),
        scratch_shapes=[pltpu.VMEM((h + 2, w + 2, c1), jnp.float32)],
        compiler_params=pltpu.CompilerParams(
            dimension_semantics=("parallel",),   # shards images over v7x's 2 TCs
        ),
    )(xpad, coords, w1, b1, w2, b2)


# ----------------------------------------------------------------------------
# ExtractorWrapper.forward
# ----------------------------------------------------------------------------

def extractor_wrapper_forward(img_list, pts_list, grid_list, params, sn, rn):
    srn = sn * rn
    assert len(img_list) == srn

    imgs = jnp.stack(img_list, 0)                           # [srn, b, 3, h, w]
    _, b, c_in, h, w = imgs.shape
    hf, wf = h // 2, w // 2
    f = params["w2"].shape[0]

    pts = jnp.stack(pts_list, 0)                            # [srn, b, n, 2]
    n = pts.shape[2]
    if grid_list is not None:
        grids = jnp.stack(grid_list, 0)                     # [srn, b, hn, wn, 2]
        hn, wn = grids.shape[2], grids.shape[3]
        all_pts = jnp.concatenate([pts, grids.reshape(srn, b, hn * wn, 2)], axis=2)
    else:
        all_pts = pts
    ntot = all_pts.shape[2]

    coords = _source_coords(all_pts.reshape(srn * b, ntot, 2), w, hf, wf)
    sampled = fused_extract_and_sample(imgs.reshape(srn * b, c_in, h, w), coords, params)
    sampled = sampled.reshape(srn, b, ntot, f)

    gfeats = sampled[:, :, :n, :].transpose(1, 2, 3, 0).reshape(b, n, f, sn, rn)
    if grid_list is None:
        return gfeats
    neg = sampled[:, :, n:, :].reshape(srn, b, hn, wn, f)
    neg = neg.transpose(1, 2, 3, 4, 0).reshape(b, hn, wn, f, sn, rn)
    return gfeats, neg


# ----------------------------------------------------------------------------
# Main
# ----------------------------------------------------------------------------

if __name__ == "__main__":
    key = jax.random.PRNGKey(0)
    ks = jax.random.split(key, 8)

    # config: sample_scale_num=2, sample_rotate_num=2 -> 4 images
    sn, rn = 2, 2
    B, H, W = 2, 16, 16       # batch, image spatial
    N = 8                     # number of query points
    HN, WN = 4, 4             # negative grid
    C1, F = 8, 16             # conv channels / feature dim

    # deterministic synthetic extractor parameters
    params = {
        "w1": jax.random.normal(ks[0], (C1, 3, 3, 3), jnp.float32) * 0.1,
        "b1": jax.random.normal(ks[1], (C1,), jnp.float32) * 0.1,
        "w2": jax.random.normal(ks[2], (F, C1, 3, 3), jnp.float32) * 0.1,
        "b2": jax.random.normal(ks[3], (F,), jnp.float32) * 0.1,
    }

    n_imgs = sn * rn
    img_list = [jax.random.normal(k, (B, 3, H, W), jnp.float32)
                for k in jax.random.split(ks[4], n_imgs)]
    pts_list = [jax.random.uniform(k, (B, N, 2), jnp.float32, 0.0, float(W - 1))
                for k in jax.random.split(ks[5], n_imgs)]
    grid_list = [jax.random.uniform(k, (B, HN, WN, 2), jnp.float32, 0.0, float(W - 1))
                 for k in jax.random.split(ks[6], n_imgs)]

    gfeats, neg_gfeats = extractor_wrapper_forward(img_list, pts_list, grid_list, params, sn, rn)
    gfeats = jax.block_until_ready(gfeats)
    neg_gfeats = jax.block_until_ready(neg_gfeats)

    assert gfeats.shape == (B, N, F, sn, rn), gfeats.shape
    assert neg_gfeats.shape == (B, HN, WN, F, sn, rn), neg_gfeats.shape
    assert bool(jnp.all(jnp.isfinite(gfeats))) and bool(jnp.all(jnp.isfinite(neg_gfeats)))

    print("KERNEL_OK")
</pallas_src>

<mosaic_0001>
module attributes {stable_mosaic.version = 11 : i64} {
  func.func @_fused_kernel(%arg0: i32, %arg1: memref<1x18x18x3xf32, #tpu.memory_space<vmem>>, %arg2: memref<1x24x2xf32, #tpu.memory_space<vmem>>, %arg3: memref<9x3x8xbf16, #tpu.memory_space<vmem>>, %arg4: memref<1x8xf32, #tpu.memory_space<vmem>>, %arg5: memref<9x8x16xbf16, #tpu.memory_space<vmem>>, %arg6: memref<1x16xf32, #tpu.memory_space<vmem>>, %arg7: memref<1x24x16xf32, #tpu.memory_space<vmem>>, %arg8: memref<18x18x8xf32, #tpu.memory_space<vmem>>) attributes {dimension_semantics = [#tpu.dimension_semantics<parallel>], iteration_bounds = array<i64: 8>, scalar_prefetch = 0 : i64, scratch_operands = 1 : i64, tpu.core_type = #tpu.core_type<tc>, window_params = [{transform_indices = @transform_0, window_bounds = array<i64: 1, 18, 18, 3>}, {transform_indices = @transform_1, window_bounds = array<i64: 1, 24, 2>}, {pipeline_mode = #tpu.pipeline_mode<synchronous>, transform_indices = @transform_2, window_bounds = array<i64: 9, 3, 8>}, {pipeline_mode = #tpu.pipeline_mode<synchronous>, transform_indices = @transform_3, window_bounds = array<i64: 1, 8>}, {pipeline_mode = #tpu.pipeline_mode<synchronous>, transform_indices = @transform_4, window_bounds = array<i64: 9, 8, 16>}, {pipeline_mode = #tpu.pipeline_mode<synchronous>, transform_indices = @transform_5, window_bounds = array<i64: 1, 16>}, {transform_indices = @transform_6, window_bounds = array<i64: 1, 24, 16>}]} {
    %cst = arith.constant 0.000000e+00 : f32
    %0 = vector.broadcast %cst : f32 to vector<256x8xf32>
    %c0 = arith.constant 0 : index
    %c0_0 = arith.constant 0 : index
    %c0_1 = arith.constant 0 : index
    %c0_2 = arith.constant 0 : index
    %1 = vector.load %arg1[%c0, %c0_0, %c0_1, %c0_2] : memref<1x18x18x3xf32, #tpu.memory_space<vmem>>, vector<1x16x16x3xf32>
    %2 = vector.shape_cast %1 : vector<1x16x16x3xf32> to vector<16x16x3xf32>
    %3 = vector.shape_cast %2 : vector<16x16x3xf32> to vector<256x3xf32>
    %4 = arith.truncf %3 : vector<256x3xf32> to vector<256x3xbf16>
    %c0_3 = arith.constant 0 : index
    %c0_4 = arith.constant 0 : index
    %c0_5 = arith.constant 0 : index
    %5 = vector.load %arg3[%c0_3, %c0_4, %c0_5] : memref<9x3x8xbf16, #tpu.memory_space<vmem>>, vector<1x3x8xbf16>
    %6 = vector.shape_cast %5 : vector<1x3x8xbf16> to vector<3x8xbf16>
    %cst_6 = arith.constant dense<0.000000e+00> : vector<256x8xf32>
    %7 = tpu.matmul %4, %6, %cst_6 {dimension_numbers = #tpu.dot_dimension_numbers<[1], [0], [0], [1], [0, 0, 1, 1], [], []>} : vector<256x3xbf16>, vector<3x8xbf16>, vector<256x8xf32> -> vector<256x8xf32>
    %8 = arith.addf %0, %7 : vector<256x8xf32>
    %c0_7 = arith.constant 0 : index
    %c0_8 = arith.constant 0 : index
    %c1 = arith.constant 1 : index
    %c0_9 = arith.constant 0 : index
    %9 = vector.load %arg1[%c0_7, %c0_8, %c1, %c0_9] : memref<1x18x18x3xf32, #tpu.memory_space<vmem>>, vector<1x16x16x3xf32>
    %10 = vector.shape_cast %9 : vector<1x16x16x3xf32> to vector<16x16x3xf32>
    %11 = vector.shape_cast %10 : vector<16x16x3xf32> to vector<256x3xf32>
    %12 = arith.truncf %11 : vector<256x3xf32> to vector<256x3xbf16>
    %c1_10 = arith.constant 1 : index
    %c0_11 = arith.constant 0 : index
    %c0_12 = arith.constant 0 : index
    %13 = vector.load %arg3[%c1_10, %c0_11, %c0_12] : memref<9x3x8xbf16, #tpu.memory_space<vmem>>, vector<1x3x8xbf16>
    %14 = vector.shape_cast %13 : vector<1x3x8xbf16> to vector<3x8xbf16>
    %cst_13 = arith.constant dense<0.000000e+00> : vector<256x8xf32>
    %15 = tpu.matmul %12, %14, %cst_13 {dimension_numbers = #tpu.dot_dimension_numbers<[1], [0], [0], [1], [0, 0, 1, 1], [], []>} : vector<256x3xbf16>, vector<3x8xbf16>, vector<256x8xf32> -> vector<256x8xf32>
    %16 = arith.addf %8, %15 : vector<256x8xf32>
    %c0_14 = arith.constant 0 : index
    %c0_15 = arith.constant 0 : index
    %c2 = arith.constant 2 : index
    %c0_16 = arith.constant 0 : index
    %17 = vector.load %arg1[%c0_14, %c0_15, %c2, %c0_16] : memref<1x18x18x3xf32, #tpu.memory_space<vmem>>, vector<1x16x16x3xf32>
    %18 = vector.shape_cast %17 : vector<1x16x16x3xf32> to vector<16x16x3xf32>
    %19 = vector.shape_cast %18 : vector<16x16x3xf32> to vector<256x3xf32>
    %20 = arith.truncf %19 : vector<256x3xf32> to vector<256x3xbf16>
    %c2_17 = arith.constant 2 : index
    %c0_18 = arith.constant 0 : index
    %c0_19 = arith.constant 0 : index
    %21 = vector.load %arg3[%c2_17, %c0_18, %c0_19] : memref<9x3x8xbf16, #tpu.memory_space<vmem>>, vector<1x3x8xbf16>
    %22 = vector.shape_cast %21 : vector<1x3x8xbf16> to vector<3x8xbf16>
    %cst_20 = arith.constant dense<0.000000e+00> : vector<256x8xf32>
    %23 = tpu.matmul %20, %22, %cst_20 {dimension_numbers = #tpu.dot_dimension_numbers<[1], [0], [0], [1], [0, 0, 1, 1], [], []>} : vector<256x3xbf16>, vector<3x8xbf16>, vector<256x8xf32> -> vector<256x8xf32>
    %24 = arith.addf %16, %23 : vector<256x8xf32>
    %c0_21 = arith.constant 0 : index
    %c1_22 = arith.constant 1 : index
    %c0_23 = arith.constant 0 : index
    %c0_24 = arith.constant 0 : index
    %25 = vector.load %arg1[%c0_21, %c1_22, %c0_23, %c0_24] : memref<1x18x18x3xf32, #tpu.memory_space<vmem>>, vector<1x16x16x3xf32>
    %26 = vector.shape_cast %25 : vector<1x16x16x3xf32> to vector<16x16x3xf32>
    %27 = vector.shape_cast %26 : vector<16x16x3xf32> to vector<256x3xf32>
    %28 = arith.truncf %27 : vector<256x3xf32> to vector<256x3xbf16>
    %c3 = arith.constant 3 : index
    %c0_25 = arith.constant 0 : index
    %c0_26 = arith.constant 0 : index
    %29 = vector.load %arg3[%c3, %c0_25, %c0_26] : memref<9x3x8xbf16, #tpu.memory_space<vmem>>, vector<1x3x8xbf16>
    %30 = vector.shape_cast %29 : vector<1x3x8xbf16> to vector<3x8xbf16>
    %cst_27 = arith.constant dense<0.000000e+00> : vector<256x8xf32>
    %31 = tpu.matmul %28, %30, %cst_27 {dimension_numbers = #tpu.dot_dimension_numbers<[1], [0], [0], [1], [0, 0, 1, 1], [], []>} : vector<256x3xbf16>, vector<3x8xbf16>, vector<256x8xf32> -> vector<256x8xf32>
    %32 = arith.addf %24, %31 : vector<256x8xf32>
    %c0_28 = arith.constant 0 : index
    %c1_29 = arith.constant 1 : index
    %c1_30 = arith.constant 1 : index
    %c0_31 = arith.constant 0 : index
    %33 = vector.load %arg1[%c0_28, %c1_29, %c1_30, %c0_31] : memref<1x18x18x3xf32, #tpu.memory_space<vmem>>, vector<1x16x16x3xf32>
    %34 = vector.shape_cast %33 : vector<1x16x16x3xf32> to vector<16x16x3xf32>
    %35 = vector.shape_cast %34 : vector<16x16x3xf32> to vector<256x3xf32>
    %36 = arith.truncf %35 : vector<256x3xf32> to vector<256x3xbf16>
    %c4 = arith.constant 4 : index
    %c0_32 = arith.constant 0 : index
    %c0_33 = arith.constant 0 : index
    %37 = vector.load %arg3[%c4, %c0_32, %c0_33] : memref<9x3x8xbf16, #tpu.memory_space<vmem>>, vector<1x3x8xbf16>
    %38 = vector.shape_cast %37 : vector<1x3x8xbf16> to vector<3x8xbf16>
    %cst_34 = arith.constant dense<0.000000e+00> : vector<256x8xf32>
    %39 = tpu.matmul %36, %38, %cst_34 {dimension_numbers = #tpu.dot_dimension_numbers<[1], [0], [0], [1], [0, 0, 1, 1], [], []>} : vector<256x3xbf16>, vector<3x8xbf16>, vector<256x8xf32> -> vector<256x8xf32>
    %40 = arith.addf %32, %39 : vector<256x8xf32>
    %c0_35 = arith.constant 0 : index
    %c1_36 = arith.constant 1 : index
    %c2_37 = arith.constant 2 : index
    %c0_38 = arith.constant 0 : index
    %41 = vector.load %arg1[%c0_35, %c1_36, %c2_37, %c0_38] : memref<1x18x18x3xf32, #tpu.memory_space<vmem>>, vector<1x16x16x3xf32>
    %42 = vector.shape_cast %41 : vector<1x16x16x3xf32> to vector<16x16x3xf32>
    %43 = vector.shape_cast %42 : vector<16x16x3xf32> to vector<256x3xf32>
    %44 = arith.truncf %43 : vector<256x3xf32> to vector<256x3xbf16>
    %c5 = arith.constant 5 : index
    %c0_39 = arith.constant 0 : index
    %c0_40 = arith.constant 0 : index
    %45 = vector.load %arg3[%c5, %c0_39, %c0_40] : memref<9x3x8xbf16, #tpu.memory_space<vmem>>, vector<1x3x8xbf16>
    %46 = vector.shape_cast %45 : vector<1x3x8xbf16> to vector<3x8xbf16>
    %cst_41 = arith.constant dense<0.000000e+00> : vector<256x8xf32>
    %47 = tpu.matmul %44, %46, %cst_41 {dimension_numbers = #tpu.dot_dimension_numbers<[1], [0], [0], [1], [0, 0, 1, 1], [], []>} : vector<256x3xbf16>, vector<3x8xbf16>, vector<256x8xf32> -> vector<256x8xf32>
    %48 = arith.addf %40, %47 : vector<256x8xf32>
    %c0_42 = arith.constant 0 : index
    %c2_43 = arith.constant 2 : index
    %c0_44 = arith.constant 0 : index
    %c0_45 = arith.constant 0 : index
    %49 = vector.load %arg1[%c0_42, %c2_43, %c0_44, %c0_45] : memref<1x18x18x3xf32, #tpu.memory_space<vmem>>, vector<1x16x16x3xf32>
    %50 = vector.shape_cast %49 : vector<1x16x16x3xf32> to vector<16x16x3xf32>
    %51 = vector.shape_cast %50 : vector<16x16x3xf32> to vector<256x3xf32>
    %52 = arith.truncf %51 : vector<256x3xf32> to vector<256x3xbf16>
    %c6 = arith.constant 6 : index
    %c0_46 = arith.constant 0 : index
    %c0_47 = arith.constant 0 : index
    %53 = vector.load %arg3[%c6, %c0_46, %c0_47] : memref<9x3x8xbf16, #tpu.memory_space<vmem>>, vector<1x3x8xbf16>
    %54 = vector.shape_cast %53 : vector<1x3x8xbf16> to vector<3x8xbf16>
    %cst_48 = arith.constant dense<0.000000e+00> : vector<256x8xf32>
    %55 = tpu.matmul %52, %54, %cst_48 {dimension_numbers = #tpu.dot_dimension_numbers<[1], [0], [0], [1], [0, 0, 1, 1], [], []>} : vector<256x3xbf16>, vector<3x8xbf16>, vector<256x8xf32> -> vector<256x8xf32>
    %56 = arith.addf %48, %55 : vector<256x8xf32>
    %c0_49 = arith.constant 0 : index
    %c2_50 = arith.constant 2 : index
    %c1_51 = arith.constant 1 : index
    %c0_52 = arith.constant 0 : index
    %57 = vector.load %arg1[%c0_49, %c2_50, %c1_51, %c0_52] : memref<1x18x18x3xf32, #tpu.memory_space<vmem>>, vector<1x16x16x3xf32>
    %58 = vector.shape_cast %57 : vector<1x16x16x3xf32> to vector<16x16x3xf32>
    %59 = vector.shape_cast %58 : vector<16x16x3xf32> to vector<256x3xf32>
    %60 = arith.truncf %59 : vector<256x3xf32> to vector<256x3xbf16>
    %c7 = arith.constant 7 : index
    %c0_53 = arith.constant 0 : index
    %c0_54 = arith.constant 0 : index
    %61 = vector.load %arg3[%c7, %c0_53, %c0_54] : memref<9x3x8xbf16, #tpu.memory_space<vmem>>, vector<1x3x8xbf16>
    %62 = vector.shape_cast %61 : vector<1x3x8xbf16> to vector<3x8xbf16>
    %cst_55 = arith.constant dense<0.000000e+00> : vector<256x8xf32>
    %63 = tpu.matmul %60, %62, %cst_55 {dimension_numbers = #tpu.dot_dimension_numbers<[1], [0], [0], [1], [0, 0, 1, 1], [], []>} : vector<256x3xbf16>, vector<3x8xbf16>, vector<256x8xf32> -> vector<256x8xf32>
    %64 = arith.addf %56, %63 : vector<256x8xf32>
    %c0_56 = arith.constant 0 : index
    %c2_57 = arith.constant 2 : index
    %c2_58 = arith.constant 2 : index
    %c0_59 = arith.constant 0 : index
    %65 = vector.load %arg1[%c0_56, %c2_57, %c2_58, %c0_59] : memref<1x18x18x3xf32, #tpu.memory_space<vmem>>, vector<1x16x16x3xf32>
    %66 = vector.shape_cast %65 : vector<1x16x16x3xf32> to vector<16x16x3xf32>
    %67 = vector.shape_cast %66 : vector<16x16x3xf32> to vector<256x3xf32>
    %68 = arith.truncf %67 : vector<256x3xf32> to vector<256x3xbf16>
    %c8 = arith.constant 8 : index
    %c0_60 = arith.constant 0 : index
    %c0_61 = arith.constant 0 : index
    %69 = vector.load %arg3[%c8, %c0_60, %c0_61] : memref<9x3x8xbf16, #tpu.memory_space<vmem>>, vector<1x3x8xbf16>
    %70 = vector.shape_cast %69 : vector<1x3x8xbf16> to vector<3x8xbf16>
    %cst_62 = arith.constant dense<0.000000e+00> : vector<256x8xf32>
    %71 = tpu.matmul %68, %70, %cst_62 {dimension_numbers = #tpu.dot_dimension_numbers<[1], [0], [0], [1], [0, 0, 1, 1], [], []>} : vector<256x3xbf16>, vector<3x8xbf16>, vector<256x8xf32> -> vector<256x8xf32>
    %72 = arith.addf %64, %71 : vector<256x8xf32>
    %c0_63 = arith.constant 0 : index
    %c0_64 = arith.constant 0 : index
    %73 = vector.load %arg4[%c0_63, %c0_64] : memref<1x8xf32, #tpu.memory_space<vmem>>, vector<1x8xf32>
    %74 = vector.broadcast %73 : vector<1x8xf32> to vector<256x8xf32>
    %75 = arith.addf %72, %74 : vector<256x8xf32>
    %cst_65 = arith.constant 0.000000e+00 : f32
    %76 = vector.broadcast %cst_65 : f32 to vector<256x8xf32>
    %77 = arith.maximumf %75, %76 : vector<256x8xf32>
    %cst_66 = arith.constant 0.000000e+00 : f32
    %78 = vector.broadcast %cst_66 : f32 to vector<18x18x8xf32>
    %c0_67 = arith.constant 0 : index
    %c0_68 = arith.constant 0 : index
    %c0_69 = arith.constant 0 : index
    %79 = vector.load %arg8[%c0_67, %c0_68, %c0_69] : memref<18x18x8xf32, #tpu.memory_space<vmem>>, vector<18x18x8xf32>
    tpu.vector_store %arg8[%c0_67, %c0_68, %c0_69], %78 {strides = array<i32>} : memref<18x18x8xf32, #tpu.memory_space<vmem>>, vector<18x18x8xf32>,
    %80 = vector.shape_cast %77 : vector<256x8xf32> to vector<16x16x8xf32>
    %c1_70 = arith.constant 1 : index
    %c1_71 = arith.constant 1 : index
    %c0_72 = arith.constant 0 : index
    %81 = vector.load %arg8[%c1_70, %c1_71, %c0_72] : memref<18x18x8xf32, #tpu.memory_space<vmem>>, vector<16x16x8xf32>
    tpu.vector_store %arg8[%c1_70, %c1_71, %c0_72], %80 {strides = array<i32>} : memref<18x18x8xf32, #tpu.memory_space<vmem>>, vector<16x16x8xf32>,
    %cst_73 = arith.constant 0.000000e+00 : f32
    %82 = vector.broadcast %cst_73 : f32 to vector<256x16xf32>
    %c0_74 = arith.constant 0 : index
    %c0_75 = arith.constant 0 : index
    %c0_76 = arith.constant 0 : index
    %83 = vector.load %arg8[%c0_74, %c0_75, %c0_76] : memref<18x18x8xf32, #tpu.memory_space<vmem>>, vector<16x16x8xf32>
    %84 = vector.shape_cast %83 : vector<16x16x8xf32> to vector<256x8xf32>
    %85 = arith.truncf %84 : vector<256x8xf32> to vector<256x8xbf16>
    %c0_77 = arith.constant 0 : index
    %c0_78 = arith.constant 0 : index
    %c0_79 = arith.constant 0 : index
    %86 = vector.load %arg5[%c0_77, %c0_78, %c0_79] : memref<9x8x16xbf16, #tpu.memory_space<vmem>>, vector<1x8x16xbf16>
    %87 = vector.shape_cast %86 : vector<1x8x16xbf16> to vector<8x16xbf16>
    %cst_80 = arith.constant dense<0.000000e+00> : vector<256x16xf32>
    %88 = tpu.matmul %85, %87, %cst_80 {dimension_numbers = #tpu.dot_dimension_numbers<[1], [0], [0], [1], [0, 0, 1, 1], [], []>} : vector<256x8xbf16>, vector<8x16xbf16>, vector<256x16xf32> -> vector<256x16xf32>
    %89 = arith.addf %82, %88 : vector<256x16xf32>
    %c0_81 = arith.constant 0 : index
    %c1_82 = arith.constant 1 : index
    %c0_83 = arith.constant 0 : index
    %90 = vector.load %arg8[%c0_81, %c1_82, %c0_83] : memref<18x18x8xf32, #tpu.memory_space<vmem>>, vector<16x16x8xf32>
    %91 = vector.shape_cast %90 : vector<16x16x8xf32> to vector<256x8xf32>
    %92 = arith.truncf %91 : vector<256x8xf32> to vector<256x8xbf16>
    %c1_84 = arith.constant 1 : index
    %c0_85 = arith.constant 0 : index
    %c0_86 = arith.constant 0 : index
    %93 = vector.load %arg5[%c1_84, %c0_85, %c0_86] : memref<9x8x16xbf16, #tpu.memory_space<vmem>>, vector<1x8x16xbf16>
    %94 = vector.shape_cast %93 : vector<1x8x16xbf16> to vector<8x16xbf16>
    %cst_87 = arith.constant dense<0.000000e+00> : vector<256x16xf32>
    %95 = tpu.matmul %92, %94, %cst_87 {dimension_numbers = #tpu.dot_dimension_numbers<[1], [0], [0], [1], [0, 0, 1, 1], [], []>} : vector<256x8xbf16>, vector<8x16xbf16>, vector<256x16xf32> -> vector<256x16xf32>
    %96 = arith.addf %89, %95 : vector<256x16xf32>
    %c0_88 = arith.constant 0 : index
    %c2_89 = arith.constant 2 : index
    %c0_90 = arith.constant 0 : index
    %97 = vector.load %arg8[%c0_88, %c2_89, %c0_90] : memref<18x18x8xf32, #tpu.memory_space<vmem>>, vector<16x16x8xf32>
    %98 = vector.shape_cast %97 : vector<16x16x8xf32> to vector<256x8xf32>
    %99 = arith.truncf %98 : vector<256x8xf32> to vector<256x8xbf16>
    %c2_91 = arith.constant 2 : index
    %c0_92 = arith.constant 0 : index
    %c0_93 = arith.constant 0 : index
    %100 = vector.load %arg5[%c2_91, %c0_92, %c0_93] : memref<9x8x16xbf16, #tpu.memory_space<vmem>>, vector<1x8x16xbf16>
    %101 = vector.shape_cast %100 : vector<1x8x16xbf16> to vector<8x16xbf16>
    %cst_94 = arith.constant dense<0.000000e+00> : vector<256x16xf32>
    %102 = tpu.matmul %99, %101, %cst_94 {dimension_numbers = #tpu.dot_dimension_numbers<[1], [0], [0], [1], [0, 0, 1, 1], [], []>} : vector<256x8xbf16>, vector<8x16xbf16>, vector<256x16xf32> -> vector<256x16xf32>
    %103 = arith.addf %96, %102 : vector<256x16xf32>
    %c1_95 = arith.constant 1 : index
    %c0_96 = arith.constant 0 : index
    %c0_97 = arith.constant 0 : index
    %104 = vector.load %arg8[%c1_95, %c0_96, %c0_97] : memref<18x18x8xf32, #tpu.memory_space<vmem>>, vector<16x16x8xf32>
    %105 = vector.shape_cast %104 : vector<16x16x8xf32> to vector<256x8xf32>
    %106 = arith.truncf %105 : vector<256x8xf32> to vector<256x8xbf16>
    %c3_98 = arith.constant 3 : index
    %c0_99 = arith.constant 0 : index
    %c0_100 = arith.constant 0 : index
    %107 = vector.load %arg5[%c3_98, %c0_99, %c0_100] : memref<9x8x16xbf16, #tpu.memory_space<vmem>>, vector<1x8x16xbf16>
    %108 = vector.shape_cast %107 : vector<1x8x16xbf16> to vector<8x16xbf16>
    %cst_101 = arith.constant dense<0.000000e+00> : vector<256x16xf32>
    %109 = tpu.matmul %106, %108, %cst_101 {dimension_numbers = #tpu.dot_dimension_numbers<[1], [0], [0], [1], [0, 0, 1, 1], [], []>} : vector<256x8xbf16>, vector<8x16xbf16>, vector<256x16xf32> -> vector<256x16xf32>
    %110 = arith.addf %103, %109 : vector<256x16xf32>
    %c1_102 = arith.constant 1 : index
    %c1_103 = arith.constant 1 : index
    %c0_104 = arith.constant 0 : index
    %111 = vector.load %arg8[%c1_102, %c1_103, %c0_104] : memref<18x18x8xf32, #tpu.memory_space<vmem>>, vector<16x16x8xf32>
    %112 = vector.shape_cast %111 : vector<16x16x8xf32> to vector<256x8xf32>
    %113 = arith.truncf %112 : vector<256x8xf32> to vector<256x8xbf16>
    %c4_105 = arith.constant 4 : index
    %c0_106 = arith.constant 0 : index
    %c0_107 = arith.constant 0 : index
    %114 = vector.load %arg5[%c4_105, %c0_106, %c0_107] : memref<9x8x16xbf16, #tpu.memory_space<vmem>>, vector<1x8x16xbf16>
    %115 = vector.shape_cast %114 : vector<1x8x16xbf16> to vector<8x16xbf16>
    %cst_108 = arith.constant dense<0.000000e+00> : vector<256x16xf32>
    %116 = tpu.matmul %113, %115, %cst_108 {dimension_numbers = #tpu.dot_dimension_numbers<[1], [0], [0], [1], [0, 0, 1, 1], [], []>} : vector<256x8xbf16>, vector<8x16xbf16>, vector<256x16xf32> -> vector<256x16xf32>
    %117 = arith.addf %110, %116 : vector<256x16xf32>
    %c1_109 = arith.constant 1 : index
    %c2_110 = arith.constant 2 : index
    %c0_111 = arith.constant 0 : index
    %118 = vector.load %arg8[%c1_109, %c2_110, %c0_111] : memref<18x18x8xf32, #tpu.memory_space<vmem>>, vector<16x16x8xf32>
    %119 = vector.shape_cast %118 : vector<16x16x8xf32> to vector<256x8xf32>
    %120 = arith.truncf %119 : vector<256x8xf32> to vector<256x8xbf16>
    %c5_112 = arith.constant 5 : index
    %c0_113 = arith.constant 0 : index
    %c0_114 = arith.constant 0 : index
    %121 = vector.load %arg5[%c5_112, %c0_113, %c0_114] : memref<9x8x16xbf16, #tpu.memory_space<vmem>>, vector<1x8x16xbf16>
    %122 = vector.shape_cast %121 : vector<1x8x16xbf16> to vector<8x16xbf16>
    %cst_115 = arith.constant dense<0.000000e+00> : vector<256x16xf32>
    %123 = tpu.matmul %120, %122, %cst_115 {dimension_numbers = #tpu.dot_dimension_numbers<[1], [0], [0], [1], [0, 0, 1, 1], [], []>} : vector<256x8xbf16>, vector<8x16xbf16>, vector<256x16xf32> -> vector<256x16xf32>
    %124 = arith.addf %117, %123 : vector<256x16xf32>
    %c2_116 = arith.constant 2 : index
    %c0_117 = arith.constant 0 : index
    %c0_118 = arith.constant 0 : index
    %125 = vector.load %arg8[%c2_116, %c0_117, %c0_118] : memref<18x18x8xf32, #tpu.memory_space<vmem>>, vector<16x16x8xf32>
    %126 = vector.shape_cast %125 : vector<16x16x8xf32> to vector<256x8xf32>
    %127 = arith.truncf %126 : vector<256x8xf32> to vector<256x8xbf16>
    %c6_119 = arith.constant 6 : index
    %c0_120 = arith.constant 0 : index
    %c0_121 = arith.constant 0 : index
    %128 = vector.load %arg5[%c6_119, %c0_120, %c0_121] : memref<9x8x16xbf16, #tpu.memory_space<vmem>>, vector<1x8x16xbf16>
    %129 = vector.shape_cast %128 : vector<1x8x16xbf16> to vector<8x16xbf16>
    %cst_122 = arith.constant dense<0.000000e+00> : vector<256x16xf32>
    %130 = tpu.matmul %127, %129, %cst_122 {dimension_numbers = #tpu.dot_dimension_numbers<[1], [0], [0], [1], [0, 0, 1, 1], [], []>} : vector<256x8xbf16>, vector<8x16xbf16>, vector<256x16xf32> -> vector<256x16xf32>
    %131 = arith.addf %124, %130 : vector<256x16xf32>
    %c2_123 = arith.constant 2 : index
    %c1_124 = arith.constant 1 : index
    %c0_125 = arith.constant 0 : index
    %132 = vector.load %arg8[%c2_123, %c1_124, %c0_125] : memref<18x18x8xf32, #tpu.memory_space<vmem>>, vector<16x16x8xf32>
    %133 = vector.shape_cast %132 : vector<16x16x8xf32> to vector<256x8xf32>
    %134 = arith.truncf %133 : vector<256x8xf32> to vector<256x8xbf16>
    %c7_126 = arith.constant 7 : index
    %c0_127 = arith.constant 0 : index
    %c0_128 = arith.constant 0 : index
    %135 = vector.load %arg5[%c7_126, %c0_127, %c0_128] : memref<9x8x16xbf16, #tpu.memory_space<vmem>>, vector<1x8x16xbf16>
    %136 = vector.shape_cast %135 : vector<1x8x16xbf16> to vector<8x16xbf16>
    %cst_129 = arith.constant dense<0.000000e+00> : vector<256x16xf32>
    %137 = tpu.matmul %134, %136, %cst_129 {dimension_numbers = #tpu.dot_dimension_numbers<[1], [0], [0], [1], [0, 0, 1, 1], [], []>} : vector<256x8xbf16>, vector<8x16xbf16>, vector<256x16xf32> -> vector<256x16xf32>
    %138 = arith.addf %131, %137 : vector<256x16xf32>
    %c2_130 = arith.constant 2 : index
    %c2_131 = arith.constant 2 : index
    %c0_132 = arith.constant 0 : index
    %139 = vector.load %arg8[%c2_130, %c2_131, %c0_132] : memref<18x18x8xf32, #tpu.memory_space<vmem>>, vector<16x16x8xf32>
    %140 = vector.shape_cast %139 : vector<16x16x8xf32> to vector<256x8xf32>
    %141 = arith.truncf %140 : vector<256x8xf32> to vector<256x8xbf16>
    %c8_133 = arith.constant 8 : index
    %c0_134 = arith.constant 0 : index
    %c0_135 = arith.constant 0 : index
    %142 = vector.load %arg5[%c8_133, %c0_134, %c0_135] : memref<9x8x16xbf16, #tpu.memory_space<vmem>>, vector<1x8x16xbf16>
    %143 = vector.shape_cast %142 : vector<1x8x16xbf16> to vector<8x16xbf16>
    %cst_136 = arith.constant dense<0.000000e+00> : vector<256x16xf32>
    %144 = tpu.matmul %141, %143, %cst_136 {dimension_numbers = #tpu.dot_dimension_numbers<[1], [0], [0], [1], [0, 0, 1, 1], [], []>} : vector<256x8xbf16>, vector<8x16xbf16>, vector<256x16xf32> -> vector<256x16xf32>
    %145 = arith.addf %138, %144 : vector<256x16xf32>
    %c0_137 = arith.constant 0 : index
    %c0_138 = arith.constant 0 : index
    %146 = vector.load %arg6[%c0_137, %c0_138] : memref<1x16xf32, #tpu.memory_space<vmem>>, vector<1x16xf32>
    %147 = vector.broadcast %146 : vector<1x16xf32> to vector<256x16xf32>
    %148 = arith.addf %145, %147 : vector<256x16xf32>
    %149 = arith.mulf %148, %148 : vector<256x16xf32>
    %cst_139 = arith.constant dense<0.000000e+00> : vector<256xf32>
    %150 = vector.multi_reduction <add>, %149, %cst_139 [1] : vector<256x16xf32> to vector<256xf32>
    %151 = vector.shape_cast %150 : vector<256xf32> to vector<256x1xf32>
    %cst_140 = arith.constant 9.99999996E-13 : f32
    %152 = vector.broadcast %cst_140 : f32 to vector<256x1xf32>
    %153 = arith.maximumf %151, %152 : vector<256x1xf32>
    %154 = math.rsqrt %153 : vector<256x1xf32>
    %155 = vector.broadcast %154 : vector<256x1xf32> to vector<256x16xf32>
    %156 = arith.mulf %148, %155 : vector<256x16xf32>
    %c0_141 = arith.constant 0 : index
    %c0_142 = arith.constant 0 : index
    %c0_143 = arith.constant 0 : index
    %157 = vector.load %arg2[%c0_141, %c0_142, %c0_143] : memref<1x24x2xf32, #tpu.memory_space<vmem>>, vector<1x24x2xf32>
    %158 = vector.shape_cast %157 : vector<1x24x2xf32> to vector<24x2xf32>
    %159 = vector.extract_strided_slice %158 {offsets = [0, 0], sizes = [24, 1], strides = [1, 1]} : vector<24x2xf32> to vector<24x1xf32>
    %160 = vector.extract_strided_slice %158 {offsets = [0, 1], sizes = [24, 1], strides = [1, 1]} : vector<24x2xf32> to vector<24x1xf32>
    %161 = tpu.iota {dimensions = array<i32: 1>} : vector<1x256xi32>
    %162 = arith.sitofp %161 : vector<1x256xi32> to vector<1x256xf32>
    %cst_144 = arith.constant 1.600000e+01 : f32
    %163 = vector.broadcast %cst_144 : f32 to vector<1x256xf32>
    %164 = arith.divf %162, %163 : vector<1x256xf32>
    %165 = math.floor %164 : vector<1x256xf32>
    %cst_145 = arith.constant 1.600000e+01 : f32
    %166 = vector.broadcast %cst_145 : f32 to vector<1x256xf32>
    %167 = arith.mulf %165, %166 : vector<1x256xf32>
    %168 = arith.subf %162, %167 : vector<1x256xf32>
    %cst_146 = arith.constant 5.000000e-01 : f32
    %169 = vector.broadcast %cst_146 : f32 to vector<1x256xf32>
    %170 = arith.mulf %165, %169 : vector<1x256xf32>
    %cst_147 = arith.constant 5.000000e-01 : f32
    %171 = vector.broadcast %cst_147 : f32 to vector<1x256xf32>
    %172 = arith.mulf %168, %171 : vector<1x256xf32>
    %173 = math.floor %172 : vector<1x256xf32>
    %174 = arith.cmpf oeq, %172, %173 : vector<1x256xf32>
    %175 = math.floor %170 : vector<1x256xf32>
    %176 = arith.cmpf oeq, %170, %175 : vector<1x256xf32>
    %177 = arith.andi %174, %176 : vector<1x256xi1>
    %178 = vector.broadcast %159 : vector<24x1xf32> to vector<24x256xf32>
    %179 = vector.broadcast %172 : vector<1x256xf32> to vector<24x256xf32>
    %180 = arith.subf %178, %179 : vector<24x256xf32>
    %181 = math.absf %180 : vector<24x256xf32>
    %cst_148 = arith.constant 1.000000e+00 : f32
    %182 = vector.broadcast %cst_148 : f32 to vector<24x256xf32>
    %183 = arith.subf %182, %181 : vector<24x256xf32>
    %cst_149 = arith.constant 0.000000e+00 : f32
    %184 = vector.broadcast %cst_149 : f32 to vector<24x256xf32>
    %185 = arith.maximumf %183, %184 : vector<24x256xf32>
    %186 = vector.broadcast %160 : vector<24x1xf32> to vector<24x256xf32>
    %187 = vector.broadcast %170 : vector<1x256xf32> to vector<24x256xf32>
    %188 = arith.subf %186, %187 : vector<24x256xf32>
    %189 = math.absf %188 : vector<24x256xf32>
    %cst_150 = arith.constant 1.000000e+00 : f32
    %190 = vector.broadcast %cst_150 : f32 to vector<24x256xf32>
    %191 = arith.subf %190, %189 : vector<24x256xf32>
    %cst_151 = arith.constant 0.000000e+00 : f32
    %192 = vector.broadcast %cst_151 : f32 to vector<24x256xf32>
    %193 = arith.maximumf %191, %192 : vector<24x256xf32>
    %194 = arith.mulf %185, %193 : vector<24x256xf32>
    %cst_152 = arith.constant 0.000000e+00 : f32
    %195 = vector.shape_cast %177 : vector<1x256xi1> to vector<1x256xi1>
    %196 = vector.broadcast %195 : vector<1x256xi1> to vector<24x256xi1>
    %197 = vector.broadcast %cst_152 : f32 to vector<24x256xf32>
    %198 = arith.select %196, %194, %197 : vector<24x256xi1>, vector<24x256xf32>
    %199 = arith.truncf %198 : vector<24x256xf32> to vector<24x256xbf16>
    %200 = arith.truncf %156 : vector<256x16xf32> to vector<256x16xbf16>
    %cst_153 = arith.constant dense<0.000000e+00> : vector<24x16xf32>
    %201 = tpu.matmul %199, %200, %cst_153 {dimension_numbers = #tpu.dot_dimension_numbers<[1], [0], [0], [1], [0, 0, 1, 1], [], []>} : vector<24x256xbf16>, vector<256x16xbf16>, vector<24x16xf32> -> vector<24x16xf32>
    %c0_154 = arith.constant 0 : index
    %c0_155 = arith.constant 0 : index
    %c0_156 = arith.constant 0 : index
    %202 = vector.load %arg7[%c0_154, %c0_155, %c0_156] : memref<1x24x16xf32, #tpu.memory_space<vmem>>, vector<1x24x16xf32>
    %203 = vector.shape_cast %202 : vector<1x24x16xf32> to vector<24x16xf32>
    %204 = vector.shape_cast %201 : vector<24x16xf32> to vector<1x24x16xf32>
    tpu.vector_store %arg7[%c0_154, %c0_155, %c0_156], %204 {strides = array<i32>} : memref<1x24x16xf32, #tpu.memory_space<vmem>>, vector<1x24x16xf32>,
    return
  }
  func.func @transform_0(%arg0: i32) -> (i32, i32, i32, i32) {
    %c0_i32 = arith.constant 0 : i32
    %c0_i32_0 = arith.constant 0 : i32
    %c0_i32_1 = arith.constant 0 : i32
    %c0_i32_2 = arith.constant 0 : i32
    return %arg0, %c0_i32, %c0_i32_0, %c0_i32_1 : i32, i32, i32, i32
  }
  func.func @transform_1(%arg0: i32) -> (i32, i32, i32) {
    %c0_i32 = arith.constant 0 : i32
    %c0_i32_0 = arith.constant 0 : i32
    %c0_i32_1 = arith.constant 0 : i32
    return %arg0, %c0_i32, %c0_i32_0 : i32, i32, i32
  }
  func.func @transform_2(%arg0: i32) -> (i32, i32, i32) {
    %c0_i32 = arith.constant 0 : i32
    %c0_i32_0 = arith.constant 0 : i32
    %c0_i32_1 = arith.constant 0 : i32
    %c0_i32_2 = arith.constant 0 : i32
    return %c0_i32, %c0_i32_0, %c0_i32_1 : i32, i32, i32
  }
  func.func @transform_3(%arg0: i32) -> (i32, i32) {
    %c0_i32 = arith.constant 0 : i32
    %c0_i32_0 = arith.constant 0 : i32
    %c0_i32_1 = arith.constant 0 : i32
    return %c0_i32, %c0_i32_0 : i32, i32
  }
  func.func @transform_4(%arg0: i32) -> (i32, i32, i32) {
    %c0_i32 = arith.constant 0 : i32
    %c0_i32_0 = arith.constant 0 : i32
    %c0_i32_1 = arith.constant 0 : i32
    %c0_i32_2 = arith.constant 0 : i32
    return %c0_i32, %c0_i32_0, %c0_i32_1 : i32, i32, i32
  }
  func.func @transform_5(%arg0: i32) -> (i32, i32) {
    %c0_i32 = arith.constant 0 : i32
    %c0_i32_0 = arith.constant 0 : i32
    %c0_i32_1 = arith.constant 0 : i32
    return %c0_i32, %c0_i32_0 : i32, i32
  }
  func.func @transform_6(%arg0: i32) -> (i32, i32, i32) {
    %c0_i32 = arith.constant 0 : i32
    %c0_i32_0 = arith.constant 0 : i32
    %c0_i32_1 = arith.constant 0 : i32
    return %arg0, %c0_i32, %c0_i32_0 : i32, i32, i32
  }
}

</mosaic_0001>

<llo_original>
// kernel: tpu_custom_call.1
$region0: #{tpu_custom_call.1}
  #allocation0 [shape = 'u32[]', space=smem, size = 0x4, offset = 0x4, fixed_abs, tag = 'smem constant byte address 0x4 - core index']
  #allocation1 [shape = 'u32[144,128]{1,0:T(1,128)}', space=vmem, size = 0x12000, scoped, tag = 'internal scratch']
  #allocation2 [shape = 'f32[18,18,8]{2,1,0:T(8,128)}', space=vmem, size = 0x36000, scoped, tag = 'scratch operand']
  %s0 = inlined_call_operand.vmem [shape: f32[8,18,18,3], index: 0, kind: input, shape index: {}]
  %s1 = inlined_call_operand.vmem [shape: f32[8,24,2], index: 1, kind: input, shape index: {}]
  %s2 = inlined_call_operand.vmem [shape: bf16[9,3,8], index: 2, kind: input, shape index: {}]
  %s3 = inlined_call_operand.vmem [shape: f32[1,8], index: 3, kind: input, shape index: {}]
  %s4 = inlined_call_operand.vmem [shape: bf16[9,8,16], index: 4, kind: input, shape index: {}]
  %s5 = inlined_call_operand.vmem [shape: f32[1,16], index: 5, kind: input, shape index: {}]
  %s6 = inlined_call_operand.vmem [shape: f32[8,24,16], index: 6, kind: output, shape index: {}]
  %s7 = sld [smem:[#allocation0]]
  $region57: #{tpu_custom_call.1} parent=0
    _
  %s9 = ssub.s32 1, %s7
  %s10 = scalar_select 0, %s9, %s7
  loop: start=0, step=1, limit=10
  $region2: #{tpu_custom_call.1} parent=0 // loop_pre_header
    _
  $region3: #{tpu_custom_call.1} parent=0 // loop_header
    %s12 = sphi 0, %s16
    %p13 = scmp.ge.s32.totalorder %s12, 10
    %s22 = sphi 0, %s24
    %s25 = sphi 0, %s22
    %s26 = sphi 0, %s25
    %s42 = sphi 0, %s26
    %s48 = sphi 0, %s50
    %s51 = sphi 0, %s48
    %s52 = sphi 0, %s51
    %s68 = sphi 0, %s52
    %s72 = sphi 0, %s72
    %s74 = sphi 0, %s72
    %s75 = sphi 0, %s74
    %s89 = sphi 0, %s75
    %s93 = sphi 0, %s93
    %s95 = sphi 0, %s93
    %s96 = sphi 0, %s95
    %s110 = sphi 0, %s96
    %s114 = sphi 0, %s114
    %s116 = sphi 0, %s114
    %s117 = sphi 0, %s116
    %s131 = sphi 0, %s117
    %s135 = sphi 0, %s135
    %s137 = sphi 0, %s135
    %s138 = sphi 0, %s137
    %s152 = sphi 0, %s138
    %s158 = sphi 0, %s160
    %s161 = sphi 0, %s158
    %s162 = sphi 0, %s161
    %s178 = sphi 0, %s162
  $region4: #{tpu_custom_call.1} parent=0 // loop_header_branch
    %15 = sbr.rel (%p13) target = $region8
  $region5: #{tpu_custom_call.1} parent=0 // loop_body
    %s17 = ssub.s32 %s12, 1
    %s18 = ssub.s32 %s12, 2
    %s19 = sadd.s32 %s12, 1
    %s20 = ssub.s32 %s12, %s19
    %p21 = scmp.eq.s32.totalorder %s20, 0
    %s23 = sadd.s32 %s22, 1
    %s24 = scalar_select %p21, %s22, %s23
    %p27 = pneg %p21
    %p28 = scmp.eq.s32.totalorder %s12, 7
    %p29 = por %p27, %p28
    %p30 = scmp.ne.s32.totalorder %s22, %s25
    %p31 = scmp.eq.s32.totalorder %s12, 0
    %p32 = por %p30, %p31
    %p33 = scmp.ne.s32.totalorder %s22, %s25
    %p34 = scmp.eq.s32.totalorder %s17, 7
    %p35 = por %p33, %p34
    %p36 = scmp.ne.s32.totalorder %s25, %s26
    %p37 = scmp.eq.s32.totalorder %s17, 0
    %p38 = por %p36, %p37
    %p39 = scmp.ne.s32.totalorder %s25, %s26
    %p40 = scmp.eq.s32.totalorder %s18, 7
    %p41 = por %p39, %p40
    %p43 = scmp.ne.s32.totalorder %s26, %s42
    %p44 = scmp.eq.s32.totalorder %s18, 0
    %p45 = por %p43, %p44
    %s46 = ssub.s32 %s12, %s19
    %p47 = scmp.eq.s32.totalorder %s46, 0
    %s49 = sadd.s32 %s48, 1
    %s50 = scalar_select %p47, %s48, %s49
    %p53 = pneg %p47
    %p54 = scmp.eq.s32.totalorder %s12, 7
    %p55 = por %p53, %p54
    %p56 = scmp.ne.s32.totalorder %s48, %s51
    %p57 = scmp.eq.s32.totalorder %s12, 0
    %p58 = por %p56, %p57
    %p59 = scmp.ne.s32.totalorder %s48, %s51
    %p60 = scmp.eq.s32.totalorder %s17, 7
    %p61 = por %p59, %p60
    %p62 = scmp.ne.s32.totalorder %s51, %s52
    %p63 = scmp.eq.s32.totalorder %s17, 0
    %p64 = por %p62, %p63
    %p65 = scmp.ne.s32.totalorder %s51, %s52
    %p66 = scmp.eq.s32.totalorder %s18, 7
    %p67 = por %p65, %p66
    %p69 = scmp.ne.s32.totalorder %s52, %s68
    %p70 = scmp.eq.s32.totalorder %s18, 0
    %p71 = por %p69, %p70
    %s73 = sadd.s32 %s72, 1
    %p76 = scmp.eq.s32.totalorder %s12, 7
    %p77 = scmp.ne.s32.totalorder %s72, %s74
    %p78 = scmp.eq.s32.totalorder %s12, 0
    %p79 = por %p77, %p78
    %p80 = scmp.ne.s32.totalorder %s72, %s74
    %p81 = scmp.eq.s32.totalorder %s17, 7
    %p82 = por %p80, %p81
    %p83 = scmp.ne.s32.totalorder %s74, %s75
    %p84 = scmp.eq.s32.totalorder %s17, 0
    %p85 = por %p83, %p84
    %p86 = scmp.ne.s32.totalorder %s74, %s75
    %p87 = scmp.eq.s32.totalorder %s18, 7
    %p88 = por %p86, %p87
    %p90 = scmp.ne.s32.totalorder %s75, %s89
    %p91 = scmp.eq.s32.totalorder %s18, 0
    %p92 = por %p90, %p91
    %s94 = sadd.s32 %s93, 1
    %p97 = scmp.eq.s32.totalorder %s12, 7
    %p98 = scmp.ne.s32.totalorder %s93, %s95
    %p99 = scmp.eq.s32.totalorder %s12, 0
    %p100 = por %p98, %p99
    %p101 = scmp.ne.s32.totalorder %s93, %s95
    %p102 = scmp.eq.s32.totalorder %s17, 7
    %p103 = por %p101, %p102
    %p104 = scmp.ne.s32.totalorder %s95, %s96
    %p105 = scmp.eq.s32.totalorder %s17, 0
    %p106 = por %p104, %p105
    %p107 = scmp.ne.s32.totalorder %s95, %s96
    %p108 = scmp.eq.s32.totalorder %s18, 7
    %p109 = por %p107, %p108
    %p111 = scmp.ne.s32.totalorder %s96, %s110
    %p112 = scmp.eq.s32.totalorder %s18, 0
    %p113 = por %p111, %p112
    %s115 = sadd.s32 %s114, 1
    %p118 = scmp.eq.s32.totalorder %s12, 7
    %p119 = scmp.ne.s32.totalorder %s114, %s116
    %p120 = scmp.eq.s32.totalorder %s12, 0
    %p121 = por %p119, %p120
    %p122 = scmp.ne.s32.totalorder %s114, %s116
    %p123 = scmp.eq.s32.totalorder %s17, 7
    %p124 = por %p122, %p123
    %p125 = scmp.ne.s32.totalorder %s116, %s117
    %p126 = scmp.eq.s32.totalorder %s17, 0
    %p127 = por %p125, %p126
    %p128 = scmp.ne.s32.totalorder %s116, %s117
    %p129 = scmp.eq.s32.totalorder %s18, 7
    %p130 = por %p128, %p129
    %p132 = scmp.ne.s32.totalorder %s117, %s131
    %p133 = scmp.eq.s32.totalorder %s18, 0
    %p134 = por %p132, %p133
    %s136 = sadd.s32 %s135, 1
    %p139 = scmp.eq.s32.totalorder %s12, 7
    %p140 = scmp.ne.s32.totalorder %s135, %s137
    %p141 = scmp.eq.s32.totalorder %s12, 0
    %p142 = por %p140, %p141
    %p143 = scmp.ne.s32.totalorder %s135, %s137
    %p144 = scmp.eq.s32.totalorder %s17, 7
    %p145 = por %p143, %p144
    %p146 = scmp.ne.s32.totalorder %s137, %s138
    %p147 = scmp.eq.s32.totalorder %s17, 0
    %p148 = por %p146, %p147
    %p149 = scmp.ne.s32.totalorder %s137, %s138
    %p150 = scmp.eq.s32.totalorder %s18, 7
    %p151 = por %p149, %p150
    %p153 = scmp.ne.s32.totalorder %s138, %s152
    %p154 = scmp.eq.s32.totalorder %s18, 0
    %p155 = por %p153, %p154
    %s156 = ssub.s32 %s12, %s19
    %p157 = scmp.eq.s32.totalorder %s156, 0
    %s159 = sadd.s32 %s158, 1
    %s160 = scalar_select %p157, %s158, %s159
    %p163 = pneg %p157
    %p164 = scmp.eq.s32.totalorder %s12, 7
    %p165 = por %p163, %p164
    %p166 = scmp.ne.s32.totalorder %s158, %s161
    %p167 = scmp.eq.s32.totalorder %s12, 0
    %p168 = por %p166, %p167
    %p169 = scmp.ne.s32.totalorder %s158, %s161
    %p170 = scmp.eq.s32.totalorder %s17, 7
    %p171 = por %p169, %p170
    %p172 = scmp.ne.s32.totalorder %s161, %s162
    %p173 = scmp.eq.s32.totalorder %s17, 0
    %p174 = por %p172, %p173
    %p175 = scmp.ne.s32.totalorder %s161, %s162
    %p176 = scmp.eq.s32.totalorder %s18, 7
    %p177 = por %p175, %p176
    %p179 = scmp.ne.s32.totalorder %s162, %s178
    %p180 = scmp.eq.s32.totalorder %s18, 0
    %p181 = por %p179, %p180
    %p182 = scmp.le.s32.totalorder 1, %s12
    %p183 = scmp.lt.s32.totalorder %s12, 9
    %p184 = pnand %p182, %p183
    %p185 = pneg %p184
    // Predicated region
    $region9: #{tpu_custom_call.1} parent=5 // pred_check
      _
    $region10: #{tpu_custom_call.1} parent=5 // pred_check_branch
      %187 = sbr.rel (%p184) target = $region12
    $region11: #{tpu_custom_call.1} parent=5 // pred_region
      %s188 = ssub.s32 %s12, 1
      // Predicated region
      $region13: #{tpu_custom_call.1} parent=11 // pred_check
        %p189 = pneg %p85
      $region14: #{tpu_custom_call.1} parent=11 // pred_check_branch
        %191 = sbr.rel (%p189) target = $region16
      $region15: #{tpu_custom_call.1} parent=11 // pred_region
        _
      $region16: #{tpu_custom_call.1} parent=11 // pred_fallthru
        _
      // Predicated region
      $region17: #{tpu_custom_call.1} parent=11 // pred_check
        %p192 = pneg %p106
      $region18: #{tpu_custom_call.1} parent=11 // pred_check_branch
        %194 = sbr.rel (%p192) target = $region20
      $region19: #{tpu_custom_call.1} parent=11 // pred_region
        _
      $region20: #{tpu_custom_call.1} parent=11 // pred_fallthru
        _
      // Predicated region
      $region21: #{tpu_custom_call.1} parent=11 // pred_check
        %p195 = pneg %p127
      $region22: #{tpu_custom_call.1} parent=11 // pred_check_branch
        %197 = sbr.rel (%p195) target = $region24
      $region23: #{tpu_custom_call.1} parent=11 // pred_region
        _
      $region24: #{tpu_custom_call.1} parent=11 // pred_fallthru
        _
      // Predicated region
      $region25: #{tpu_custom_call.1} parent=11 // pred_check
        %p198 = pneg %p148
      $region26: #{tpu_custom_call.1} parent=11 // pred_check_branch
        %200 = sbr.rel (%p198) target = $region28
      $region27: #{tpu_custom_call.1} parent=11 // pred_region
        _
      $region28: #{tpu_custom_call.1} parent=11 // pred_fallthru
        _
    $region12: #{tpu_custom_call.1} parent=5 // pred_fallthru
      _
    %p201 = scmp.lt.s32.totalorder %s12, 8
    // Predicated region
    $region29: #{tpu_custom_call.1} parent=5 // pred_check
      %p202 = pneg %p201
    $region30: #{tpu_custom_call.1} parent=5 // pred_check_branch
      %204 = sbr.rel (%p202) target = $region32
    $region31: #{tpu_custom_call.1} parent=5 // pred_region
      // Predicated region
      $region33: #{tpu_custom_call.1} parent=31 // pred_check
        %p205 = pneg %p32
      $region34: #{tpu_custom_call.1} parent=31 // pred_check_branch
        %207 = sbr.rel (%p205) target = $region36
      $region35: #{tpu_custom_call.1} parent=31 // pred_region
        %p208 = scmp.lt.s32.totalorder %s12, 7
        %s209 = scalar_select %p208, %s12, 7
        %s210 = smul.addr %s209, 54
        %s211 = smul.addr %s210, 8
        %s212 = scalar_lea.vmem %s0, %s211
      $region36: #{tpu_custom_call.1} parent=31 // pred_fallthru
        _
      // Predicated region
      $region37: #{tpu_custom_call.1} parent=31 // pred_check
        %p213 = pneg %p58
      $region38: #{tpu_custom_call.1} parent=31 // pred_check_branch
        %215 = sbr.rel (%p213) target = $region40
      $region39: #{tpu_custom_call.1} parent=31 // pred_region
        %p216 = scmp.lt.s32.totalorder %s12, 7
        %s217 = scalar_select %p216, %s12, 7
        %s218 = smul.addr %s217, 3
        %s219 = smul.addr %s218, 8
        %s220 = scalar_lea.vmem %s1, %s219
      $region40: #{tpu_custom_call.1} parent=31 // pred_fallthru
        _
    $region32: #{tpu_custom_call.1} parent=5 // pred_fallthru
      _
    %p221 = scmp.le.s32.totalorder 1, %s12
    %p222 = scmp.lt.s32.totalorder %s12, 9
    %p223 = pnand %p221, %p222
    %p224 = pneg %p223
    // Predicated region
    $region41: #{tpu_custom_call.1} parent=5 // pred_check
      _
    $region42: #{tpu_custom_call.1} parent=5 // pred_check_branch
      %226 = sbr.rel (%p223) target = $region44
    $region43: #{tpu_custom_call.1} parent=5 // pred_region
      %s227 = ssub.s32 %s12, 1
      %p228 = scmp.lt.s32.totalorder %s17, 7
      %s229 = scalar_select %p228, %s17, 7
      %s230 = smul.addr %s229, 54
      %s231 = smul.addr %s230, 8
      %s232 = scalar_lea.vmem %s0, %s231
      %p233 = pneg %p38
      %p234 = pneg %p35
      %p235 = scmp.lt.s32.totalorder %s17, 7
      %s236 = scalar_select %p235, %s17, 7
      %s237 = smul.addr %s236, 3
      %s238 = smul.addr %s237, 8
      %s239 = scalar_lea.vmem %s1, %s238
      %p240 = pneg %p64
      %p241 = pneg %p61
      %p242 = pneg %p85
      %p243 = pneg %p82
      %p244 = pneg %p106
      %p245 = pneg %p103
      %p246 = pneg %p127
      %p247 = pneg %p124
      %p248 = pneg %p148
      %p249 = pneg %p145
      %p250 = pneg %p174
      %p251 = pneg %p171
      %p252 = scmp.lt.s32.totalorder %s17, 7
      %s253 = scalar_select %p252, %s17, 7
      %s254 = smul.addr %s253, 3
      %s255 = smul.addr %s254, 8
      %s256 = scalar_lea.vmem %s6, %s255
      %p257 = scmp.lt.s32.totalorder %s17, 7
      %s258 = scalar_select %p257, %s17, 7
      %s259 = smul.addr %s258, 54
      %s260 = smul.addr %s259, 8
      %s261 = scalar_lea.vmem %s0, %s260
      %p262 = scmp.lt.s32.totalorder %s17, 7
      %s263 = scalar_select %p262, %s17, 7
      %s264 = smul.addr %s263, 3
      %s265 = smul.addr %s264, 8
      %s266 = scalar_lea.vmem %s1, %s265
      %p267 = scmp.lt.s32.totalorder %s17, 7
      %s268 = scalar_select %p267, %s17, 7
      %s269 = smul.addr %s268, 3
      %s270 = smul.addr %s269, 8
      %s271 = scalar_lea.vmem %s6, %s270
      %v273 = vld [vmem:[%s261] sm:$0xff]
      %v274 = vld [vmem:[%s261 + $0x8] sm:$0xff]
      %v275 = vld [vmem:[%s261 + $0x18] sm:$0xff]
      %v276 = vld [vmem:[%s261 + $0x20] sm:$0xff]
      %v277 = vld [vmem:[%s261 + $0x30] sm:$0xff]
      %v278 = vld [vmem:[%s261 + $0x38] sm:$0xff]
      %v279 = vld [vmem:[%s261 + $0x48] sm:$0xff]
      %v280 = vld [vmem:[%s261 + $0x50] sm:$0xff]
      %v281 = vld [vmem:[%s261 + $0x60] sm:$0xff]
      %v282 = vld [vmem:[%s261 + $0x68] sm:$0xff]
      %v283 = vld [vmem:[%s261 + $0x78] sm:$0xff]
      %v284 = vld [vmem:[%s261 + $0x80] sm:$0xff]
      %v285 = vld [vmem:[%s261 + $0x90] sm:$0xff]
      %v286 = vld [vmem:[%s261 + $0x98] sm:$0xff]
      %v287 = vld [vmem:[%s261 + $0xa8] sm:$0xff]
      %v288 = vld [vmem:[%s261 + $0xb0] sm:$0xff]
      %v289 = vld [vmem:[%s261 + $0xc0] sm:$0xff]
      %v290 = vld [vmem:[%s261 + $0xc8] sm:$0xff]
      %v291 = vld [vmem:[%s261 + $0xd8] sm:$0xff]
      %v292 = vld [vmem:[%s261 + $0xe0] sm:$0xff]
      %v293 = vld [vmem:[%s261 + $0xf0] sm:$0xff]
      %v294 = vld [vmem:[%s261 + $0xf8] sm:$0xff]
      %v295 = vld [vmem:[%s261 + $0x108] sm:$0xff]
      %v296 = vld [vmem:[%s261 + $0x110] sm:$0xff]
      %v297 = vld [vmem:[%s261 + $0x120] sm:$0xff]
      %v298 = vld [vmem:[%s261 + $0x128] sm:$0xff]
      %v299 = vld [vmem:[%s261 + $0x138] sm:$0xff]
      %v300 = vld [vmem:[%s261 + $0x140] sm:$0xff]
      %v301 = vld [vmem:[%s261 + $0x150] sm:$0xff]
      %v302 = vld [vmem:[%s261 + $0x158] sm:$0xff]
      %v303 = vld [vmem:[%s261 + $0x168] sm:$0xff]
      %v304 = vld [vmem:[%s261 + $0x170] sm:$0xff]
      %v305 = vpack.c.bf16 %v274, %v273
      %v306 = vpack.c.bf16 %v276, %v275
      %v307 = vpack.c.bf16 %v278, %v277
      %v308 = vpack.c.bf16 %v280, %v279
      %v309 = vpack.c.bf16 %v282, %v281
      %v310 = vpack.c.bf16 %v284, %v283
      %v311 = vpack.c.bf16 %v286, %v285
      %v312 = vpack.c.bf16 %v288, %v287
      %v313 = vpack.c.bf16 %v290, %v289
      %v314 = vpack.c.bf16 %v292, %v291
      %v315 = vpack.c.bf16 %v294, %v293
      %v316 = vpack.c.bf16 %v296, %v295
      %v317 = vpack.c.bf16 %v298, %v297
      %v318 = vpack.c.bf16 %v300, %v299
      %v319 = vpack.c.bf16 %v302, %v301
      %v320 = vpack.c.bf16 %v304, %v303
      %v321 = vld [vmem:[%s2] sm:$0x3]
      %v322 = vld [vmem:[%s261 + $0x1] sm:$0xff]
      %v323 = vld [vmem:[%s261 + $0x9] sm:$0xff]
      %v324 = vld [vmem:[%s261 + $0x19] sm:$0xff]
      %v325 = vld [vmem:[%s261 + $0x21] sm:$0xff]
      %v326 = vld [vmem:[%s261 + $0x31] sm:$0xff]
      %v327 = vld [vmem:[%s261 + $0x39] sm:$0xff]
      %v328 = vld [vmem:[%s261 + $0x49] sm:$0xff]
      %v329 = vld [vmem:[%s261 + $0x51] sm:$0xff]
      %v330 = vld [vmem:[%s261 + $0x61] sm:$0xff]
      %v331 = vld [vmem:[%s261 + $0x69] sm:$0xff]
      %v332 = vld [vmem:[%s261 + $0x79] sm:$0xff]
      %v333 = vld [vmem:[%s261 + $0x81] sm:$0xff]
      %v334 = vld [vmem:[%s261 + $0x91] sm:$0xff]
      %v335 = vld [vmem:[%s261 + $0x99] sm:$0xff]
      %v336 = vld [vmem:[%s261 + $0xa9] sm:$0xff]
      %v337 = vld [vmem:[%s261 + $0xb1] sm:$0xff]
      %v338 = vld [vmem:[%s261 + $0xc1] sm:$0xff]
      %v339 = vld [vmem:[%s261 + $0xc9] sm:$0xff]
      %v340 = vld [vmem:[%s261 + $0xd9] sm:$0xff]
      %v341 = vld [vmem:[%s261 + $0xe1] sm:$0xff]
      %v342 = vld [vmem:[%s261 + $0xf1] sm:$0xff]
      %v343 = vld [vmem:[%s261 + $0xf9] sm:$0xff]
      %v344 = vld [vmem:[%s261 + $0x109] sm:$0xff]
      %v345 = vld [vmem:[%s261 + $0x111] sm:$0xff]
      %v346 = vld [vmem:[%s261 + $0x121] sm:$0xff]
      %v347 = vld [vmem:[%s261 + $0x129] sm:$0xff]
      %v348 = vld [vmem:[%s261 + $0x139] sm:$0xff]
      %v349 = vld [vmem:[%s261 + $0x141] sm:$0xff]
      %v350 = vld [vmem:[%s261 + $0x151] sm:$0xff]
      %v351 = vld [vmem:[%s261 + $0x159] sm:$0xff]
      %v352 = vld [vmem:[%s261 + $0x169] sm:$0xff]
      %v353 = vld [vmem:[%s261 + $0x171] sm:$0xff]
      %v354 = vpack.c.bf16 %v323, %v322
      %v355 = vpack.c.bf16 %v325, %v324
      %v356 = vpack.c.bf16 %v327, %v326
      %v357 = vpack.c.bf16 %v329, %v328
      %v358 = vpack.c.bf16 %v331, %v330
      %v359 = vpack.c.bf16 %v333, %v332
      %v360 = vpack.c.bf16 %v335, %v334
      %v361 = vpack.c.bf16 %v337, %v336
      %v362 = vpack.c.bf16 %v339, %v338
      %v363 = vpack.c.bf16 %v341, %v340
      %v364 = vpack.c.bf16 %v343, %v342
      %v365 = vpack.c.bf16 %v345, %v344
      %v366 = vpack.c.bf16 %v347, %v346
      %v367 = vpack.c.bf16 %v349, %v348
      %v368 = vpack.c.bf16 %v351, %v350
      %v369 = vpack.c.bf16 %v353, %v352
      %s370 = scalar_lea.vmem %s2, 2
      %v371 = vld [vmem:[%s370] sm:$0x3]
      %vm372 = vcmask 23552
      %v374 = vsel %vm372, %v354, 0
      %v377 = vsel %vm372, %v355, 0
      %v380 = vsel %vm372, %v356, 0
      %v383 = vsel %vm372, %v357, 0
      %v386 = vsel %vm372, %v358, 0
      %v389 = vsel %vm372, %v359, 0
      %v392 = vsel %vm372, %v360, 0
      %v395 = vsel %vm372, %v361, 0
      %v398 = vsel %vm372, %v362, 0
      %v401 = vsel %vm372, %v363, 0
      %v404 = vsel %vm372, %v364, 0
      %v407 = vsel %vm372, %v365, 0
      %v410 = vsel %vm372, %v366, 0
      %v413 = vsel %vm372, %v367, 0
      %v416 = vsel %vm372, %v368, 0
      %v419 = vsel %vm372, %v369, 0
      %vm421 = vcmask 1040384
      %vm422 = vcmask 1041408
      %v423 = vsel %vm421, 4294967295, 65535
      %v424 = vsel %vm422, %v423, 0
      %v426 = vand.u32 %v371, %v424
      %428 = vmatprep.subr.bf16.mxu0 0
      %429 = vmatpush1.bf16.msra.mxu0 0
      %430 = vmatprep.subr.bf16.mxu0 0
      %431 = vmatpush1.bf16.msra.mxu0 0
      %432 = vmatprep.subr.bf16.mxu0 0
      %433 = vmatpush1.bf16.msra.mxu0 0
      %434 = vmatprep.subr.bf16.mxu0 0
      %435 = vmatpush1.bf16.msra.mxu0 0
      %436 = vmatprep.subr.bf16.mxu0 0
      %437 = vmatpush1.bf16.msra.mxu0 0
      %438 = vmatprep.subr.bf16.mxu0 0
      %439 = vmatpush1.bf16.msra.mxu0 0
      %440 = vmatprep.subr.bf16.mxu0 0
      %441 = vmatpush1.bf16.msra.mxu0 0
      %442 = vmatprep.subr.bf16.mxu0 0
      %443 = vmatpush1.bf16.msra.mxu0 %v426
      %444 = vmatprep.subr.bf16.mxu0 0
      %445 = vmatpush2.bf16.msra.mxu0 0
      %446 = vmatprep.subr.bf16.mxu0 0
      %447 = vmatpush2.bf16.msra.mxu0 0
      %448 = vmatprep.subr.bf16.mxu0 0
      %449 = vmatpush2.bf16.msra.mxu0 0
      %450 = vmatprep.subr.bf16.mxu0 0
      %451 = vmatpush2.bf16.msra.mxu0 0
      %452 = vmatprep.subr.bf16.mxu0 0
      %453 = vmatpush2.bf16.msra.mxu0 0
      %454 = vmatprep.subr.bf16.mxu0 0
      %455 = vmatpush2.bf16.msra.mxu0 0
      %456 = vmatprep.subr.bf16.mxu0 0
      %457 = vmatpush2.bf16.msra.mxu0 0
      %458 = vmatprep.subr.bf16.mxu0 0
      %459 = vmatpush2.bf16.msra.mxu0 0
      %460 = vmatprep.mubr.bf16.mxu0 0
      %461 = vmatmul.mubr.bf16.gmra.mxu0 %v374
      %v462 = vpop.f32.mrf.mxu0
      %v463 = vadd.f32 0.0, %v462
      %v464 = vpop.f32.mrf.mxu0
      %v465 = vpop.f32.mrf.mxu0
      %v466 = vadd.f32 0.0, %v465
      %v467 = vpop.f32.mrf.mxu0
      %468 = vmatprep.mubr.bf16.mxu0 0
      %469 = vmatmul.mubr.bf16.gmra.mxu0 %v377
      %v470 = vpop.f32.mrf.mxu0
      %v471 = vadd.f32 0.0, %v470
      %v472 = vpop.f32.mrf.mxu0
      %v473 = vpop.f32.mrf.mxu0
      %v474 = vadd.f32 0.0, %v473
      %v475 = vpop.f32.mrf.mxu0
      %476 = vmatprep.mubr.bf16.mxu0 0
      %477 = vmatmul.mubr.bf16.gmra.mxu0 %v380
      %v478 = vpop.f32.mrf.mxu0
      %v479 = vadd.f32 0.0, %v478
      %v480 = vpop.f32.mrf.mxu0
      %v481 = vpop.f32.mrf.mxu0
      %v482 = vadd.f32 0.0, %v481
      %v483 = vpop.f32.mrf.mxu0
      %484 = vmatprep.mubr.bf16.mxu0 0
      %485 = vmatmul.mubr.bf16.gmra.mxu0 %v383
      %v486 = vpop.f32.mrf.mxu0
      %v487 = vadd.f32 0.0, %v486
      %v488 = vpop.f32.mrf.mxu0
      %v489 = vpop.f32.mrf.mxu0
      %v490 = vadd.f32 0.0, %v489
      %v491 = vpop.f32.mrf.mxu0
      %492 = vmatprep.mubr.bf16.mxu0 0
      %493 = vmatmul.mubr.bf16.gmra.mxu0 %v386
      %v494 = vpop.f32.mrf.mxu0
      %v495 = vadd.f32 0.0, %v494
      %v496 = vpop.f32.mrf.mxu0
      %v497 = vpop.f32.mrf.mxu0
      %v498 = vadd.f32 0.0, %v497
      %v499 = vpop.f32.mrf.mxu0
      %500 = vmatprep.mubr.bf16.mxu0 0
      %501 = vmatmul.mubr.bf16.gmra.mxu0 %v389
      %v502 = vpop.f32.mrf.mxu0
      %v503 = vadd.f32 0.0, %v502
      %v504 = vpop.f32.mrf.mxu0
      %v505 = vpop.f32.mrf.mxu0
      %v506 = vadd.f32 0.0, %v505
      %v507 = vpop.f32.mrf.mxu0
      %508 = vmatprep.mubr.bf16.mxu0 0
      %509 = vmatmul.mubr.bf16.gmra.mxu0 %v392
      %v510 = vpop.f32.mrf.mxu0
      %v511 = vadd.f32 0.0, %v510
      %v512 = vpop.f32.mrf.mxu0
      %v513 = vpop.f32.mrf.mxu0
      %v514 = vadd.f32 0.0, %v513
      %v515 = vpop.f32.mrf.mxu0
      %516 = vmatprep.mubr.bf16.mxu0 0
      %517 = vmatmul.mubr.bf16.gmra.mxu0 %v395
      %v518 = vpop.f32.mrf.mxu0
      %v519 = vadd.f32 0.0, %v518
      %v520 = vpop.f32.mrf.mxu0
      %v521 = vpop.f32.mrf.mxu0
      %v522 = vadd.f32 0.0, %v521
      %v523 = vpop.f32.mrf.mxu0
      %524 = vmatprep.mubr.bf16.mxu0 0
      %525 = vmatmul.mubr.bf16.gmra.mxu0 %v398
      %v526 = vpop.f32.mrf.mxu0
      %v527 = vadd.f32 0.0, %v526
      %v528 = vpop.f32.mrf.mxu0
      %v529 = vpop.f32.mrf.mxu0
      %v530 = vadd.f32 0.0, %v529
      %v531 = vpop.f32.mrf.mxu0
      %532 = vmatprep.mubr.bf16.mxu0 0
      %533 = vmatmul.mubr.bf16.gmra.mxu0 %v401
      %v534 = vpop.f32.mrf.mxu0
      %v535 = vadd.f32 0.0, %v534
      %v536 = vpop.f32.mrf.mxu0
      %v537 = vpop.f32.mrf.mxu0
      %v538 = vadd.f32 0.0, %v537
      %v539 = vpop.f32.mrf.mxu0
      %540 = vmatprep.mubr.bf16.mxu0 0
      %541 = vmatmul.mubr.bf16.gmra.mxu0 %v404
      %v542 = vpop.f32.mrf.mxu0
      %v543 = vadd.f32 0.0, %v542
      %v544 = vpop.f32.mrf.mxu0
      %v545 = vpop.f32.mrf.mxu0
      %v546 = vadd.f32 0.0, %v545
      %v547 = vpop.f32.mrf.mxu0
      %548 = vmatprep.mubr.bf16.mxu0 0
      %549 = vmatmul.mubr.bf16.gmra.mxu0 %v407
      %v550 = vpop.f32.mrf.mxu0
      %v551 = vadd.f32 0.0, %v550
      %v552 = vpop.f32.mrf.mxu0
      %v553 = vpop.f32.mrf.mxu0
      %v554 = vadd.f32 0.0, %v553
      %v555 = vpop.f32.mrf.mxu0
      %556 = vmatprep.mubr.bf16.mxu0 0
      %557 = vmatmul.mubr.bf16.gmra.mxu0 %v410
      %v558 = vpop.f32.mrf.mxu0
      %v559 = vadd.f32 0.0, %v558
      %v560 = vpop.f32.mrf.mxu0
      %v561 = vpop.f32.mrf.mxu0
      %v562 = vadd.f32 0.0, %v561
      %v563 = vpop.f32.mrf.mxu0
      %564 = vmatprep.mubr.bf16.mxu0 0
      %565 = vmatmul.mubr.bf16.gmra.mxu0 %v413
      %v566 = vpop.f32.mrf.mxu0
      %v567 = vadd.f32 0.0, %v566
      %v568 = vpop.f32.mrf.mxu0
      %v569 = vpop.f32.mrf.mxu0
      %v570 = vadd.f32 0.0, %v569
      %v571 = vpop.f32.mrf.mxu0
      %572 = vmatprep.mubr.bf16.mxu0 0
      %573 = vmatmul.mubr.bf16.gmra.mxu0 %v416
      %v574 = vpop.f32.mrf.mxu0
      %v575 = vadd.f32 0.0, %v574
      %v576 = vpop.f32.mrf.mxu0
      %v577 = vpop.f32.mrf.mxu0
      %v578 = vadd.f32 0.0, %v577
      %v579 = vpop.f32.mrf.mxu0
      %580 = vmatprep.mubr.bf16.mxu0 0
      %581 = vmatmul.mubr.bf16.gmra.mxu0 %v419
      %v582 = vpop.f32.mrf.mxu0
      %v583 = vadd.f32 0.0, %v582
      %v584 = vpop.f32.mrf.mxu0
      %v585 = vpop.f32.mrf.mxu0
      %v586 = vadd.f32 0.0, %v585
      %v587 = vpop.f32.mrf.mxu0
      %588 = vdwg.mxu0
      %v590 = vsel %vm372, %v305, 0
      %v593 = vsel %vm372, %v306, 0
      %v596 = vsel %vm372, %v307, 0
      %v599 = vsel %vm372, %v308, 0
      %v602 = vsel %vm372, %v309, 0
      %v605 = vsel %vm372, %v310, 0
      %v608 = vsel %vm372, %v311, 0
      %v611 = vsel %vm372, %v312, 0
      %v614 = vsel %vm372, %v313, 0
      %v617 = vsel %vm372, %v314, 0
      %v620 = vsel %vm372, %v315, 0
      %v623 = vsel %vm372, %v316, 0
      %v626 = vsel %vm372, %v317, 0
      %v629 = vsel %vm372, %v318, 0
      %v632 = vsel %vm372, %v319, 0
      %v635 = vsel %vm372, %v320, 0
      %v638 = vand.u32 %v321, %v424
      %640 = vmatprep.subr.bf16.mxu0 0
      %641 = vmatpush1.bf16.msra.mxu0 0
      %642 = vmatprep.subr.bf16.mxu0 0
      %643 = vmatpush1.bf16.msra.mxu0 0
      %644 = vmatprep.subr.bf16.mxu0 0
      %645 = vmatpush1.bf16.msra.mxu0 0
      %646 = vmatprep.subr.bf16.mxu0 0
      %647 = vmatpush1.bf16.msra.mxu0 0
      %648 = vmatprep.subr.bf16.mxu0 0
      %649 = vmatpush1.bf16.msra.mxu0 0
      %650 = vmatprep.subr.bf16.mxu0 0
      %651 = vmatpush1.bf16.msra.mxu0 0
      %652 = vmatprep.subr.bf16.mxu0 0
      %653 = vmatpush1.bf16.msra.mxu0 0
      %654 = vmatprep.subr.bf16.mxu0 0
      %655 = vmatpush1.bf16.msra.mxu0 %v638
      %656 = vmatprep.subr.bf16.mxu0 0
      %657 = vmatpush2.bf16.msra.mxu0 0
      %658 = vmatprep.subr.bf16.mxu0 0
      %659 = vmatpush2.bf16.msra.mxu0 0
      %660 = vmatprep.subr.bf16.mxu0 0
      %661 = vmatpush2.bf16.msra.mxu0 0
      %662 = vmatprep.subr.bf16.mxu0 0
      %663 = vmatpush2.bf16.msra.mxu0 0
      %664 = vmatprep.subr.bf16.mxu0 0
      %665 = vmatpush2.bf16.msra.mxu0 0
      %666 = vmatprep.subr.bf16.mxu0 0
      %667 = vmatpush2.bf16.msra.mxu0 0
      %668 = vmatprep.subr.bf16.mxu0 0
      %669 = vmatpush2.bf16.msra.mxu0 0
      %670 = vmatprep.subr.bf16.mxu0 0
      %671 = vmatpush2.bf16.msra.mxu0 0
      %672 = vmatprep.mubr.bf16.mxu0 0
      %673 = vmatmul.mubr.bf16.gmra.mxu0 %v590
      %v674 = vpop.f32.mrf.mxu0
      %v675 = vadd.f32 %v463, %v674
      %v676 = vpop.f32.mrf.mxu0
      %v677 = vpop.f32.mrf.mxu0
      %v678 = vadd.f32 %v466, %v677
      %v679 = vpop.f32.mrf.mxu0
      %680 = vmatprep.mubr.bf16.mxu0 0
      %681 = vmatmul.mubr.bf16.gmra.mxu0 %v593
      %v682 = vpop.f32.mrf.mxu0
      %v683 = vadd.f32 %v471, %v682
      %v684 = vpop.f32.mrf.mxu0
      %v685 = vpop.f32.mrf.mxu0
      %v686 = vadd.f32 %v474, %v685
      %v687 = vpop.f32.mrf.mxu0
      %688 = vmatprep.mubr.bf16.mxu0 0
      %689 = vmatmul.mubr.bf16.gmra.mxu0 %v596
      %v690 = vpop.f32.mrf.mxu0
      %v691 = vadd.f32 %v479, %v690
      %v692 = vpop.f32.mrf.mxu0
      %v693 = vpop.f32.mrf.mxu0
      %v694 = vadd.f32 %v482, %v693
      %v695 = vpop.f32.mrf.mxu0
      %696 = vmatprep.mubr.bf16.mxu0 0
      %697 = vmatmul.mubr.bf16.gmra.mxu0 %v599
      %v698 = vpop.f32.mrf.mxu0
      %v699 = vadd.f32 %v487, %v698
      %v700 = vpop.f32.mrf.mxu0
      %v701 = vpop.f32.mrf.mxu0
      %v702 = vadd.f32 %v490, %v701
      %v703 = vpop.f32.mrf.mxu0
      %704 = vmatprep.mubr.bf16.mxu0 0
      %705 = vmatmul.mubr.bf16.gmra.mxu0 %v602
      %v706 = vpop.f32.mrf.mxu0
      %v707 = vadd.f32 %v495, %v706
      %v708 = vpop.f32.mrf.mxu0
      %v709 = vpop.f32.mrf.mxu0
      %v710 = vadd.f32 %v498, %v709
      %v711 = vpop.f32.mrf.mxu0
      %712 = vmatprep.mubr.bf16.mxu0 0
      %713 = vmatmul.mubr.bf16.gmra.mxu0 %v605
      %v714 = vpop.f32.mrf.mxu0
      %v715 = vadd.f32 %v503, %v714
      %v716 = vpop.f32.mrf.mxu0
      %v717 = vpop.f32.mrf.mxu0
      %v718 = vadd.f32 %v506, %v717
      %v719 = vpop.f32.mrf.mxu0
      %720 = vmatprep.mubr.bf16.mxu0 0
      %721 = vmatmul.mubr.bf16.gmra.mxu0 %v608
      %v722 = vpop.f32.mrf.mxu0
      %v723 = vadd.f32 %v511, %v722
      %v724 = vpop.f32.mrf.mxu0
      %v725 = vpop.f32.mrf.mxu0
      %v726 = vadd.f32 %v514, %v725
      %v727 = vpop.f32.mrf.mxu0
      %728 = vmatprep.mubr.bf16.mxu0 0
      %729 = vmatmul.mubr.bf16.gmra.mxu0 %v611
      %v730 = vpop.f32.mrf.mxu0
      %v731 = vadd.f32 %v519, %v730
      %v732 = vpop.f32.mrf.mxu0
      %v733 = vpop.f32.mrf.mxu0
      %v734 = vadd.f32 %v522, %v733
      %v735 = vpop.f32.mrf.mxu0
      %736 = vmatprep.mubr.bf16.mxu0 0
      %737 = vmatmul.mubr.bf16.gmra.mxu0 %v614
      %v738 = vpop.f32.mrf.mxu0
      %v739 = vadd.f32 %v527, %v738
      %v740 = vpop.f32.mrf.mxu0
      %v741 = vpop.f32.mrf.mxu0
      %v742 = vadd.f32 %v530, %v741
      %v743 = vpop.f32.mrf.mxu0
      %744 = vmatprep.mubr.bf16.mxu0 0
      %745 = vmatmul.mubr.bf16.gmra.mxu0 %v617
      %v746 = vpop.f32.mrf.mxu0
      %v747 = vadd.f32 %v535, %v746
      %v748 = vpop.f32.mrf.mxu0
      %v749 = vpop.f32.mrf.mxu0
      %v750 = vadd.f32 %v538, %v749
      %v751 = vpop.f32.mrf.mxu0
      %752 = vmatprep.mubr.bf16.mxu0 0
      %753 = vmatmul.mubr.bf16.gmra.mxu0 %v620
      %v754 = vpop.f32.mrf.mxu0
      %v755 = vadd.f32 %v543, %v754
      %v756 = vpop.f32.mrf.mxu0
      %v757 = vpop.f32.mrf.mxu0
      %v758 = vadd.f32 %v546, %v757
      %v759 = vpop.f32.mrf.mxu0
      %760 = vmatprep.mubr.bf16.mxu0 0
      %761 = vmatmul.mubr.bf16.gmra.mxu0 %v623
      %v762 = vpop.f32.mrf.mxu0
      %v763 = vadd.f32 %v551, %v762
      %v764 = vpop.f32.mrf.mxu0
      %v765 = vpop.f32.mrf.mxu0
      %v766 = vadd.f32 %v554, %v765
      %v767 = vpop.f32.mrf.mxu0
      %768 = vmatprep.mubr.bf16.mxu0 0
      %769 = vmatmul.mubr.bf16.gmra.mxu0 %v626
      %v770 = vpop.f32.mrf.mxu0
      %v771 = vadd.f32 %v559, %v770
      %v772 = vpop.f32.mrf.mxu0
      %v773 = vpop.f32.mrf.mxu0
      %v774 = vadd.f32 %v562, %v773
      %v775 = vpop.f32.mrf.mxu0
      %776 = vmatprep.mubr.bf16.mxu0 0
      %777 = vmatmul.mubr.bf16.gmra.mxu0 %v629
      %v778 = vpop.f32.mrf.mxu0
      %v779 = vadd.f32 %v567, %v778
      %v780 = vpop.f32.mrf.mxu0
      %v781 = vpop.f32.mrf.mxu0
      %v782 = vadd.f32 %v570, %v781
      %v783 = vpop.f32.mrf.mxu0
      %784 = vmatprep.mubr.bf16.mxu0 0
      %785 = vmatmul.mubr.bf16.gmra.mxu0 %v632
      %v786 = vpop.f32.mrf.mxu0
      %v787 = vadd.f32 %v575, %v786
      %v788 = vpop.f32.mrf.mxu0
      %v789 = vpop.f32.mrf.mxu0
      %v790 = vadd.f32 %v578, %v789
      %v791 = vpop.f32.mrf.mxu0
      %792 = vmatprep.mubr.bf16.mxu0 0
      %793 = vmatmul.mubr.bf16.gmra.mxu0 %v635
      %v794 = vpop.f32.mrf.mxu0
      %v795 = vadd.f32 %v583, %v794
      %v796 = vpop.f32.mrf.mxu0
      %v797 = vpop.f32.mrf.mxu0
      %v798 = vadd.f32 %v586, %v797
      %v799 = vpop.f32.mrf.mxu0
      %800 = vdwg.mxu0
      %v801 = vld [vmem:[%s261 + $0x2] sm:$0xff]
      %v802 = vld [vmem:[%s261 + $0xa] sm:$0xff]
      %v803 = vld [vmem:[%s261 + $0x1a] sm:$0xff]
      %v804 = vld [vmem:[%s261 + $0x22] sm:$0xff]
      %v805 = vld [vmem:[%s261 + $0x32] sm:$0xff]
      %v806 = vld [vmem:[%s261 + $0x3a] sm:$0xff]
      %v807 = vld [vmem:[%s261 + $0x4a] sm:$0xff]
      %v808 = vld [vmem:[%s261 + $0x52] sm:$0xff]
      %v809 = vld [vmem:[%s261 + $0x62] sm:$0xff]
      %v810 = vld [vmem:[%s261 + $0x6a] sm:$0xff]
      %v811 = vld [vmem:[%s261 + $0x7a] sm:$0xff]
      %v812 = vld [vmem:[%s261 + $0x82] sm:$0xff]
      %v813 = vld [vmem:[%s261 + $0x92] sm:$0xff]
      %v814 = vld [vmem:[%s261 + $0x9a] sm:$0xff]
      %v815 = vld [vmem:[%s261 + $0xaa] sm:$0xff]
      %v816 = vld [vmem:[%s261 + $0xb2] sm:$0xff]
      %v817 = vld [vmem:[%s261 + $0xc2] sm:$0xff]
      %v818 = vld [vmem:[%s261 + $0xca] sm:$0xff]
      %v819 = vld [vmem:[%s261 + $0xda] sm:$0xff]
      %v820 = vld [vmem:[%s261 + $0xe2] sm:$0xff]
      %v821 = vld [vmem:[%s261 + $0xf2] sm:$0xff]
      %v822 = vld [vmem:[%s261 + $0xfa] sm:$0xff]
      %v823 = vld [vmem:[%s261 + $0x10a] sm:$0xff]
      %v824 = vld [vmem:[%s261 + $0x112] sm:$0xff]
      %v825 = vld [vmem:[%s261 + $0x122] sm:$0xff]
      %v826 = vld [vmem:[%s261 + $0x12a] sm:$0xff]
      %v827 = vld [vmem:[%s261 + $0x13a] sm:$0xff]
      %v828 = vld [vmem:[%s261 + $0x142] sm:$0xff]
      %v829 = vld [vmem:[%s261 + $0x152] sm:$0xff]
      %v830 = vld [vmem:[%s261 + $0x15a] sm:$0xff]
      %v831 = vld [vmem:[%s261 + $0x16a] sm:$0xff]
      %v832 = vld [vmem:[%s261 + $0x172] sm:$0xff]
      %v833 = vpack.c.bf16 %v802, %v801
      %v834 = vpack.c.bf16 %v804, %v803
      %v835 = vpack.c.bf16 %v806, %v805
      %v836 = vpack.c.bf16 %v808, %v807
      %v837 = vpack.c.bf16 %v810, %v809
      %v838 = vpack.c.bf16 %v812, %v811
      %v839 = vpack.c.bf16 %v814, %v813
      %v840 = vpack.c.bf16 %v816, %v815
      %v841 = vpack.c.bf16 %v818, %v817
      %v842 = vpack.c.bf16 %v820, %v819
      %v843 = vpack.c.bf16 %v822, %v821
      %v844 = vpack.c.bf16 %v824, %v823
      %v845 = vpack.c.bf16 %v826, %v825
      %v846 = vpack.c.bf16 %v828, %v827
      %v847 = vpack.c.bf16 %v830, %v829
      %v848 = vpack.c.bf16 %v832, %v831
      %s849 = scalar_lea.vmem %s2, 4
      %v850 = vld [vmem:[%s849] sm:$0x3]
      %v852 = vsel %vm372, %v833, 0
      %v855 = vsel %vm372, %v834, 0
      %v858 = vsel %vm372, %v835, 0
      %v861 = vsel %vm372, %v836, 0
      %v864 = vsel %vm372, %v837, 0
      %v867 = vsel %vm372, %v838, 0
      %v870 = vsel %vm372, %v839, 0
      %v873 = vsel %vm372, %v840, 0
      %v876 = vsel %vm372, %v841, 0
      %v879 = vsel %vm372, %v842, 0
      %v882 = vsel %vm372, %v843, 0
      %v885 = vsel %vm372, %v844, 0
      %v888 = vsel %vm372, %v845, 0
      %v891 = vsel %vm372, %v846, 0
      %v894 = vsel %vm372, %v847, 0
      %v897 = vsel %vm372, %v848, 0
      %v900 = vand.u32 %v850, %v424
      %902 = vmatprep.subr.bf16.mxu0 0
      %903 = vmatpush1.bf16.msra.mxu0 0
      %904 = vmatprep.subr.bf16.mxu0 0
      %905 = vmatpush1.bf16.msra.mxu0 0
      %906 = vmatprep.subr.bf16.mxu0 0
      %907 = vmatpush1.bf16.msra.mxu0 0
      %908 = vmatprep.subr.bf16.mxu0 0
      %909 = vmatpush1.bf16.msra.mxu0 0
      %910 = vmatprep.subr.bf16.mxu0 0
      %911 = vmatpush1.bf16.msra.mxu0 0
      %912 = vmatprep.subr.bf16.mxu0 0
      %913 = vmatpush1.bf16.msra.mxu0 0
      %914 = vmatprep.subr.bf16.mxu0 0
      %915 = vmatpush1.bf16.msra.mxu0 0
      %916 = vmatprep.subr.bf16.mxu0 0
      %917 = vmatpush1.bf16.msra.mxu0 %v900
      %918 = vmatprep.subr.bf16.mxu0 0
      %919 = vmatpush2.bf16.msra.mxu0 0
      %920 = vmatprep.subr.bf16.mxu0 0
      %921 = vmatpush2.bf16.msra.mxu0 0
      %922 = vmatprep.subr.bf16.mxu0 0
      %923 = vmatpush2.bf16.msra.mxu0 0
      %924 = vmatprep.subr.bf16.mxu0 0
      %925 = vmatpush2.bf16.msra.mxu0 0
      %926 = vmatprep.subr.bf16.mxu0 0
      %927 = vmatpush2.bf16.msra.mxu0 0
      %928 = vmatprep.subr.bf16.mxu0 0
      %929 = vmatpush2.bf16.msra.mxu0 0
      %930 = vmatprep.subr.bf16.mxu0 0
      %931 = vmatpush2.bf16.msra.mxu0 0
      %932 = vmatprep.subr.bf16.mxu0 0
      %933 = vmatpush2.bf16.msra.mxu0 0
      %934 = vmatprep.mubr.bf16.mxu0 0
      %935 = vmatmul.mubr.bf16.gmra.mxu0 %v852
      %v936 = vpop.f32.mrf.mxu0
      %v937 = vadd.f32 0.0, %v936
      %v938 = vpop.f32.mrf.mxu0
      %v939 = vpop.f32.mrf.mxu0
      %v940 = vadd.f32 0.0, %v939
      %v941 = vpop.f32.mrf.mxu0
      %942 = vmatprep.mubr.bf16.mxu0 0
      %943 = vmatmul.mubr.bf16.gmra.mxu0 %v855
      %v944 = vpop.f32.mrf.mxu0
      %v945 = vadd.f32 0.0, %v944
      %v946 = vpop.f32.mrf.mxu0
      %v947 = vpop.f32.mrf.mxu0
      %v948 = vadd.f32 0.0, %v947
      %v949 = vpop.f32.mrf.mxu0
      %950 = vmatprep.mubr.bf16.mxu0 0
      %951 = vmatmul.mubr.bf16.gmra.mxu0 %v858
      %v952 = vpop.f32.mrf.mxu0
      %v953 = vadd.f32 0.0, %v952
      %v954 = vpop.f32.mrf.mxu0
      %v955 = vpop.f32.mrf.mxu0
      %v956 = vadd.f32 0.0, %v955
      %v957 = vpop.f32.mrf.mxu0
      %958 = vmatprep.mubr.bf16.mxu0 0
      %959 = vmatmul.mubr.bf16.gmra.mxu0 %v861
      %v960 = vpop.f32.mrf.mxu0
      %v961 = vadd.f32 0.0, %v960
      %v962 = vpop.f32.mrf.mxu0
      %v963 = vpop.f32.mrf.mxu0
      %v964 = vadd.f32 0.0, %v963
      %v965 = vpop.f32.mrf.mxu0
      %966 = vmatprep.mubr.bf16.mxu0 0
      %967 = vmatmul.mubr.bf16.gmra.mxu0 %v864
      %v968 = vpop.f32.mrf.mxu0
      %v969 = vadd.f32 0.0, %v968
      %v970 = vpop.f32.mrf.mxu0
      %v971 = vpop.f32.mrf.mxu0
      %v972 = vadd.f32 0.0, %v971
      %v973 = vpop.f32.mrf.mxu0
      %974 = vmatprep.mubr.bf16.mxu0 0
      %975 = vmatmul.mubr.bf16.gmra.mxu0 %v867
      %v976 = vpop.f32.mrf.mxu0
      %v977 = vadd.f32 0.0, %v976
      %v978 = vpop.f32.mrf.mxu0
      %v979 = vpop.f32.mrf.mxu0
      %v980 = vadd.f32 0.0, %v979
      %v981 = vpop.f32.mrf.mxu0
      %982 = vmatprep.mubr.bf16.mxu0 0
      %983 = vmatmul.mubr.bf16.gmra.mxu0 %v870
      %v984 = vpop.f32.mrf.mxu0
      %v985 = vadd.f32 0.0, %v984
      %v986 = vpop.f32.mrf.mxu0
      %v987 = vpop.f32.mrf.mxu0
      %v988 = vadd.f32 0.0, %v987
      %v989 = vpop.f32.mrf.mxu0
      %990 = vmatprep.mubr.bf16.mxu0 0
      %991 = vmatmul.mubr.bf16.gmra.mxu0 %v873
      %v992 = vpop.f32.mrf.mxu0
      %v993 = vadd.f32 0.0, %v992
      %v994 = vpop.f32.mrf.mxu0
      %v995 = vpop.f32.mrf.mxu0
      %v996 = vadd.f32 0.0, %v995
      %v997 = vpop.f32.mrf.mxu0
      %998 = vmatprep.mubr.bf16.mxu0 0
      %999 = vmatmul.mubr.bf16.gmra.mxu0 %v876
      %v1000 = vpop.f32.mrf.mxu0
      %v1001 = vadd.f32 0.0, %v1000
      %v1002 = vpop.f32.mrf.mxu0
      %v1003 = vpop.f32.mrf.mxu0
      %v1004 = vadd.f32 0.0, %v1003
      %v1005 = vpop.f32.mrf.mxu0
      %1006 = vmatprep.mubr.bf16.mxu0 0
      %1007 = vmatmul.mubr.bf16.gmra.mxu0 %v879
      %v1008 = vpop.f32.mrf.mxu0
      %v1009 = vadd.f32 0.0, %v1008
      %v1010 = vpop.f32.mrf.mxu0
      %v1011 = vpop.f32.mrf.mxu0
      %v1012 = vadd.f32 0.0, %v1011
      %v1013 = vpop.f32.mrf.mxu0
      %1014 = vmatprep.mubr.bf16.mxu0 0
      %1015 = vmatmul.mubr.bf16.gmra.mxu0 %v882
      %v1016 = vpop.f32.mrf.mxu0
      %v1017 = vadd.f32 0.0, %v1016
      %v1018 = vpop.f32.mrf.mxu0
      %v1019 = vpop.f32.mrf.mxu0
      %v1020 = vadd.f32 0.0, %v1019
      %v1021 = vpop.f32.mrf.mxu0
      %1022 = vmatprep.mubr.bf16.mxu0 0
      %1023 = vmatmul.mubr.bf16.gmra.mxu0 %v885
      %v1024 = vpop.f32.mrf.mxu0
      %v1025 = vadd.f32 0.0, %v1024
      %v1026 = vpop.f32.mrf.mxu0
      %v1027 = vpop.f32.mrf.mxu0
      %v1028 = vadd.f32 0.0, %v1027
      %v1029 = vpop.f32.mrf.mxu0
      %1030 = vmatprep.mubr.bf16.mxu0 0
      %1031 = vmatmul.mubr.bf16.gmra.mxu0 %v888
      %v1032 = vpop.f32.mrf.mxu0
      %v1033 = vadd.f32 0.0, %v1032
      %v1034 = vpop.f32.mrf.mxu0
      %v1035 = vpop.f32.mrf.mxu0
      %v1036 = vadd.f32 0.0, %v1035
      %v1037 = vpop.f32.mrf.mxu0
      %1038 = vmatprep.mubr.bf16.mxu0 0
      %1039 = vmatmul.mubr.bf16.gmra.mxu0 %v891
      %v1040 = vpop.f32.mrf.mxu0
      %v1041 = vadd.f32 0.0, %v1040
      %v1042 = vpop.f32.mrf.mxu0
      %v1043 = vpop.f32.mrf.mxu0
      %v1044 = vadd.f32 0.0, %v1043
      %v1045 = vpop.f32.mrf.mxu0
      %1046 = vmatprep.mubr.bf16.mxu0 0
      %1047 = vmatmul.mubr.bf16.gmra.mxu0 %v894
      %v1048 = vpop.f32.mrf.mxu0
      %v1049 = vadd.f32 0.0, %v1048
      %v1050 = vpop.f32.mrf.mxu0
      %v1051 = vpop.f32.mrf.mxu0
      %v1052 = vadd.f32 0.0, %v1051
      %v1053 = vpop.f32.mrf.mxu0
      %1054 = vmatprep.mubr.bf16.mxu0 0
      %1055 = vmatmul.mubr.bf16.gmra.mxu0 %v897
      %v1056 = vpop.f32.mrf.mxu0
      %v1057 = vadd.f32 0.0, %v1056
      %v1058 = vpop.f32.mrf.mxu0
      %v1059 = vpop.f32.mrf.mxu0
      %v1060 = vadd.f32 0.0, %v1059
      %v1061 = vpop.f32.mrf.mxu0
      %1062 = vdwg.mxu0
      %v1063 = vadd.f32 %v675, %v937
      %v1064 = vadd.f32 %v678, %v940
      %v1065 = vadd.f32 %v683, %v945
      %v1066 = vadd.f32 %v686, %v948
      %v1067 = vadd.f32 %v691, %v953
      %v1068 = vadd.f32 %v694, %v956
      %v1069 = vadd.f32 %v699, %v961
      %v1070 = vadd.f32 %v702, %v964
      %v1071 = vadd.f32 %v707, %v969
      %v1072 = vadd.f32 %v710, %v972
      %v1073 = vadd.f32 %v715, %v977
      %v1074 = vadd.f32 %v718, %v980
      %v1075 = vadd.f32 %v723, %v985
      %v1076 = vadd.f32 %v726, %v988
      %v1077 = vadd.f32 %v731, %v993
      %v1078 = vadd.f32 %v734, %v996
      %v1079 = vadd.f32 %v739, %v1001
      %v1080 = vadd.f32 %v742, %v1004
      %v1081 = vadd.f32 %v747, %v1009
      %v1082 = vadd.f32 %v750, %v1012
      %v1083 = vadd.f32 %v755, %v1017
      %v1084 = vadd.f32 %v758, %v1020
      %v1085 = vadd.f32 %v763, %v1025
      %v1086 = vadd.f32 %v766, %v1028
      %v1087 = vadd.f32 %v771, %v1033
      %v1088 = vadd.f32 %v774, %v1036
      %v1089 = vadd.f32 %v779, %v1041
      %v1090 = vadd.f32 %v782, %v1044
      %v1091 = vadd.f32 %v787, %v1049
      %v1092 = vadd.f32 %v790, %v1052
      %v1093 = vadd.f32 %v795, %v1057
      %v1094 = vadd.f32 %v798, %v1060
      %s1095 = scalar_lea.vmem %s261, 24
      %v1096 = vld [vmem:[%s1095] sm:$0xff]
      %v1097 = vld [vmem:[%s1095 + $0x8] sm:$0xff]
      %v1098 = vld [vmem:[%s1095 + $0x18] sm:$0xff]
      %v1099 = vld [vmem:[%s1095 + $0x20] sm:$0xff]
      %v1100 = vld [vmem:[%s1095 + $0x30] sm:$0xff]
      %v1101 = vld [vmem:[%s1095 + $0x38] sm:$0xff]
      %v1102 = vld [vmem:[%s1095 + $0x48] sm:$0xff]
      %v1103 = vld [vmem:[%s1095 + $0x50] sm:$0xff]
      %v1104 = vld [vmem:[%s1095 + $0x60] sm:$0xff]
      %v1105 = vld [vmem:[%s1095 + $0x68] sm:$0xff]
      %v1106 = vld [vmem:[%s1095 + $0x78] sm:$0xff]
      %v1107 = vld [vmem:[%s1095 + $0x80] sm:$0xff]
      %v1108 = vld [vmem:[%s1095 + $0x90] sm:$0xff]
      %v1109 = vld [vmem:[%s1095 + $0x98] sm:$0xff]
      %v1110 = vld [vmem:[%s1095 + $0xa8] sm:$0xff]
      %v1111 = vld [vmem:[%s1095 + $0xb0] sm:$0xff]
      %v1112 = vld [vmem:[%s1095 + $0xc0] sm:$0xff]
      %v1113 = vld [vmem:[%s1095 + $0xc8] sm:$0xff]
      %v1114 = vld [vmem:[%s1095 + $0xd8] sm:$0xff]
      %v1115 = vld [vmem:[%s1095 + $0xe0] sm:$0xff]
      %v1116 = vld [vmem:[%s1095 + $0xf0] sm:$0xff]
      %v1117 = vld [vmem:[%s1095 + $0xf8] sm:$0xff]
      %v1118 = vld [vmem:[%s1095 + $0x108] sm:$0xff]
      %v1119 = vld [vmem:[%s1095 + $0x110] sm:$0xff]
      %v1120 = vld [vmem:[%s1095 + $0x120] sm:$0xff]
      %v1121 = vld [vmem:[%s1095 + $0x128] sm:$0xff]
      %v1122 = vld [vmem:[%s1095 + $0x138] sm:$0xff]
      %v1123 = vld [vmem:[%s1095 + $0x140] sm:$0xff]
      %v1124 = vld [vmem:[%s1095 + $0x150] sm:$0xff]
      %v1125 = vld [vmem:[%s1095 + $0x158] sm:$0xff]
      %v1126 = vld [vmem:[%s1095 + $0x168] sm:$0xff]
      %v1127 = vld [vmem:[%s1095 + $0x170] sm:$0xff]
      %v1128 = vpack.c.bf16 %v1097, %v1096
      %v1129 = vpack.c.bf16 %v1099, %v1098
      %v1130 = vpack.c.bf16 %v1101, %v1100
      %v1131 = vpack.c.bf16 %v1103, %v1102
      %v1132 = vpack.c.bf16 %v1105, %v1104
      %v1133 = vpack.c.bf16 %v1107, %v1106
      %v1134 = vpack.c.bf16 %v1109, %v1108
      %v1135 = vpack.c.bf16 %v1111, %v1110
      %v1136 = vpack.c.bf16 %v1113, %v1112
      %v1137 = vpack.c.bf16 %v1115, %v1114
      %v1138 = vpack.c.bf16 %v1117, %v1116
      %v1139 = vpack.c.bf16 %v1119, %v1118
      %v1140 = vpack.c.bf16 %v1121, %v1120
      %v1141 = vpack.c.bf16 %v1123, %v1122
      %v1142 = vpack.c.bf16 %v1125, %v1124
      %v1143 = vpack.c.bf16 %v1127, %v1126
      %s1144 = scalar_lea.vmem %s2, 6
      %v1145 = vld [vmem:[%s1144] sm:$0x3]
      %v1147 = vsel %vm372, %v1128, 0
      %v1150 = vsel %vm372, %v1129, 0
      %v1153 = vsel %vm372, %v1130, 0
      %v1156 = vsel %vm372, %v1131, 0
      %v1159 = vsel %vm372, %v1132, 0
      %v1162 = vsel %vm372, %v1133, 0
      %v1165 = vsel %vm372, %v1134, 0
      %v1168 = vsel %vm372, %v1135, 0
      %v1171 = vsel %vm372, %v1136, 0
      %v1174 = vsel %vm372, %v1137, 0
      %v1177 = vsel %vm372, %v1138, 0
      %v1180 = vsel %vm372, %v1139, 0
      %v1183 = vsel %vm372, %v1140, 0
      %v1186 = vsel %vm372, %v1141, 0
      %v1189 = vsel %vm372, %v1142, 0
      %v1192 = vsel %vm372, %v1143, 0
      %v1195 = vand.u32 %v1145, %v424
      %1197 = vmatprep.subr.bf16.mxu0 0
      %1198 = vmatpush1.bf16.msra.mxu0 0
      %1199 = vmatprep.subr.bf16.mxu0 0
      %1200 = vmatpush1.bf16.msra.mxu0 0
      %1201 = vmatprep.subr.bf16.mxu0 0
      %1202 = vmatpush1.bf16.msra.mxu0 0
      %1203 = vmatprep.subr.bf16.mxu0 0
      %1204 = vmatpush1.bf16.msra.mxu0 0
      %1205 = vmatprep.subr.bf16.mxu0 0
      %1206 = vmatpush1.bf16.msra.mxu0 0
      %1207 = vmatprep.subr.bf16.mxu0 0
      %1208 = vmatpush1.bf16.msra.mxu0 0
      %1209 = vmatprep.subr.bf16.mxu0 0
      %1210 = vmatpush1.bf16.msra.mxu0 0
      %1211 = vmatprep.subr.bf16.mxu0 0
      %1212 = vmatpush1.bf16.msra.mxu0 %v1195
      %1213 = vmatprep.subr.bf16.mxu0 0
      %1214 = vmatpush2.bf16.msra.mxu0 0
      %1215 = vmatprep.subr.bf16.mxu0 0
      %1216 = vmatpush2.bf16.msra.mxu0 0
      %1217 = vmatprep.subr.bf16.mxu0 0
      %1218 = vmatpush2.bf16.msra.mxu0 0
      %1219 = vmatprep.subr.bf16.mxu0 0
      %1220 = vmatpush2.bf16.msra.mxu0 0
      %1221 = vmatprep.subr.bf16.mxu0 0
      %1222 = vmatpush2.bf16.msra.mxu0 0
      %1223 = vmatprep.subr.bf16.mxu0 0
      %1224 = vmatpush2.bf16.msra.mxu0 0
      %1225 = vmatprep.subr.bf16.mxu0 0
      %1226 = vmatpush2.bf16.msra.mxu0 0
      %1227 = vmatprep.subr.bf16.mxu0 0
      %1228 = vmatpush2.bf16.msra.mxu0 0
      %1229 = vmatprep.mubr.bf16.mxu0 0
      %1230 = vmatmul.mubr.bf16.gmra.mxu0 %v1147
      %v1231 = vpop.f32.mrf.mxu0
      %v1232 = vadd.f32 0.0, %v1231
      %v1233 = vpop.f32.mrf.mxu0
      %v1234 = vpop.f32.mrf.mxu0
      %v1235 = vadd.f32 0.0, %v1234
      %v1236 = vpop.f32.mrf.mxu0
      %1237 = vmatprep.mubr.bf16.mxu0 0
      %1238 = vmatmul.mubr.bf16.gmra.mxu0 %v1150
      %v1239 = vpop.f32.mrf.mxu0
      %v1240 = vadd.f32 0.0, %v1239
      %v1241 = vpop.f32.mrf.mxu0
      %v1242 = vpop.f32.mrf.mxu0
      %v1243 = vadd.f32 0.0, %v1242
      %v1244 = vpop.f32.mrf.mxu0
      %1245 = vmatprep.mubr.bf16.mxu0 0
      %1246 = vmatmul.mubr.bf16.gmra.mxu0 %v1153
      %v1247 = vpop.f32.mrf.mxu0
      %v1248 = vadd.f32 0.0, %v1247
      %v1249 = vpop.f32.mrf.mxu0
      %v1250 = vpop.f32.mrf.mxu0
      %v1251 = vadd.f32 0.0, %v1250
      %v1252 = vpop.f32.mrf.mxu0
      %1253 = vmatprep.mubr.bf16.mxu0 0
      %1254 = vmatmul.mubr.bf16.gmra.mxu0 %v1156
      %v1255 = vpop.f32.mrf.mxu0
      %v1256 = vadd.f32 0.0, %v1255
      %v1257 = vpop.f32.mrf.mxu0
      %v1258 = vpop.f32.mrf.mxu0
      %v1259 = vadd.f32 0.0, %v1258
      %v1260 = vpop.f32.mrf.mxu0
      %1261 = vmatprep.mubr.bf16.mxu0 0
      %1262 = vmatmul.mubr.bf16.gmra.mxu0 %v1159
      %v1263 = vpop.f32.mrf.mxu0
      %v1264 = vadd.f32 0.0, %v1263
      %v1265 = vpop.f32.mrf.mxu0
      %v1266 = vpop.f32.mrf.mxu0
      %v1267 = vadd.f32 0.0, %v1266
      %v1268 = vpop.f32.mrf.mxu0
      %1269 = vmatprep.mubr.bf16.mxu0 0
      %1270 = vmatmul.mubr.bf16.gmra.mxu0 %v1162
      %v1271 = vpop.f32.mrf.mxu0
      %v1272 = vadd.f32 0.0, %v1271
      %v1273 = vpop.f32.mrf.mxu0
      %v1274 = vpop.f32.mrf.mxu0
      %v1275 = vadd.f32 0.0, %v1274
      %v1276 = vpop.f32.mrf.mxu0
      %1277 = vmatprep.mubr.bf16.mxu0 0
      %1278 = vmatmul.mubr.bf16.gmra.mxu0 %v1165
      %v1279 = vpop.f32.mrf.mxu0
      %v1280 = vadd.f32 0.0, %v1279
      %v1281 = vpop.f32.mrf.mxu0
      %v1282 = vpop.f32.mrf.mxu0
      %v1283 = vadd.f32 0.0, %v1282
      %v1284 = vpop.f32.mrf.mxu0
      %1285 = vmatprep.mubr.bf16.mxu0 0
      %1286 = vmatmul.mubr.bf16.gmra.mxu0 %v1168
      %v1287 = vpop.f32.mrf.mxu0
      %v1288 = vadd.f32 0.0, %v1287
      %v1289 = vpop.f32.mrf.mxu0
      %v1290 = vpop.f32.mrf.mxu0
      %v1291 = vadd.f32 0.0, %v1290
      %v1292 = vpop.f32.mrf.mxu0
      %1293 = vmatprep.mubr.bf16.mxu0 0
      %1294 = vmatmul.mubr.bf16.gmra.mxu0 %v1171
      %v1295 = vpop.f32.mrf.mxu0
      %v1296 = vadd.f32 0.0, %v1295
      %v1297 = vpop.f32.mrf.mxu0
      %v1298 = vpop.f32.mrf.mxu0
      %v1299 = vadd.f32 0.0, %v1298
      %v1300 = vpop.f32.mrf.mxu0
      %1301 = vmatprep.mubr.bf16.mxu0 0
      %1302 = vmatmul.mubr.bf16.gmra.mxu0 %v1174
      %v1303 = vpop.f32.mrf.mxu0
      %v1304 = vadd.f32 0.0, %v1303
      %v1305 = vpop.f32.mrf.mxu0
      %v1306 = vpop.f32.mrf.mxu0
      %v1307 = vadd.f32 0.0, %v1306
      %v1308 = vpop.f32.mrf.mxu0
      %1309 = vmatprep.mubr.bf16.mxu0 0
      %1310 = vmatmul.mubr.bf16.gmra.mxu0 %v1177
      %v1311 = vpop.f32.mrf.mxu0
      %v1312 = vadd.f32 0.0, %v1311
      %v1313 = vpop.f32.mrf.mxu0
      %v1314 = vpop.f32.mrf.mxu0
      %v1315 = vadd.f32 0.0, %v1314
      %v1316 = vpop.f32.mrf.mxu0
      %1317 = vmatprep.mubr.bf16.mxu0 0
      %1318 = vmatmul.mubr.bf16.gmra.mxu0 %v1180
      %v1319 = vpop.f32.mrf.mxu0
      %v1320 = vadd.f32 0.0, %v1319
      %v1321 = vpop.f32.mrf.mxu0
      %v1322 = vpop.f32.mrf.mxu0
      %v1323 = vadd.f32 0.0, %v1322
      %v1324 = vpop.f32.mrf.mxu0
      %1325 = vmatprep.mubr.bf16.mxu0 0
      %1326 = vmatmul.mubr.bf16.gmra.mxu0 %v1183
      %v1327 = vpop.f32.mrf.mxu0
      %v1328 = vadd.f32 0.0, %v1327
      %v1329 = vpop.f32.mrf.mxu0
      %v1330 = vpop.f32.mrf.mxu0
      %v1331 = vadd.f32 0.0, %v1330
      %v1332 = vpop.f32.mrf.mxu0
      %1333 = vmatprep.mubr.bf16.mxu0 0
      %1334 = vmatmul.mubr.bf16.gmra.mxu0 %v1186
      %v1335 = vpop.f32.mrf.mxu0
      %v1336 = vadd.f32 0.0, %v1335
      %v1337 = vpop.f32.mrf.mxu0
      %v1338 = vpop.f32.mrf.mxu0
      %v1339 = vadd.f32 0.0, %v1338
      %v1340 = vpop.f32.mrf.mxu0
      %1341 = vmatprep.mubr.bf16.mxu0 0
      %1342 = vmatmul.mubr.bf16.gmra.mxu0 %v1189
      %v1343 = vpop.f32.mrf.mxu0
      %v1344 = vadd.f32 0.0, %v1343
      %v1345 = vpop.f32.mrf.mxu0
      %v1346 = vpop.f32.mrf.mxu0
      %v1347 = vadd.f32 0.0, %v1346
      %v1348 = vpop.f32.mrf.mxu0
      %1349 = vmatprep.mubr.bf16.mxu0 0
      %1350 = vmatmul.mubr.bf16.gmra.mxu0 %v1192
      %v1351 = vpop.f32.mrf.mxu0
      %v1352 = vadd.f32 0.0, %v1351
      %v1353 = vpop.f32.mrf.mxu0
      %v1354 = vpop.f32.mrf.mxu0
      %v1355 = vadd.f32 0.0, %v1354
      %v1356 = vpop.f32.mrf.mxu0
      %1357 = vdwg.mxu0
      %v1358 = vadd.f32 %v1063, %v1232
      %v1359 = vadd.f32 %v1064, %v1235
      %v1360 = vadd.f32 %v1065, %v1240
      %v1361 = vadd.f32 %v1066, %v1243
      %v1362 = vadd.f32 %v1067, %v1248
      %v1363 = vadd.f32 %v1068, %v1251
      %v1364 = vadd.f32 %v1069, %v1256
      %v1365 = vadd.f32 %v1070, %v1259
      %v1366 = vadd.f32 %v1071, %v1264
      %v1367 = vadd.f32 %v1072, %v1267
      %v1368 = vadd.f32 %v1073, %v1272
      %v1369 = vadd.f32 %v1074, %v1275
      %v1370 = vadd.f32 %v1075, %v1280
      %v1371 = vadd.f32 %v1076, %v1283
      %v1372 = vadd.f32 %v1077, %v1288
      %v1373 = vadd.f32 %v1078, %v1291
      %v1374 = vadd.f32 %v1079, %v1296
      %v1375 = vadd.f32 %v1080, %v1299
      %v1376 = vadd.f32 %v1081, %v1304
      %v1377 = vadd.f32 %v1082, %v1307
      %v1378 = vadd.f32 %v1083, %v1312
      %v1379 = vadd.f32 %v1084, %v1315
      %v1380 = vadd.f32 %v1085, %v1320
      %v1381 = vadd.f32 %v1086, %v1323
      %v1382 = vadd.f32 %v1087, %v1328
      %v1383 = vadd.f32 %v1088, %v1331
      %v1384 = vadd.f32 %v1089, %v1336
      %v1385 = vadd.f32 %v1090, %v1339
      %v1386 = vadd.f32 %v1091, %v1344
      %v1387 = vadd.f32 %v1092, %v1347
      %v1388 = vadd.f32 %v1093, %v1352
      %v1389 = vadd.f32 %v1094, %v1355
      %v1390 = vld [vmem:[%s1095 + $0x1] sm:$0xff]
      %v1391 = vld [vmem:[%s1095 + $0x9] sm:$0xff]
      %v1392 = vld [vmem:[%s1095 + $0x19] sm:$0xff]
      %v1393 = vld [vmem:[%s1095 + $0x21] sm:$0xff]
      %v1394 = vld [vmem:[%s1095 + $0x31] sm:$0xff]
      %v1395 = vld [vmem:[%s1095 + $0x39] sm:$0xff]
      %v1396 = vld [vmem:[%s1095 + $0x49] sm:$0xff]
      %v1397 = vld [vmem:[%s1095 + $0x51] sm:$0xff]
      %v1398 = vld [vmem:[%s1095 + $0x61] sm:$0xff]
      %v1399 = vld [vmem:[%s1095 + $0x69] sm:$0xff]
      %v1400 = vld [vmem:[%s1095 + $0x79] sm:$0xff]
      %v1401 = vld [vmem:[%s1095 + $0x81] sm:$0xff]
      %v1402 = vld [vmem:[%s1095 + $0x91] sm:$0xff]
      %v1403 = vld [vmem:[%s1095 + $0x99] sm:$0xff]
      %v1404 = vld [vmem:[%s1095 + $0xa9] sm:$0xff]
      %v1405 = vld [vmem:[%s1095 + $0xb1] sm:$0xff]
      %v1406 = vld [vmem:[%s1095 + $0xc1] sm:$0xff]
      %v1407 = vld [vmem:[%s1095 + $0xc9] sm:$0xff]
      %v1408 = vld [vmem:[%s1095 + $0xd9] sm:$0xff]
      %v1409 = vld [vmem:[%s1095 + $0xe1] sm:$0xff]
      %v1410 = vld [vmem:[%s1095 + $0xf1] sm:$0xff]
      %v1411 = vld [vmem:[%s1095 + $0xf9] sm:$0xff]
      %v1412 = vld [vmem:[%s1095 + $0x109] sm:$0xff]
      %v1413 = vld [vmem:[%s1095 + $0x111] sm:$0xff]
      %v1414 = vld [vmem:[%s1095 + $0x121] sm:$0xff]
      %v1415 = vld [vmem:[%s1095 + $0x129] sm:$0xff]
      %v1416 = vld [vmem:[%s1095 + $0x139] sm:$0xff]
      %v1417 = vld [vmem:[%s1095 + $0x141] sm:$0xff]
      %v1418 = vld [vmem:[%s1095 + $0x151] sm:$0xff]
      %v1419 = vld [vmem:[%s1095 + $0x159] sm:$0xff]
      %v1420 = vld [vmem:[%s1095 + $0x169] sm:$0xff]
      %v1421 = vld [vmem:[%s1095 + $0x171] sm:$0xff]
      %v1422 = vpack.c.bf16 %v1391, %v1390
      %v1423 = vpack.c.bf16 %v1393, %v1392
      %v1424 = vpack.c.bf16 %v1395, %v1394
      %v1425 = vpack.c.bf16 %v1397, %v1396
      %v1426 = vpack.c.bf16 %v1399, %v1398
      %v1427 = vpack.c.bf16 %v1401, %v1400
      %v1428 = vpack.c.bf16 %v1403, %v1402
      %v1429 = vpack.c.bf16 %v1405, %v1404
      %v1430 = vpack.c.bf16 %v1407, %v1406
      %v1431 = vpack.c.bf16 %v1409, %v1408
      %v1432 = vpack.c.bf16 %v1411, %v1410
      %v1433 = vpack.c.bf16 %v1413, %v1412
      %v1434 = vpack.c.bf16 %v1415, %v1414
      %v1435 = vpack.c.bf16 %v1417, %v1416
      %v1436 = vpack.c.bf16 %v1419, %v1418
      %v1437 = vpack.c.bf16 %v1421, %v1420
      %s1438 = scalar_lea.vmem %s2, 8
      %v1439 = vld [vmem:[%s1438] sm:$0x3]
      %v1441 = vsel %vm372, %v1422, 0
      %v1444 = vsel %vm372, %v1423, 0
      %v1447 = vsel %vm372, %v1424, 0
      %v1450 = vsel %vm372, %v1425, 0
      %v1453 = vsel %vm372, %v1426, 0
      %v1456 = vsel %vm372, %v1427, 0
      %v1459 = vsel %vm372, %v1428, 0
      %v1462 = vsel %vm372, %v1429, 0
      %v1465 = vsel %vm372, %v1430, 0
      %v1468 = vsel %vm372, %v1431, 0
      %v1471 = vsel %vm372, %v1432, 0
      %v1474 = vsel %vm372, %v1433, 0
      %v1477 = vsel %vm372, %v1434, 0
      %v1480 = vsel %vm372, %v1435, 0
      %v1483 = vsel %vm372, %v1436, 0
      %v1486 = vsel %vm372, %v1437, 0
      %v1489 = vand.u32 %v1439, %v424
      %1491 = vmatprep.subr.bf16.mxu0 0
      %1492 = vmatpush1.bf16.msra.mxu0 0
      %1493 = vmatprep.subr.bf16.mxu0 0
      %1494 = vmatpush1.bf16.msra.mxu0 0
      %1495 = vmatprep.subr.bf16.mxu0 0
      %1496 = vmatpush1.bf16.msra.mxu0 0
      %1497 = vmatprep.subr.bf16.mxu0 0
      %1498 = vmatpush1.bf16.msra.mxu0 0
      %1499 = vmatprep.subr.bf16.mxu0 0
      %1500 = vmatpush1.bf16.msra.mxu0 0
      %1501 = vmatprep.subr.bf16.mxu0 0
      %1502 = vmatpush1.bf16.msra.mxu0 0
      %1503 = vmatprep.subr.bf16.mxu0 0
      %1504 = vmatpush1.bf16.msra.mxu0 0
      %1505 = vmatprep.subr.bf16.mxu0 0
      %1506 = vmatpush1.bf16.msra.mxu0 %v1489
      %1507 = vmatprep.subr.bf16.mxu0 0
      %1508 = vmatpush2.bf16.msra.mxu0 0
      %1509 = vmatprep.subr.bf16.mxu0 0
      %1510 = vmatpush2.bf16.msra.mxu0 0
      %1511 = vmatprep.subr.bf16.mxu0 0
      %1512 = vmatpush2.bf16.msra.mxu0 0
      %1513 = vmatprep.subr.bf16.mxu0 0
      %1514 = vmatpush2.bf16.msra.mxu0 0
      %1515 = vmatprep.subr.bf16.mxu0 0
      %1516 = vmatpush2.bf16.msra.mxu0 0
      %1517 = vmatprep.subr.bf16.mxu0 0
      %1518 = vmatpush2.bf16.msra.mxu0 0
      %1519 = vmatprep.subr.bf16.mxu0 0
      %1520 = vmatpush2.bf16.msra.mxu0 0
      %1521 = vmatprep.subr.bf16.mxu0 0
      %1522 = vmatpush2.bf16.msra.mxu0 0
      %1523 = vmatprep.mubr.bf16.mxu0 0
      %1524 = vmatmul.mubr.bf16.gmra.mxu0 %v1441
      %v1525 = vpop.f32.mrf.mxu0
      %v1526 = vadd.f32 0.0, %v1525
      %v1527 = vpop.f32.mrf.mxu0
      %v1528 = vpop.f32.mrf.mxu0
      %v1529 = vadd.f32 0.0, %v1528
      %v1530 = vpop.f32.mrf.mxu0
      %1531 = vmatprep.mubr.bf16.mxu0 0
      %1532 = vmatmul.mubr.bf16.gmra.mxu0 %v1444
      %v1533 = vpop.f32.mrf.mxu0
      %v1534 = vadd.f32 0.0, %v1533
      %v1535 = vpop.f32.mrf.mxu0
      %v1536 = vpop.f32.mrf.mxu0
      %v1537 = vadd.f32 0.0, %v1536
      %v1538 = vpop.f32.mrf.mxu0
      %1539 = vmatprep.mubr.bf16.mxu0 0
      %1540 = vmatmul.mubr.bf16.gmra.mxu0 %v1447
      %v1541 = vpop.f32.mrf.mxu0
      %v1542 = vadd.f32 0.0, %v1541
      %v1543 = vpop.f32.mrf.mxu0
      %v1544 = vpop.f32.mrf.mxu0
      %v1545 = vadd.f32 0.0, %v1544
      %v1546 = vpop.f32.mrf.mxu0
      %1547 = vmatprep.mubr.bf16.mxu0 0
      %1548 = vmatmul.mubr.bf16.gmra.mxu0 %v1450
      %v1549 = vpop.f32.mrf.mxu0
      %v1550 = vadd.f32 0.0, %v1549
      %v1551 = vpop.f32.mrf.mxu0
      %v1552 = vpop.f32.mrf.mxu0
      %v1553 = vadd.f32 0.0, %v1552
      %v1554 = vpop.f32.mrf.mxu0
      %1555 = vmatprep.mubr.bf16.mxu0 0
      %1556 = vmatmul.mubr.bf16.gmra.mxu0 %v1453
      %v1557 = vpop.f32.mrf.mxu0
      %v1558 = vadd.f32 0.0, %v1557
      %v1559 = vpop.f32.mrf.mxu0
      %v1560 = vpop.f32.mrf.mxu0
      %v1561 = vadd.f32 0.0, %v1560
      %v1562 = vpop.f32.mrf.mxu0
      %1563 = vmatprep.mubr.bf16.mxu0 0
      %1564 = vmatmul.mubr.bf16.gmra.mxu0 %v1456
      %v1565 = vpop.f32.mrf.mxu0
      %v1566 = vadd.f32 0.0, %v1565
      %v1567 = vpop.f32.mrf.mxu0
      %v1568 = vpop.f32.mrf.mxu0
      %v1569 = vadd.f32 0.0, %v1568
      %v1570 = vpop.f32.mrf.mxu0
      %1571 = vmatprep.mubr.bf16.mxu0 0
      %1572 = vmatmul.mubr.bf16.gmra.mxu0 %v1459
      %v1573 = vpop.f32.mrf.mxu0
      %v1574 = vadd.f32 0.0, %v1573
      %v1575 = vpop.f32.mrf.mxu0
      %v1576 = vpop.f32.mrf.mxu0
      %v1577 = vadd.f32 0.0, %v1576
      %v1578 = vpop.f32.mrf.mxu0
      %1579 = vmatprep.mubr.bf16.mxu0 0
      %1580 = vmatmul.mubr.bf16.gmra.mxu0 %v1462
      %v1581 = vpop.f32.mrf.mxu0
      %v1582 = vadd.f32 0.0, %v1581
      %v1583 = vpop.f32.mrf.mxu0
      %v1584 = vpop.f32.mrf.mxu0
      %v1585 = vadd.f32 0.0, %v1584
      %v1586 = vpop.f32.mrf.mxu0
      %1587 = vmatprep.mubr.bf16.mxu0 0
      %1588 = vmatmul.mubr.bf16.gmra.mxu0 %v1465
      %v1589 = vpop.f32.mrf.mxu0
      %v1590 = vadd.f32 0.0, %v1589
      %v1591 = vpop.f32.mrf.mxu0
      %v1592 = vpop.f32.mrf.mxu0
      %v1593 = vadd.f32 0.0, %v1592
      %v1594 = vpop.f32.mrf.mxu0
      %1595 = vmatprep.mubr.bf16.mxu0 0
      %1596 = vmatmul.mubr.bf16.gmra.mxu0 %v1468
      %v1597 = vpop.f32.mrf.mxu0
      %v1598 = vadd.f32 0.0, %v1597
      %v1599 = vpop.f32.mrf.mxu0
      %v1600 = vpop.f32.mrf.mxu0
      %v1601 = vadd.f32 0.0, %v1600
      %v1602 = vpop.f32.mrf.mxu0
      %1603 = vmatprep.mubr.bf16.mxu0 0
      %1604 = vmatmul.mubr.bf16.gmra.mxu0 %v1471
      %v1605 = vpop.f32.mrf.mxu0
      %v1606 = vadd.f32 0.0, %v1605
      %v1607 = vpop.f32.mrf.mxu0
      %v1608 = vpop.f32.mrf.mxu0
      %v1609 = vadd.f32 0.0, %v1608
      %v1610 = vpop.f32.mrf.mxu0
      %1611 = vmatprep.mubr.bf16.mxu0 0
      %1612 = vmatmul.mubr.bf16.gmra.mxu0 %v1474
      %v1613 = vpop.f32.mrf.mxu0
      %v1614 = vadd.f32 0.0, %v1613
      %v1615 = vpop.f32.mrf.mxu0
      %v1616 = vpop.f32.mrf.mxu0
      %v1617 = vadd.f32 0.0, %v1616
      %v1618 = vpop.f32.mrf.mxu0
      %1619 = vmatprep.mubr.bf16.mxu0 0
      %1620 = vmatmul.mubr.bf16.gmra.mxu0 %v1477
      %v1621 = vpop.f32.mrf.mxu0
      %v1622 = vadd.f32 0.0, %v1621
      %v1623 = vpop.f32.mrf.mxu0
      %v1624 = vpop.f32.mrf.mxu0
      %v1625 = vadd.f32 0.0, %v1624
      %v1626 = vpop.f32.mrf.mxu0
      %1627 = vmatprep.mubr.bf16.mxu0 0
      %1628 = vmatmul.mubr.bf16.gmra.mxu0 %v1480
      %v1629 = vpop.f32.mrf.mxu0
      %v1630 = vadd.f32 0.0, %v1629
      %v1631 = vpop.f32.mrf.mxu0
      %v1632 = vpop.f32.mrf.mxu0
      %v1633 = vadd.f32 0.0, %v1632
      %v1634 = vpop.f32.mrf.mxu0
      %1635 = vmatprep.mubr.bf16.mxu0 0
      %1636 = vmatmul.mubr.bf16.gmra.mxu0 %v1483
      %v1637 = vpop.f32.mrf.mxu0
      %v1638 = vadd.f32 0.0, %v1637
      %v1639 = vpop.f32.mrf.mxu0
      %v1640 = vpop.f32.mrf.mxu0
      %v1641 = vadd.f32 0.0, %v1640
      %v1642 = vpop.f32.mrf.mxu0
      %1643 = vmatprep.mubr.bf16.mxu0 0
      %1644 = vmatmul.mubr.bf16.gmra.mxu0 %v1486
      %v1645 = vpop.f32.mrf.mxu0
      %v1646 = vadd.f32 0.0, %v1645
      %v1647 = vpop.f32.mrf.mxu0
      %v1648 = vpop.f32.mrf.mxu0
      %v1649 = vadd.f32 0.0, %v1648
      %v1650 = vpop.f32.mrf.mxu0
      %1651 = vdwg.mxu0
      %v1652 = vadd.f32 %v1358, %v1526
      %v1653 = vadd.f32 %v1359, %v1529
      %v1654 = vadd.f32 %v1360, %v1534
      %v1655 = vadd.f32 %v1361, %v1537
      %v1656 = vadd.f32 %v1362, %v1542
      %v1657 = vadd.f32 %v1363, %v1545
      %v1658 = vadd.f32 %v1364, %v1550
      %v1659 = vadd.f32 %v1365, %v1553
      %v1660 = vadd.f32 %v1366, %v1558
      %v1661 = vadd.f32 %v1367, %v1561
      %v1662 = vadd.f32 %v1368, %v1566
      %v1663 = vadd.f32 %v1369, %v1569
      %v1664 = vadd.f32 %v1370, %v1574
      %v1665 = vadd.f32 %v1371, %v1577
      %v1666 = vadd.f32 %v1372, %v1582
      %v1667 = vadd.f32 %v1373, %v1585
      %v1668 = vadd.f32 %v1374, %v1590
      %v1669 = vadd.f32 %v1375, %v1593
      %v1670 = vadd.f32 %v1376, %v1598
      %v1671 = vadd.f32 %v1377, %v1601
      %v1672 = vadd.f32 %v1378, %v1606
      %v1673 = vadd.f32 %v1379, %v1609
      %v1674 = vadd.f32 %v1380, %v1614
      %v1675 = vadd.f32 %v1381, %v1617
      %v1676 = vadd.f32 %v1382, %v1622
      %v1677 = vadd.f32 %v1383, %v1625
      %v1678 = vadd.f32 %v1384, %v1630
      %v1679 = vadd.f32 %v1385, %v1633
      %v1680 = vadd.f32 %v1386, %v1638
      %v1681 = vadd.f32 %v1387, %v1641
      %v1682 = vadd.f32 %v1388, %v1646
      %v1683 = vadd.f32 %v1389, %v1649
      %v1684 = vld [vmem:[%s1095 + $0x2] sm:$0xff]
      %v1685 = vld [vmem:[%s1095 + $0xa] sm:$0xff]
      %v1686 = vld [vmem:[%s1095 + $0x1a] sm:$0xff]
      %v1687 = vld [vmem:[%s1095 + $0x22] sm:$0xff]
      %v1688 = vld [vmem:[%s1095 + $0x32] sm:$0xff]
      %v1689 = vld [vmem:[%s1095 + $0x3a] sm:$0xff]
      %v1690 = vld [vmem:[%s1095 + $0x4a] sm:$0xff]
      %v1691 = vld [vmem:[%s1095 + $0x52] sm:$0xff]
      %v1692 = vld [vmem:[%s1095 + $0x62] sm:$0xff]
      %v1693 = vld [vmem:[%s1095 + $0x6a] sm:$0xff]
      %v1694 = vld [vmem:[%s1095 + $0x7a] sm:$0xff]
      %v1695 = vld [vmem:[%s1095 + $0x82] sm:$0xff]
      %v1696 = vld [vmem:[%s1095 + $0x92] sm:$0xff]
      %v1697 = vld [vmem:[%s1095 + $0x9a] sm:$0xff]
      %v1698 = vld [vmem:[%s1095 + $0xaa] sm:$0xff]
      %v1699 = vld [vmem:[%s1095 + $0xb2] sm:$0xff]
      %v1700 = vld [vmem:[%s1095 + $0xc2] sm:$0xff]
      %v1701 = vld [vmem:[%s1095 + $0xca] sm:$0xff]
      %v1702 = vld [vmem:[%s1095 + $0xda] sm:$0xff]
      %v1703 = vld [vmem:[%s1095 + $0xe2] sm:$0xff]
      %v1704 = vld [vmem:[%s1095 + $0xf2] sm:$0xff]
      %v1705 = vld [vmem:[%s1095 + $0xfa] sm:$0xff]
      %v1706 = vld [vmem:[%s1095 + $0x10a] sm:$0xff]
      %v1707 = vld [vmem:[%s1095 + $0x112] sm:$0xff]
      %v1708 = vld [vmem:[%s1095 + $0x122] sm:$0xff]
      %v1709 = vld [vmem:[%s1095 + $0x12a] sm:$0xff]
      %v1710 = vld [vmem:[%s1095 + $0x13a] sm:$0xff]
      %v1711 = vld [vmem:[%s1095 + $0x142] sm:$0xff]
      %v1712 = vld [vmem:[%s1095 + $0x152] sm:$0xff]
      %v1713 = vld [vmem:[%s1095 + $0x15a] sm:$0xff]
      %v1714 = vld [vmem:[%s1095 + $0x16a] sm:$0xff]
      %v1715 = vld [vmem:[%s1095 + $0x172] sm:$0xff]
      %v1716 = vpack.c.bf16 %v1685, %v1684
      %v1717 = vpack.c.bf16 %v1687, %v1686
      %v1718 = vpack.c.bf16 %v1689, %v1688
      %v1719 = vpack.c.bf16 %v1691, %v1690
      %v1720 = vpack.c.bf16 %v1693, %v1692
      %v1721 = vpack.c.bf16 %v1695, %v1694
      %v1722 = vpack.c.bf16 %v1697, %v1696
      %v1723 = vpack.c.bf16 %v1699, %v1698
      %v1724 = vpack.c.bf16 %v1701, %v1700
      %v1725 = vpack.c.bf16 %v1703, %v1702
      %v1726 = vpack.c.bf16 %v1705, %v1704
      %v1727 = vpack.c.bf16 %v1707, %v1706
      %v1728 = vpack.c.bf16 %v1709, %v1708
      %v1729 = vpack.c.bf16 %v1711, %v1710
      %v1730 = vpack.c.bf16 %v1713, %v1712
      %v1731 = vpack.c.bf16 %v1715, %v1714
      %s1732 = scalar_lea.vmem %s2, 10
      %v1733 = vld [vmem:[%s1732] sm:$0x3]
      %v1735 = vsel %vm372, %v1716, 0
      %v1738 = vsel %vm372, %v1717, 0
      %v1741 = vsel %vm372, %v1718, 0
      %v1744 = vsel %vm372, %v1719, 0
      %v1747 = vsel %vm372, %v1720, 0
      %v1750 = vsel %vm372, %v1721, 0
      %v1753 = vsel %vm372, %v1722, 0
      %v1756 = vsel %vm372, %v1723, 0
      %v1759 = vsel %vm372, %v1724, 0
      %v1762 = vsel %vm372, %v1725, 0
      %v1765 = vsel %vm372, %v1726, 0
      %v1768 = vsel %vm372, %v1727, 0
      %v1771 = vsel %vm372, %v1728, 0
      %v1774 = vsel %vm372, %v1729, 0
      %v1777 = vsel %vm372, %v1730, 0
      %v1780 = vsel %vm372, %v1731, 0
      %v1783 = vand.u32 %v1733, %v424
      %1785 = vmatprep.subr.bf16.mxu0 0
      %1786 = vmatpush1.bf16.msra.mxu0 0
      %1787 = vmatprep.subr.bf16.mxu0 0
      %1788 = vmatpush1.bf16.msra.mxu0 0
      %1789 = vmatprep.subr.bf16.mxu0 0
      %1790 = vmatpush1.bf16.msra.mxu0 0
      %1791 = vmatprep.subr.bf16.mxu0 0
      %1792 = vmatpush1.bf16.msra.mxu0 0
      %1793 = vmatprep.subr.bf16.mxu0 0
      %1794 = vmatpush1.bf16.msra.mxu0 0
      %1795 = vmatprep.subr.bf16.mxu0 0
      %1796 = vmatpush1.bf16.msra.mxu0 0
      %1797 = vmatprep.subr.bf16.mxu0 0
      %1798 = vmatpush1.bf16.msra.mxu0 0
      %1799 = vmatprep.subr.bf16.mxu0 0
      %1800 = vmatpush1.bf16.msra.mxu0 %v1783
      %1801 = vmatprep.subr.bf16.mxu0 0
      %1802 = vmatpush2.bf16.msra.mxu0 0
      %1803 = vmatprep.subr.bf16.mxu0 0
      %1804 = vmatpush2.bf16.msra.mxu0 0
      %1805 = vmatprep.subr.bf16.mxu0 0
      %1806 = vmatpush2.bf16.msra.mxu0 0
      %1807 = vmatprep.subr.bf16.mxu0 0
      %1808 = vmatpush2.bf16.msra.mxu0 0
      %1809 = vmatprep.subr.bf16.mxu0 0
      %1810 = vmatpush2.bf16.msra.mxu0 0
      %1811 = vmatprep.subr.bf16.mxu0 0
      %1812 = vmatpush2.bf16.msra.mxu0 0
      %1813 = vmatprep.subr.bf16.mxu0 0
      %1814 = vmatpush2.bf16.msra.mxu0 0
      %1815 = vmatprep.subr.bf16.mxu0 0
      %1816 = vmatpush2.bf16.msra.mxu0 0
      %1817 = vmatprep.mubr.bf16.mxu0 0
      %1818 = vmatmul.mubr.bf16.gmra.mxu0 %v1735
      %v1819 = vpop.f32.mrf.mxu0
      %v1820 = vadd.f32 0.0, %v1819
      %v1821 = vpop.f32.mrf.mxu0
      %v1822 = vpop.f32.mrf.mxu0
      %v1823 = vadd.f32 0.0, %v1822
      %v1824 = vpop.f32.mrf.mxu0
      %1825 = vmatprep.mubr.bf16.mxu0 0
      %1826 = vmatmul.mubr.bf16.gmra.mxu0 %v1738
      %v1827 = vpop.f32.mrf.mxu0
      %v1828 = vadd.f32 0.0, %v1827
      %v1829 = vpop.f32.mrf.mxu0
      %v1830 = vpop.f32.mrf.mxu0
      %v1831 = vadd.f32 0.0, %v1830
      %v1832 = vpop.f32.mrf.mxu0
      %1833 = vmatprep.mubr.bf16.mxu0 0
      %1834 = vmatmul.mubr.bf16.gmra.mxu0 %v1741
      %v1835 = vpop.f32.mrf.mxu0
      %v1836 = vadd.f32 0.0, %v1835
      %v1837 = vpop.f32.mrf.mxu0
      %v1838 = vpop.f32.mrf.mxu0
      %v1839 = vadd.f32 0.0, %v1838
      %v1840 = vpop.f32.mrf.mxu0
      %1841 = vmatprep.mubr.bf16.mxu0 0
      %1842 = vmatmul.mubr.bf16.gmra.mxu0 %v1744
      %v1843 = vpop.f32.mrf.mxu0
      %v1844 = vadd.f32 0.0, %v1843
      %v1845 = vpop.f32.mrf.mxu0
      %v1846 = vpop.f32.mrf.mxu0
      %v1847 = vadd.f32 0.0, %v1846
      %v1848 = vpop.f32.mrf.mxu0
      %1849 = vmatprep.mubr.bf16.mxu0 0
      %1850 = vmatmul.mubr.bf16.gmra.mxu0 %v1747
      %v1851 = vpop.f32.mrf.mxu0
      %v1852 = vadd.f32 0.0, %v1851
      %v1853 = vpop.f32.mrf.mxu0
      %v1854 = vpop.f32.mrf.mxu0
      %v1855 = vadd.f32 0.0, %v1854
      %v1856 = vpop.f32.mrf.mxu0
      %1857 = vmatprep.mubr.bf16.mxu0 0
      %1858 = vmatmul.mubr.bf16.gmra.mxu0 %v1750
      %v1859 = vpop.f32.mrf.mxu0
      %v1860 = vadd.f32 0.0, %v1859
      %v1861 = vpop.f32.mrf.mxu0
      %v1862 = vpop.f32.mrf.mxu0
      %v1863 = vadd.f32 0.0, %v1862
      %v1864 = vpop.f32.mrf.mxu0
      %1865 = vmatprep.mubr.bf16.mxu0 0
      %1866 = vmatmul.mubr.bf16.gmra.mxu0 %v1753
      %v1867 = vpop.f32.mrf.mxu0
      %v1868 = vadd.f32 0.0, %v1867
      %v1869 = vpop.f32.mrf.mxu0
      %v1870 = vpop.f32.mrf.mxu0
      %v1871 = vadd.f32 0.0, %v1870
      %v1872 = vpop.f32.mrf.mxu0
      %1873 = vmatprep.mubr.bf16.mxu0 0
      %1874 = vmatmul.mubr.bf16.gmra.mxu0 %v1756
      %v1875 = vpop.f32.mrf.mxu0
      %v1876 = vadd.f32 0.0, %v1875
      %v1877 = vpop.f32.mrf.mxu0
      %v1878 = vpop.f32.mrf.mxu0
      %v1879 = vadd.f32 0.0, %v1878
      %v1880 = vpop.f32.mrf.mxu0
      %1881 = vmatprep.mubr.bf16.mxu0 0
      %1882 = vmatmul.mubr.bf16.gmra.mxu0 %v1759
      %v1883 = vpop.f32.mrf.mxu0
      %v1884 = vadd.f32 0.0, %v1883
      %v1885 = vpop.f32.mrf.mxu0
      %v1886 = vpop.f32.mrf.mxu0
      %v1887 = vadd.f32 0.0, %v1886
      %v1888 = vpop.f32.mrf.mxu0
      %1889 = vmatprep.mubr.bf16.mxu0 0
      %1890 = vmatmul.mubr.bf16.gmra.mxu0 %v1762
      %v1891 = vpop.f32.mrf.mxu0
      %v1892 = vadd.f32 0.0, %v1891
      %v1893 = vpop.f32.mrf.mxu0
      %v1894 = vpop.f32.mrf.mxu0
      %v1895 = vadd.f32 0.0, %v1894
      %v1896 = vpop.f32.mrf.mxu0
      %1897 = vmatprep.mubr.bf16.mxu0 0
      %1898 = vmatmul.mubr.bf16.gmra.mxu0 %v1765
      %v1899 = vpop.f32.mrf.mxu0
      %v1900 = vadd.f32 0.0, %v1899
      %v1901 = vpop.f32.mrf.mxu0
      %v1902 = vpop.f32.mrf.mxu0
      %v1903 = vadd.f32 0.0, %v1902
      %v1904 = vpop.f32.mrf.mxu0
      %1905 = vmatprep.mubr.bf16.mxu0 0
      %1906 = vmatmul.mubr.bf16.gmra.mxu0 %v1768
      %v1907 = vpop.f32.mrf.mxu0
      %v1908 = vadd.f32 0.0, %v1907
      %v1909 = vpop.f32.mrf.mxu0
      %v1910 = vpop.f32.mrf.mxu0
      %v1911 = vadd.f32 0.0, %v1910
      %v1912 = vpop.f32.mrf.mxu0
      %1913 = vmatprep.mubr.bf16.mxu0 0
      %1914 = vmatmul.mubr.bf16.gmra.mxu0 %v1771
      %v1915 = vpop.f32.mrf.mxu0
      %v1916 = vadd.f32 0.0, %v1915
      %v1917 = vpop.f32.mrf.mxu0
      %v1918 = vpop.f32.mrf.mxu0
      %v1919 = vadd.f32 0.0, %v1918
      %v1920 = vpop.f32.mrf.mxu0
      %1921 = vmatprep.mubr.bf16.mxu0 0
      %1922 = vmatmul.mubr.bf16.gmra.mxu0 %v1774
      %v1923 = vpop.f32.mrf.mxu0
      %v1924 = vadd.f32 0.0, %v1923
      %v1925 = vpop.f32.mrf.mxu0
      %v1926 = vpop.f32.mrf.mxu0
      %v1927 = vadd.f32 0.0, %v1926
      %v1928 = vpop.f32.mrf.mxu0
      %1929 = vmatprep.mubr.bf16.mxu0 0
      %1930 = vmatmul.mubr.bf16.gmra.mxu0 %v1777
      %v1931 = vpop.f32.mrf.mxu0
      %v1932 = vadd.f32 0.0, %v1931
      %v1933 = vpop.f32.mrf.mxu0
      %v1934 = vpop.f32.mrf.mxu0
      %v1935 = vadd.f32 0.0, %v1934
      %v1936 = vpop.f32.mrf.mxu0
      %1937 = vmatprep.mubr.bf16.mxu0 0
      %1938 = vmatmul.mubr.bf16.gmra.mxu0 %v1780
      %v1939 = vpop.f32.mrf.mxu0
      %v1940 = vadd.f32 0.0, %v1939
      %v1941 = vpop.f32.mrf.mxu0
      %v1942 = vpop.f32.mrf.mxu0
      %v1943 = vadd.f32 0.0, %v1942
      %v1944 = vpop.f32.mrf.mxu0
      %1945 = vdwg.mxu0
      %v1946 = vadd.f32 %v1652, %v1820
      %v1947 = vadd.f32 %v1653, %v1823
      %v1948 = vadd.f32 %v1654, %v1828
      %v1949 = vadd.f32 %v1655, %v1831
      %v1950 = vadd.f32 %v1656, %v1836
      %v1951 = vadd.f32 %v1657, %v1839
      %v1952 = vadd.f32 %v1658, %v1844
      %v1953 = vadd.f32 %v1659, %v1847
      %v1954 = vadd.f32 %v1660, %v1852
      %v1955 = vadd.f32 %v1661, %v1855
      %v1956 = vadd.f32 %v1662, %v1860
      %v1957 = vadd.f32 %v1663, %v1863
      %v1958 = vadd.f32 %v1664, %v1868
      %v1959 = vadd.f32 %v1665, %v1871
      %v1960 = vadd.f32 %v1666, %v1876
      %v1961 = vadd.f32 %v1667, %v1879
      %v1962 = vadd.f32 %v1668, %v1884
      %v1963 = vadd.f32 %v1669, %v1887
      %v1964 = vadd.f32 %v1670, %v1892
      %v1965 = vadd.f32 %v1671, %v1895
      %v1966 = vadd.f32 %v1672, %v1900
      %v1967 = vadd.f32 %v1673, %v1903
      %v1968 = vadd.f32 %v1674, %v1908
      %v1969 = vadd.f32 %v1675, %v1911
      %v1970 = vadd.f32 %v1676, %v1916
      %v1971 = vadd.f32 %v1677, %v1919
      %v1972 = vadd.f32 %v1678, %v1924
      %v1973 = vadd.f32 %v1679, %v1927
      %v1974 = vadd.f32 %v1680, %v1932
      %v1975 = vadd.f32 %v1681, %v1935
      %v1976 = vadd.f32 %v1682, %v1940
      %v1977 = vadd.f32 %v1683, %v1943
      %s1978 = scalar_lea.vmem %s261, 48
      %v1979 = vld [vmem:[%s1978] sm:$0xff]
      %v1980 = vld [vmem:[%s1978 + $0x8] sm:$0xff]
      %v1981 = vld [vmem:[%s1978 + $0x18] sm:$0xff]
      %v1982 = vld [vmem:[%s1978 + $0x20] sm:$0xff]
      %v1983 = vld [vmem:[%s1978 + $0x30] sm:$0xff]
      %v1984 = vld [vmem:[%s1978 + $0x38] sm:$0xff]
      %v1985 = vld [vmem:[%s1978 + $0x48] sm:$0xff]
      %v1986 = vld [vmem:[%s1978 + $0x50] sm:$0xff]
      %v1987 = vld [vmem:[%s1978 + $0x60] sm:$0xff]
      %v1988 = vld [vmem:[%s1978 + $0x68] sm:$0xff]
      %v1989 = vld [vmem:[%s1978 + $0x78] sm:$0xff]
      %v1990 = vld [vmem:[%s1978 + $0x80] sm:$0xff]
      %v1991 = vld [vmem:[%s1978 + $0x90] sm:$0xff]
      %v1992 = vld [vmem:[%s1978 + $0x98] sm:$0xff]
      %v1993 = vld [vmem:[%s1978 + $0xa8] sm:$0xff]
      %v1994 = vld [vmem:[%s1978 + $0xb0] sm:$0xff]
      %v1995 = vld [vmem:[%s1978 + $0xc0] sm:$0xff]
      %v1996 = vld [vmem:[%s1978 + $0xc8] sm:$0xff]
      %v1997 = vld [vmem:[%s1978 + $0xd8] sm:$0xff]
      %v1998 = vld [vmem:[%s1978 + $0xe0] sm:$0xff]
      %v1999 = vld [vmem:[%s1978 + $0xf0] sm:$0xff]
      %v2000 = vld [vmem:[%s1978 + $0xf8] sm:$0xff]
      %v2001 = vld [vmem:[%s1978 + $0x108] sm:$0xff]
      %v2002 = vld [vmem:[%s1978 + $0x110] sm:$0xff]
      %v2003 = vld [vmem:[%s1978 + $0x120] sm:$0xff]
      %v2004 = vld [vmem:[%s1978 + $0x128] sm:$0xff]
      %v2005 = vld [vmem:[%s1978 + $0x138] sm:$0xff]
      %v2006 = vld [vmem:[%s1978 + $0x140] sm:$0xff]
      %v2007 = vld [vmem:[%s1978 + $0x150] sm:$0xff]
      %v2008 = vld [vmem:[%s1978 + $0x158] sm:$0xff]
      %v2009 = vld [vmem:[%s1978 + $0x168] sm:$0xff]
      %v2010 = vld [vmem:[%s1978 + $0x170] sm:$0xff]
      %v2011 = vpack.c.bf16 %v1980, %v1979
      %v2012 = vpack.c.bf16 %v1982, %v1981
      %v2013 = vpack.c.bf16 %v1984, %v1983
      %v2014 = vpack.c.bf16 %v1986, %v1985
      %v2015 = vpack.c.bf16 %v1988, %v1987
      %v2016 = vpack.c.bf16 %v1990, %v1989
      %v2017 = vpack.c.bf16 %v1992, %v1991
      %v2018 = vpack.c.bf16 %v1994, %v1993
      %v2019 = vpack.c.bf16 %v1996, %v1995
      %v2020 = vpack.c.bf16 %v1998, %v1997
      %v2021 = vpack.c.bf16 %v2000, %v1999
      %v2022 = vpack.c.bf16 %v2002, %v2001
      %v2023 = vpack.c.bf16 %v2004, %v2003
      %v2024 = vpack.c.bf16 %v2006, %v2005
      %v2025 = vpack.c.bf16 %v2008, %v2007
      %v2026 = vpack.c.bf16 %v2010, %v2009
      %s2027 = scalar_lea.vmem %s2, 12
      %v2028 = vld [vmem:[%s2027] sm:$0x3]
      %v2030 = vsel %vm372, %v2011, 0
      %v2033 = vsel %vm372, %v2012, 0
      %v2036 = vsel %vm372, %v2013, 0
      %v2039 = vsel %vm372, %v2014, 0
      %v2042 = vsel %vm372, %v2015, 0
      %v2045 = vsel %vm372, %v2016, 0
      %v2048 = vsel %vm372, %v2017, 0
      %v2051 = vsel %vm372, %v2018, 0
      %v2054 = vsel %vm372, %v2019, 0
      %v2057 = vsel %vm372, %v2020, 0
      %v2060 = vsel %vm372, %v2021, 0
      %v2063 = vsel %vm372, %v2022, 0
      %v2066 = vsel %vm372, %v2023, 0
      %v2069 = vsel %vm372, %v2024, 0
      %v2072 = vsel %vm372, %v2025, 0
      %v2075 = vsel %vm372, %v2026, 0
      %v2078 = vand.u32 %v2028, %v424
      %2080 = vmatprep.subr.bf16.mxu0 0
      %2081 = vmatpush1.bf16.msra.mxu0 0
      %2082 = vmatprep.subr.bf16.mxu0 0
      %2083 = vmatpush1.bf16.msra.mxu0 0
      %2084 = vmatprep.subr.bf16.mxu0 0
      %2085 = vmatpush1.bf16.msra.mxu0 0
      %2086 = vmatprep.subr.bf16.mxu0 0
      %2087 = vmatpush1.bf16.msra.mxu0 0
      %2088 = vmatprep.subr.bf16.mxu0 0
      %2089 = vmatpush1.bf16.msra.mxu0 0
      %2090 = vmatprep.subr.bf16.mxu0 0
      %2091 = vmatpush1.bf16.msra.mxu0 0
      %2092 = vmatprep.subr.bf16.mxu0 0
      %2093 = vmatpush1.bf16.msra.mxu0 0
      %2094 = vmatprep.subr.bf16.mxu0 0
      %2095 = vmatpush1.bf16.msra.mxu0 %v2078
      %2096 = vmatprep.subr.bf16.mxu0 0
      %2097 = vmatpush2.bf16.msra.mxu0 0
      %2098 = vmatprep.subr.bf16.mxu0 0
      %2099 = vmatpush2.bf16.msra.mxu0 0
      %2100 = vmatprep.subr.bf16.mxu0 0
      %2101 = vmatpush2.bf16.msra.mxu0 0
      %2102 = vmatprep.subr.bf16.mxu0 0
      %2103 = vmatpush2.bf16.msra.mxu0 0
      %2104 = vmatprep.subr.bf16.mxu0 0
      %2105 = vmatpush2.bf16.msra.mxu0 0
      %2106 = vmatprep.subr.bf16.mxu0 0
      %2107 = vmatpush2.bf16.msra.mxu0 0
      %2108 = vmatprep.subr.bf16.mxu0 0
      %2109 = vmatpush2.bf16.msra.mxu0 0
      %2110 = vmatprep.subr.bf16.mxu0 0
      %2111 = vmatpush2.bf16.msra.mxu0 0
      %2112 = vmatprep.mubr.bf16.mxu0 0
      %2113 = vmatmul.mubr.bf16.gmra.mxu0 %v2030
      %v2114 = vpop.f32.mrf.mxu0
      %v2115 = vadd.f32 0.0, %v2114
      %v2116 = vpop.f32.mrf.mxu0
      %v2117 = vpop.f32.mrf.mxu0
      %v2118 = vadd.f32 0.0, %v2117
      %v2119 = vpop.f32.mrf.mxu0
      %2120 = vmatprep.mubr.bf16.mxu0 0
      %2121 = vmatmul.mubr.bf16.gmra.mxu0 %v2033
      %v2122 = vpop.f32.mrf.mxu0
      %v2123 = vadd.f32 0.0, %v2122
      %v2124 = vpop.f32.mrf.mxu0
      %v2125 = vpop.f32.mrf.mxu0
      %v2126 = vadd.f32 0.0, %v2125
      %v2127 = vpop.f32.mrf.mxu0
      %2128 = vmatprep.mubr.bf16.mxu0 0
      %2129 = vmatmul.mubr.bf16.gmra.mxu0 %v2036
      %v2130 = vpop.f32.mrf.mxu0
      %v2131 = vadd.f32 0.0, %v2130
      %v2132 = vpop.f32.mrf.mxu0
      %v2133 = vpop.f32.mrf.mxu0
      %v2134 = vadd.f32 0.0, %v2133
      %v2135 = vpop.f32.mrf.mxu0
      %2136 = vmatprep.mubr.bf16.mxu0 0
      %2137 = vmatmul.mubr.bf16.gmra.mxu0 %v2039
      %v2138 = vpop.f32.mrf.mxu0
      %v2139 = vadd.f32 0.0, %v2138
      %v2140 = vpop.f32.mrf.mxu0
      %v2141 = vpop.f32.mrf.mxu0
      %v2142 = vadd.f32 0.0, %v2141
      %v2143 = vpop.f32.mrf.mxu0
      %2144 = vmatprep.mubr.bf16.mxu0 0
      %2145 = vmatmul.mubr.bf16.gmra.mxu0 %v2042
      %v2146 = vpop.f32.mrf.mxu0
      %v2147 = vadd.f32 0.0, %v2146
      %v2148 = vpop.f32.mrf.mxu0
      %v2149 = vpop.f32.mrf.mxu0
      %v2150 = vadd.f32 0.0, %v2149
      %v2151 = vpop.f32.mrf.mxu0
      %2152 = vmatprep.mubr.bf16.mxu0 0
      %2153 = vmatmul.mubr.bf16.gmra.mxu0 %v2045
      %v2154 = vpop.f32.mrf.mxu0
      %v2155 = vadd.f32 0.0, %v2154
      %v2156 = vpop.f32.mrf.mxu0
      %v2157 = vpop.f32.mrf.mxu0
      %v2158 = vadd.f32 0.0, %v2157
      %v2159 = vpop.f32.mrf.mxu0
      %2160 = vmatprep.mubr.bf16.mxu0 0
      %2161 = vmatmul.mubr.bf16.gmra.mxu0 %v2048
      %v2162 = vpop.f32.mrf.mxu0
      %v2163 = vadd.f32 0.0, %v2162
      %v2164 = vpop.f32.mrf.mxu0
      %v2165 = vpop.f32.mrf.mxu0
      %v2166 = vadd.f32 0.0, %v2165
      %v2167 = vpop.f32.mrf.mxu0
      %2168 = vmatprep.mubr.bf16.mxu0 0
      %2169 = vmatmul.mubr.bf16.gmra.mxu0 %v2051
      %v2170 = vpop.f32.mrf.mxu0
      %v2171 = vadd.f32 0.0, %v2170
      %v2172 = vpop.f32.mrf.mxu0
      %v2173 = vpop.f32.mrf.mxu0
      %v2174 = vadd.f32 0.0, %v2173
      %v2175 = vpop.f32.mrf.mxu0
      %2176 = vmatprep.mubr.bf16.mxu0 0
      %2177 = vmatmul.mubr.bf16.gmra.mxu0 %v2054
      %v2178 = vpop.f32.mrf.mxu0
      %v2179 = vadd.f32 0.0, %v2178
      %v2180 = vpop.f32.mrf.mxu0
      %v2181 = vpop.f32.mrf.mxu0
      %v2182 = vadd.f32 0.0, %v2181
      %v2183 = vpop.f32.mrf.mxu0
      %2184 = vmatprep.mubr.bf16.mxu0 0
      %2185 = vmatmul.mubr.bf16.gmra.mxu0 %v2057
      %v2186 = vpop.f32.mrf.mxu0
      %v2187 = vadd.f32 0.0, %v2186
      %v2188 = vpop.f32.mrf.mxu0
      %v2189 = vpop.f32.mrf.mxu0
      %v2190 = vadd.f32 0.0, %v2189
      %v2191 = vpop.f32.mrf.mxu0
      %2192 = vmatprep.mubr.bf16.mxu0 0
      %2193 = vmatmul.mubr.bf16.gmra.mxu0 %v2060
      %v2194 = vpop.f32.mrf.mxu0
      %v2195 = vadd.f32 0.0, %v2194
      %v2196 = vpop.f32.mrf.mxu0
      %v2197 = vpop.f32.mrf.mxu0
      %v2198 = vadd.f32 0.0, %v2197
      %v2199 = vpop.f32.mrf.mxu0
      %2200 = vmatprep.mubr.bf16.mxu0 0
      %2201 = vmatmul.mubr.bf16.gmra.mxu0 %v2063
      %v2202 = vpop.f32.mrf.mxu0
      %v2203 = vadd.f32 0.0, %v2202
      %v2204 = vpop.f32.mrf.mxu0
      %v2205 = vpop.f32.mrf.mxu0
      %v2206 = vadd.f32 0.0, %v2205
      %v2207 = vpop.f32.mrf.mxu0
      %2208 = vmatprep.mubr.bf16.mxu0 0
      %2209 = vmatmul.mubr.bf16.gmra.mxu0 %v2066
      %v2210 = vpop.f32.mrf.mxu0
      %v2211 = vadd.f32 0.0, %v2210
      %v2212 = vpop.f32.mrf.mxu0
      %v2213 = vpop.f32.mrf.mxu0
      %v2214 = vadd.f32 0.0, %v2213
      %v2215 = vpop.f32.mrf.mxu0
      %2216 = vmatprep.mubr.bf16.mxu0 0
      %2217 = vmatmul.mubr.bf16.gmra.mxu0 %v2069
      %v2218 = vpop.f32.mrf.mxu0
      %v2219 = vadd.f32 0.0, %v2218
      %v2220 = vpop.f32.mrf.mxu0
      %v2221 = vpop.f32.mrf.mxu0
      %v2222 = vadd.f32 0.0, %v2221
      %v2223 = vpop.f32.mrf.mxu0
      %2224 = vmatprep.mubr.bf16.mxu0 0
      %2225 = vmatmul.mubr.bf16.gmra.mxu0 %v2072
      %v2226 = vpop.f32.mrf.mxu0
      %v2227 = vadd.f32 0.0, %v2226
      %v2228 = vpop.f32.mrf.mxu0
      %v2229 = vpop.f32.mrf.mxu0
      %v2230 = vadd.f32 0.0, %v2229
      %v2231 = vpop.f32.mrf.mxu0
      %2232 = vmatprep.mubr.bf16.mxu0 0
      %2233 = vmatmul.mubr.bf16.gmra.mxu0 %v2075
      %v2234 = vpop.f32.mrf.mxu0
      %v2235 = vadd.f32 0.0, %v2234
      %v2236 = vpop.f32.mrf.mxu0
      %v2237 = vpop.f32.mrf.mxu0
      %v2238 = vadd.f32 0.0, %v2237
      %v2239 = vpop.f32.mrf.mxu0
      %2240 = vdwg.mxu0
      %v2241 = vadd.f32 %v1946, %v2115
      %v2242 = vadd.f32 %v1947, %v2118
      %v2243 = vadd.f32 %v1948, %v2123
      %v2244 = vadd.f32 %v1949, %v2126
      %v2245 = vadd.f32 %v1950, %v2131
      %v2246 = vadd.f32 %v1951, %v2134
      %v2247 = vadd.f32 %v1952, %v2139
      %v2248 = vadd.f32 %v1953, %v2142
      %v2249 = vadd.f32 %v1954, %v2147
      %v2250 = vadd.f32 %v1955, %v2150
      %v2251 = vadd.f32 %v1956, %v2155
      %v2252 = vadd.f32 %v1957, %v2158
      %v2253 = vadd.f32 %v1958, %v2163
      %v2254 = vadd.f32 %v1959, %v2166
      %v2255 = vadd.f32 %v1960, %v2171
      %v2256 = vadd.f32 %v1961, %v2174
      %v2257 = vadd.f32 %v1962, %v2179
      %v2258 = vadd.f32 %v1963, %v2182
      %v2259 = vadd.f32 %v1964, %v2187
      %v2260 = vadd.f32 %v1965, %v2190
      %v2261 = vadd.f32 %v1966, %v2195
      %v2262 = vadd.f32 %v1967, %v2198
      %v2263 = vadd.f32 %v1968, %v2203
      %v2264 = vadd.f32 %v1969, %v2206
      %v2265 = vadd.f32 %v1970, %v2211
      %v2266 = vadd.f32 %v1971, %v2214
      %v2267 = vadd.f32 %v1972, %v2219
      %v2268 = vadd.f32 %v1973, %v2222
      %v2269 = vadd.f32 %v1974, %v2227
      %v2270 = vadd.f32 %v1975, %v2230
      %v2271 = vadd.f32 %v1976, %v2235
      %v2272 = vadd.f32 %v1977, %v2238
      %v2273 = vld [vmem:[%s1978 + $0x1] sm:$0xff]
      %v2274 = vld [vmem:[%s1978 + $0x9] sm:$0xff]
      %v2275 = vld [vmem:[%s1978 + $0x19] sm:$0xff]
      %v2276 = vld [vmem:[%s1978 + $0x21] sm:$0xff]
      %v2277 = vld [vmem:[%s1978 + $0x31] sm:$0xff]
      %v2278 = vld [vmem:[%s1978 + $0x39] sm:$0xff]
      %v2279 = vld [vmem:[%s1978 + $0x49] sm:$0xff]
      %v2280 = vld [vmem:[%s1978 + $0x51] sm:$0xff]
      %v2281 = vld [vmem:[%s1978 + $0x61] sm:$0xff]
      %v2282 = vld [vmem:[%s1978 + $0x69] sm:$0xff]
      %v2283 = vld [vmem:[%s1978 + $0x79] sm:$0xff]
      %v2284 = vld [vmem:[%s1978 + $0x81] sm:$0xff]
      %v2285 = vld [vmem:[%s1978 + $0x91] sm:$0xff]
      %v2286 = vld [vmem:[%s1978 + $0x99] sm:$0xff]
      %v2287 = vld [vmem:[%s1978 + $0xa9] sm:$0xff]
      %v2288 = vld [vmem:[%s1978 + $0xb1] sm:$0xff]
      %v2289 = vld [vmem:[%s1978 + $0xc1] sm:$0xff]
      %v2290 = vld [vmem:[%s1978 + $0xc9] sm:$0xff]
      %v2291 = vld [vmem:[%s1978 + $0xd9] sm:$0xff]
      %v2292 = vld [vmem:[%s1978 + $0xe1] sm:$0xff]
      %v2293 = vld [vmem:[%s1978 + $0xf1] sm:$0xff]
      %v2294 = vld [vmem:[%s1978 + $0xf9] sm:$0xff]
      %v2295 = vld [vmem:[%s1978 + $0x109] sm:$0xff]
      %v2296 = vld [vmem:[%s1978 + $0x111] sm:$0xff]
      %v2297 = vld [vmem:[%s1978 + $0x121] sm:$0xff]
      %v2298 = vld [vmem:[%s1978 + $0x129] sm:$0xff]
      %v2299 = vld [vmem:[%s1978 + $0x139] sm:$0xff]
      %v2300 = vld [vmem:[%s1978 + $0x141] sm:$0xff]
      %v2301 = vld [vmem:[%s1978 + $0x151] sm:$0xff]
      %v2302 = vld [vmem:[%s1978 + $0x159] sm:$0xff]
      %v2303 = vld [vmem:[%s1978 + $0x169] sm:$0xff]
      %v2304 = vld [vmem:[%s1978 + $0x171] sm:$0xff]
      %v2305 = vpack.c.bf16 %v2274, %v2273
      %v2306 = vpack.c.bf16 %v2276, %v2275
      %v2307 = vpack.c.bf16 %v2278, %v2277
      %v2308 = vpack.c.bf16 %v2280, %v2279
      %v2309 = vpack.c.bf16 %v2282, %v2281
      %v2310 = vpack.c.bf16 %v2284, %v2283
      %v2311 = vpack.c.bf16 %v2286, %v2285
      %v2312 = vpack.c.bf16 %v2288, %v2287
      %v2313 = vpack.c.bf16 %v2290, %v2289
      %v2314 = vpack.c.bf16 %v2292, %v2291
      %v2315 = vpack.c.bf16 %v2294, %v2293
      %v2316 = vpack.c.bf16 %v2296, %v2295
      %v2317 = vpack.c.bf16 %v2298, %v2297
      %v2318 = vpack.c.bf16 %v2300, %v2299
      %v2319 = vpack.c.bf16 %v2302, %v2301
      %v2320 = vpack.c.bf16 %v2304, %v2303
      %s2321 = scalar_lea.vmem %s2, 14
      %v2322 = vld [vmem:[%s2321] sm:$0x3]
      %v2324 = vsel %vm372, %v2305, 0
      %v2327 = vsel %vm372, %v2306, 0
      %v2330 = vsel %vm372, %v2307, 0
      %v2333 = vsel %vm372, %v2308, 0
      %v2336 = vsel %vm372, %v2309, 0
      %v2339 = vsel %vm372, %v2310, 0
      %v2342 = vsel %vm372, %v2311, 0
      %v2345 = vsel %vm372, %v2312, 0
      %v2348 = vsel %vm372, %v2313, 0
      %v2351 = vsel %vm372, %v2314, 0
      %v2354 = vsel %vm372, %v2315, 0
      %v2357 = vsel %vm372, %v2316, 0
      %v2360 = vsel %vm372, %v2317, 0
      %v2363 = vsel %vm372, %v2318, 0
      %v2366 = vsel %vm372, %v2319, 0
      %v2369 = vsel %vm372, %v2320, 0
      %v2372 = vand.u32 %v2322, %v424
      %2374 = vmatprep.subr.bf16.mxu0 0
      %2375 = vmatpush1.bf16.msra.mxu0 0
      %2376 = vmatprep.subr.bf16.mxu0 0
      %2377 = vmatpush1.bf16.msra.mxu0 0
      %2378 = vmatprep.subr.bf16.mxu0 0
      %2379 = vmatpush1.bf16.msra.mxu0 0
      %2380 = vmatprep.subr.bf16.mxu0 0
      %2381 = vmatpush1.bf16.msra.mxu0 0
      %2382 = vmatprep.subr.bf16.mxu0 0
      %2383 = vmatpush1.bf16.msra.mxu0 0
      %2384 = vmatprep.subr.bf16.mxu0 0
      %2385 = vmatpush1.bf16.msra.mxu0 0
      %2386 = vmatprep.subr.bf16.mxu0 0
      %2387 = vmatpush1.bf16.msra.mxu0 0
      %2388 = vmatprep.subr.bf16.mxu0 0
      %2389 = vmatpush1.bf16.msra.mxu0 %v2372
      %2390 = vmatprep.subr.bf16.mxu0 0
      %2391 = vmatpush2.bf16.msra.mxu0 0
      %2392 = vmatprep.subr.bf16.mxu0 0
      %2393 = vmatpush2.bf16.msra.mxu0 0
      %2394 = vmatprep.subr.bf16.mxu0 0
      %2395 = vmatpush2.bf16.msra.mxu0 0
      %2396 = vmatprep.subr.bf16.mxu0 0
      %2397 = vmatpush2.bf16.msra.mxu0 0
      %2398 = vmatprep.subr.bf16.mxu0 0
      %2399 = vmatpush2.bf16.msra.mxu0 0
      %2400 = vmatprep.subr.bf16.mxu0 0
      %2401 = vmatpush2.bf16.msra.mxu0 0
      %2402 = vmatprep.subr.bf16.mxu0 0
      %2403 = vmatpush2.bf16.msra.mxu0 0
      %2404 = vmatprep.subr.bf16.mxu0 0
      %2405 = vmatpush2.bf16.msra.mxu0 0
      %2406 = vmatprep.mubr.bf16.mxu0 0
      %2407 = vmatmul.mubr.bf16.gmra.mxu0 %v2324
      %v2408 = vpop.f32.mrf.mxu0
      %v2409 = vadd.f32 0.0, %v2408
      %v2410 = vpop.f32.mrf.mxu0
      %v2411 = vpop.f32.mrf.mxu0
      %v2412 = vadd.f32 0.0, %v2411
      %v2413 = vpop.f32.mrf.mxu0
      %2414 = vmatprep.mubr.bf16.mxu0 0
      %2415 = vmatmul.mubr.bf16.gmra.mxu0 %v2327
      %v2416 = vpop.f32.mrf.mxu0
      %v2417 = vadd.f32 0.0, %v2416
      %v2418 = vpop.f32.mrf.mxu0
      %v2419 = vpop.f32.mrf.mxu0
      %v2420 = vadd.f32 0.0, %v2419
      %v2421 = vpop.f32.mrf.mxu0
      %2422 = vmatprep.mubr.bf16.mxu0 0
      %2423 = vmatmul.mubr.bf16.gmra.mxu0 %v2330
      %v2424 = vpop.f32.mrf.mxu0
      %v2425 = vadd.f32 0.0, %v2424
      %v2426 = vpop.f32.mrf.mxu0
      %v2427 = vpop.f32.mrf.mxu0
      %v2428 = vadd.f32 0.0, %v2427
      %v2429 = vpop.f32.mrf.mxu0
      %2430 = vmatprep.mubr.bf16.mxu0 0
      %2431 = vmatmul.mubr.bf16.gmra.mxu0 %v2333
      %v2432 = vpop.f32.mrf.mxu0
      %v2433 = vadd.f32 0.0, %v2432
      %v2434 = vpop.f32.mrf.mxu0
      %v2435 = vpop.f32.mrf.mxu0
      %v2436 = vadd.f32 0.0, %v2435
      %v2437 = vpop.f32.mrf.mxu0
      %2438 = vmatprep.mubr.bf16.mxu0 0
      %2439 = vmatmul.mubr.bf16.gmra.mxu0 %v2336
      %v2440 = vpop.f32.mrf.mxu0
      %v2441 = vadd.f32 0.0, %v2440
      %v2442 = vpop.f32.mrf.mxu0
      %v2443 = vpop.f32.mrf.mxu0
      %v2444 = vadd.f32 0.0, %v2443
      %v2445 = vpop.f32.mrf.mxu0
      %2446 = vmatprep.mubr.bf16.mxu0 0
      %2447 = vmatmul.mubr.bf16.gmra.mxu0 %v2339
      %v2448 = vpop.f32.mrf.mxu0
      %v2449 = vadd.f32 0.0, %v2448
      %v2450 = vpop.f32.mrf.mxu0
      %v2451 = vpop.f32.mrf.mxu0
      %v2452 = vadd.f32 0.0, %v2451
      %v2453 = vpop.f32.mrf.mxu0
      %2454 = vmatprep.mubr.bf16.mxu0 0
      %2455 = vmatmul.mubr.bf16.gmra.mxu0 %v2342
      %v2456 = vpop.f32.mrf.mxu0
      %v2457 = vadd.f32 0.0, %v2456
      %v2458 = vpop.f32.mrf.mxu0
      %v2459 = vpop.f32.mrf.mxu0
      %v2460 = vadd.f32 0.0, %v2459
      %v2461 = vpop.f32.mrf.mxu0
      %2462 = vmatprep.mubr.bf16.mxu0 0
      %2463 = vmatmul.mubr.bf16.gmra.mxu0 %v2345
      %v2464 = vpop.f32.mrf.mxu0
      %v2465 = vadd.f32 0.0, %v2464
      %v2466 = vpop.f32.mrf.mxu0
      %v2467 = vpop.f32.mrf.mxu0
      %v2468 = vadd.f32 0.0, %v2467
      %v2469 = vpop.f32.mrf.mxu0
      %2470 = vmatprep.mubr.bf16.mxu0 0
      %2471 = vmatmul.mubr.bf16.gmra.mxu0 %v2348
      %v2472 = vpop.f32.mrf.mxu0
      %v2473 = vadd.f32 0.0, %v2472
      %v2474 = vpop.f32.mrf.mxu0
      %v2475 = vpop.f32.mrf.mxu0
      %v2476 = vadd.f32 0.0, %v2475
      %v2477 = vpop.f32.mrf.mxu0
      %2478 = vmatprep.mubr.bf16.mxu0 0
      %2479 = vmatmul.mubr.bf16.gmra.mxu0 %v2351
      %v2480 = vpop.f32.mrf.mxu0
      %v2481 = vadd.f32 0.0, %v2480
      %v2482 = vpop.f32.mrf.mxu0
      %v2483 = vpop.f32.mrf.mxu0
      %v2484 = vadd.f32 0.0, %v2483
      %v2485 = vpop.f32.mrf.mxu0
      %2486 = vmatprep.mubr.bf16.mxu0 0
      %2487 = vmatmul.mubr.bf16.gmra.mxu0 %v2354
      %v2488 = vpop.f32.mrf.mxu0
      %v2489 = vadd.f32 0.0, %v2488
      %v2490 = vpop.f32.mrf.mxu0
      %v2491 = vpop.f32.mrf.mxu0
      %v2492 = vadd.f32 0.0, %v2491
      %v2493 = vpop.f32.mrf.mxu0
      %2494 = vmatprep.mubr.bf16.mxu0 0
      %2495 = vmatmul.mubr.bf16.gmra.mxu0 %v2357
      %v2496 = vpop.f32.mrf.mxu0
      %v2497 = vadd.f32 0.0, %v2496
      %v2498 = vpop.f32.mrf.mxu0
      %v2499 = vpop.f32.mrf.mxu0
      %v2500 = vadd.f32 0.0, %v2499
      %v2501 = vpop.f32.mrf.mxu0
      %2502 = vmatprep.mubr.bf16.mxu0 0
      %2503 = vmatmul.mubr.bf16.gmra.mxu0 %v2360
      %v2504 = vpop.f32.mrf.mxu0
      %v2505 = vadd.f32 0.0, %v2504
      %v2506 = vpop.f32.mrf.mxu0
      %v2507 = vpop.f32.mrf.mxu0
      %v2508 = vadd.f32 0.0, %v2507
      %v2509 = vpop.f32.mrf.mxu0
      %2510 = vmatprep.mubr.bf16.mxu0 0
      %2511 = vmatmul.mubr.bf16.gmra.mxu0 %v2363
      %v2512 = vpop.f32.mrf.mxu0
      %v2513 = vadd.f32 0.0, %v2512
      %v2514 = vpop.f32.mrf.mxu0
      %v2515 = vpop.f32.mrf.mxu0
      %v2516 = vadd.f32 0.0, %v2515
      %v2517 = vpop.f32.mrf.mxu0
      %2518 = vmatprep.mubr.bf16.mxu0 0
      %2519 = vmatmul.mubr.bf16.gmra.mxu0 %v2366
      %v2520 = vpop.f32.mrf.mxu0
      %v2521 = vadd.f32 0.0, %v2520
      %v2522 = vpop.f32.mrf.mxu0
      %v2523 = vpop.f32.mrf.mxu0
      %v2524 = vadd.f32 0.0, %v2523
      %v2525 = vpop.f32.mrf.mxu0
      %2526 = vmatprep.mubr.bf16.mxu0 0
      %2527 = vmatmul.mubr.bf16.gmra.mxu0 %v2369
      %v2528 = vpop.f32.mrf.mxu0
      %v2529 = vadd.f32 0.0, %v2528
      %v2530 = vpop.f32.mrf.mxu0
      %v2531 = vpop.f32.mrf.mxu0
      %v2532 = vadd.f32 0.0, %v2531
      %v2533 = vpop.f32.mrf.mxu0
      %2534 = vdwg.mxu0
      %v2535 = vadd.f32 %v2241, %v2409
      %v2536 = vadd.f32 %v2242, %v2412
      %v2537 = vadd.f32 %v2243, %v2417
      %v2538 = vadd.f32 %v2244, %v2420
      %v2539 = vadd.f32 %v2245, %v2425
      %v2540 = vadd.f32 %v2246, %v2428
      %v2541 = vadd.f32 %v2247, %v2433
      %v2542 = vadd.f32 %v2248, %v2436
      %v2543 = vadd.f32 %v2249, %v2441
      %v2544 = vadd.f32 %v2250, %v2444
      %v2545 = vadd.f32 %v2251, %v2449
      %v2546 = vadd.f32 %v2252, %v2452
      %v2547 = vadd.f32 %v2253, %v2457
      %v2548 = vadd.f32 %v2254, %v2460
      %v2549 = vadd.f32 %v2255, %v2465
      %v2550 = vadd.f32 %v2256, %v2468
      %v2551 = vadd.f32 %v2257, %v2473
      %v2552 = vadd.f32 %v2258, %v2476
      %v2553 = vadd.f32 %v2259, %v2481
      %v2554 = vadd.f32 %v2260, %v2484
      %v2555 = vadd.f32 %v2261, %v2489
      %v2556 = vadd.f32 %v2262, %v2492
      %v2557 = vadd.f32 %v2263, %v2497
      %v2558 = vadd.f32 %v2264, %v2500
      %v2559 = vadd.f32 %v2265, %v2505
      %v2560 = vadd.f32 %v2266, %v2508
      %v2561 = vadd.f32 %v2267, %v2513
      %v2562 = vadd.f32 %v2268, %v2516
      %v2563 = vadd.f32 %v2269, %v2521
      %v2564 = vadd.f32 %v2270, %v2524
      %v2565 = vadd.f32 %v2271, %v2529
      %v2566 = vadd.f32 %v2272, %v2532
      %v2567 = vld [vmem:[%s1978 + $0x2] sm:$0xff]
      %v2568 = vld [vmem:[%s1978 + $0xa] sm:$0xff]
      %v2569 = vld [vmem:[%s1978 + $0x1a] sm:$0xff]
      %v2570 = vld [vmem:[%s1978 + $0x22] sm:$0xff]
      %v2571 = vld [vmem:[%s1978 + $0x32] sm:$0xff]
      %v2572 = vld [vmem:[%s1978 + $0x3a] sm:$0xff]
      %v2573 = vld [vmem:[%s1978 + $0x4a] sm:$0xff]
      %v2574 = vld [vmem:[%s1978 + $0x52] sm:$0xff]
      %v2575 = vld [vmem:[%s1978 + $0x62] sm:$0xff]
      %v2576 = vld [vmem:[%s1978 + $0x6a] sm:$0xff]
      %v2577 = vld [vmem:[%s1978 + $0x7a] sm:$0xff]
      %v2578 = vld [vmem:[%s1978 + $0x82] sm:$0xff]
      %v2579 = vld [vmem:[%s1978 + $0x92] sm:$0xff]
      %v2580 = vld [vmem:[%s1978 + $0x9a] sm:$0xff]
      %v2581 = vld [vmem:[%s1978 + $0xaa] sm:$0xff]
      %v2582 = vld [vmem:[%s1978 + $0xb2] sm:$0xff]
      %v2583 = vld [vmem:[%s1978 + $0xc2] sm:$0xff]
      %v2584 = vld [vmem:[%s1978 + $0xca] sm:$0xff]
      %v2585 = vld [vmem:[%s1978 + $0xda] sm:$0xff]
      %v2586 = vld [vmem:[%s1978 + $0xe2] sm:$0xff]
      %v2587 = vld [vmem:[%s1978 + $0xf2] sm:$0xff]
      %v2588 = vld [vmem:[%s1978 + $0xfa] sm:$0xff]
      %v2589 = vld [vmem:[%s1978 + $0x10a] sm:$0xff]
      %v2590 = vld [vmem:[%s1978 + $0x112] sm:$0xff]
      %v2591 = vld [vmem:[%s1978 + $0x122] sm:$0xff]
      %v2592 = vld [vmem:[%s1978 + $0x12a] sm:$0xff]
      %v2593 = vld [vmem:[%s1978 + $0x13a] sm:$0xff]
      %v2594 = vld [vmem:[%s1978 + $0x142] sm:$0xff]
      %v2595 = vld [vmem:[%s1978 + $0x152] sm:$0xff]
      %v2596 = vld [vmem:[%s1978 + $0x15a] sm:$0xff]
      %v2597 = vld [vmem:[%s1978 + $0x16a] sm:$0xff]
      %v2598 = vld [vmem:[%s1978 + $0x172] sm:$0xff]
      %v2599 = vpack.c.bf16 %v2568, %v2567
      %v2600 = vpack.c.bf16 %v2570, %v2569
      %v2601 = vpack.c.bf16 %v2572, %v2571
      %v2602 = vpack.c.bf16 %v2574, %v2573
      %v2603 = vpack.c.bf16 %v2576, %v2575
      %v2604 = vpack.c.bf16 %v2578, %v2577
      %v2605 = vpack.c.bf16 %v2580, %v2579
      %v2606 = vpack.c.bf16 %v2582, %v2581
      %v2607 = vpack.c.bf16 %v2584, %v2583
      %v2608 = vpack.c.bf16 %v2586, %v2585
      %v2609 = vpack.c.bf16 %v2588, %v2587
      %v2610 = vpack.c.bf16 %v2590, %v2589
      %v2611 = vpack.c.bf16 %v2592, %v2591
      %v2612 = vpack.c.bf16 %v2594, %v2593
      %v2613 = vpack.c.bf16 %v2596, %v2595
      %v2614 = vpack.c.bf16 %v2598, %v2597
      %s2615 = scalar_lea.vmem %s2, 16
      %v2616 = vld [vmem:[%s2615] sm:$0x3]
      %v2618 = vsel %vm372, %v2599, 0
      %v2621 = vsel %vm372, %v2600, 0
      %v2624 = vsel %vm372, %v2601, 0
      %v2627 = vsel %vm372, %v2602, 0
      %v2630 = vsel %vm372, %v2603, 0
      %v2633 = vsel %vm372, %v2604, 0
      %v2636 = vsel %vm372, %v2605, 0
      %v2639 = vsel %vm372, %v2606, 0
      %v2642 = vsel %vm372, %v2607, 0
      %v2645 = vsel %vm372, %v2608, 0
      %v2648 = vsel %vm372, %v2609, 0
      %v2651 = vsel %vm372, %v2610, 0
      %v2654 = vsel %vm372, %v2611, 0
      %v2657 = vsel %vm372, %v2612, 0
      %v2660 = vsel %vm372, %v2613, 0
      %v2663 = vsel %vm372, %v2614, 0
      %v2666 = vand.u32 %v2616, %v424
      %2668 = vmatprep.subr.bf16.mxu0 0
      %2669 = vmatpush1.bf16.msra.mxu0 0
      %2670 = vmatprep.subr.bf16.mxu0 0
      %2671 = vmatpush1.bf16.msra.mxu0 0
      %2672 = vmatprep.subr.bf16.mxu0 0
      %2673 = vmatpush1.bf16.msra.mxu0 0
      %2674 = vmatprep.subr.bf16.mxu0 0
      %2675 = vmatpush1.bf16.msra.mxu0 0
      %2676 = vmatprep.subr.bf16.mxu0 0
      %2677 = vmatpush1.bf16.msra.mxu0 0
      %2678 = vmatprep.subr.bf16.mxu0 0
      %2679 = vmatpush1.bf16.msra.mxu0 0
      %2680 = vmatprep.subr.bf16.mxu0 0
      %2681 = vmatpush1.bf16.msra.mxu0 0
      %2682 = vmatprep.subr.bf16.mxu0 0
      %2683 = vmatpush1.bf16.msra.mxu0 %v2666
      %2684 = vmatprep.subr.bf16.mxu0 0
      %2685 = vmatpush2.bf16.msra.mxu0 0
      %2686 = vmatprep.subr.bf16.mxu0 0
      %2687 = vmatpush2.bf16.msra.mxu0 0
      %2688 = vmatprep.subr.bf16.mxu0 0
      %2689 = vmatpush2.bf16.msra.mxu0 0
      %2690 = vmatprep.subr.bf16.mxu0 0
      %2691 = vmatpush2.bf16.msra.mxu0 0
      %2692 = vmatprep.subr.bf16.mxu0 0
      %2693 = vmatpush2.bf16.msra.mxu0 0
      %2694 = vmatprep.subr.bf16.mxu0 0
      %2695 = vmatpush2.bf16.msra.mxu0 0
      %2696 = vmatprep.subr.bf16.mxu0 0
      %2697 = vmatpush2.bf16.msra.mxu0 0
      %2698 = vmatprep.subr.bf16.mxu0 0
      %2699 = vmatpush2.bf16.msra.mxu0 0
      %2700 = vmatprep.mubr.bf16.mxu0 0
      %2701 = vmatmul.mubr.bf16.gmra.mxu0 %v2618
      %v2702 = vpop.f32.mrf.mxu0
      %v2703 = vadd.f32 0.0, %v2702
      %v2704 = vpop.f32.mrf.mxu0
      %v2705 = vpop.f32.mrf.mxu0
      %v2706 = vadd.f32 0.0, %v2705
      %v2707 = vpop.f32.mrf.mxu0
      %2708 = vmatprep.mubr.bf16.mxu0 0
      %2709 = vmatmul.mubr.bf16.gmra.mxu0 %v2621
      %v2710 = vpop.f32.mrf.mxu0
      %v2711 = vadd.f32 0.0, %v2710
      %v2712 = vpop.f32.mrf.mxu0
      %v2713 = vpop.f32.mrf.mxu0
      %v2714 = vadd.f32 0.0, %v2713
      %v2715 = vpop.f32.mrf.mxu0
      %2716 = vmatprep.mubr.bf16.mxu0 0
      %2717 = vmatmul.mubr.bf16.gmra.mxu0 %v2624
      %v2718 = vpop.f32.mrf.mxu0
      %v2719 = vadd.f32 0.0, %v2718
      %v2720 = vpop.f32.mrf.mxu0
      %v2721 = vpop.f32.mrf.mxu0
      %v2722 = vadd.f32 0.0, %v2721
      %v2723 = vpop.f32.mrf.mxu0
      %2724 = vmatprep.mubr.bf16.mxu0 0
      %2725 = vmatmul.mubr.bf16.gmra.mxu0 %v2627
      %v2726 = vpop.f32.mrf.mxu0
      %v2727 = vadd.f32 0.0, %v2726
      %v2728 = vpop.f32.mrf.mxu0
      %v2729 = vpop.f32.mrf.mxu0
      %v2730 = vadd.f32 0.0, %v2729
      %v2731 = vpop.f32.mrf.mxu0
      %2732 = vmatprep.mubr.bf16.mxu0 0
      %2733 = vmatmul.mubr.bf16.gmra.mxu0 %v2630
      %v2734 = vpop.f32.mrf.mxu0
      %v2735 = vadd.f32 0.0, %v2734
      %v2736 = vpop.f32.mrf.mxu0
      %v2737 = vpop.f32.mrf.mxu0
      %v2738 = vadd.f32 0.0, %v2737
      %v2739 = vpop.f32.mrf.mxu0
      %2740 = vmatprep.mubr.bf16.mxu0 0
      %2741 = vmatmul.mubr.bf16.gmra.mxu0 %v2633
      %v2742 = vpop.f32.mrf.mxu0
      %v2743 = vadd.f32 0.0, %v2742
      %v2744 = vpop.f32.mrf.mxu0
      %v2745 = vpop.f32.mrf.mxu0
      %v2746 = vadd.f32 0.0, %v2745
      %v2747 = vpop.f32.mrf.mxu0
      %2748 = vmatprep.mubr.bf16.mxu0 0
      %2749 = vmatmul.mubr.bf16.gmra.mxu0 %v2636
      %v2750 = vpop.f32.mrf.mxu0
      %v2751 = vadd.f32 0.0, %v2750
      %v2752 = vpop.f32.mrf.mxu0
      %v2753 = vpop.f32.mrf.mxu0
      %v2754 = vadd.f32 0.0, %v2753
      %v2755 = vpop.f32.mrf.mxu0
      %2756 = vmatprep.mubr.bf16.mxu0 0
      %2757 = vmatmul.mubr.bf16.gmra.mxu0 %v2639
      %v2758 = vpop.f32.mrf.mxu0
      %v2759 = vadd.f32 0.0, %v2758
      %v2760 = vpop.f32.mrf.mxu0
      %v2761 = vpop.f32.mrf.mxu0
      %v2762 = vadd.f32 0.0, %v2761
      %v2763 = vpop.f32.mrf.mxu0
      %2764 = vmatprep.mubr.bf16.mxu0 0
      %2765 = vmatmul.mubr.bf16.gmra.mxu0 %v2642
      %v2766 = vpop.f32.mrf.mxu0
      %v2767 = vadd.f32 0.0, %v2766
      %v2768 = vpop.f32.mrf.mxu0
      %v2769 = vpop.f32.mrf.mxu0
      %v2770 = vadd.f32 0.0, %v2769
      %v2771 = vpop.f32.mrf.mxu0
      %2772 = vmatprep.mubr.bf16.mxu0 0
      %2773 = vmatmul.mubr.bf16.gmra.mxu0 %v2645
      %v2774 = vpop.f32.mrf.mxu0
      %v2775 = vadd.f32 0.0, %v2774
      %v2776 = vpop.f32.mrf.mxu0
      %v2777 = vpop.f32.mrf.mxu0
      %v2778 = vadd.f32 0.0, %v2777
      %v2779 = vpop.f32.mrf.mxu0
      %2780 = vmatprep.mubr.bf16.mxu0 0
      %2781 = vmatmul.mubr.bf16.gmra.mxu0 %v2648
      %v2782 = vpop.f32.mrf.mxu0
      %v2783 = vadd.f32 0.0, %v2782
      %v2784 = vpop.f32.mrf.mxu0
      %v2785 = vpop.f32.mrf.mxu0
      %v2786 = vadd.f32 0.0, %v2785
      %v2787 = vpop.f32.mrf.mxu0
      %2788 = vmatprep.mubr.bf16.mxu0 0
      %2789 = vmatmul.mubr.bf16.gmra.mxu0 %v2651
      %v2790 = vpop.f32.mrf.mxu0
      %v2791 = vadd.f32 0.0, %v2790
      %v2792 = vpop.f32.mrf.mxu0
      %v2793 = vpop.f32.mrf.mxu0
      %v2794 = vadd.f32 0.0, %v2793
      %v2795 = vpop.f32.mrf.mxu0
      %2796 = vmatprep.mubr.bf16.mxu0 0
      %2797 = vmatmul.mubr.bf16.gmra.mxu0 %v2654
      %v2798 = vpop.f32.mrf.mxu0
      %v2799 = vadd.f32 0.0, %v2798
      %v2800 = vpop.f32.mrf.mxu0
      %v2801 = vpop.f32.mrf.mxu0
      %v2802 = vadd.f32 0.0, %v2801
      %v2803 = vpop.f32.mrf.mxu0
      %2804 = vmatprep.mubr.bf16.mxu0 0
      %2805 = vmatmul.mubr.bf16.gmra.mxu0 %v2657
      %v2806 = vpop.f32.mrf.mxu0
      %v2807 = vadd.f32 0.0, %v2806
      %v2808 = vpop.f32.mrf.mxu0
      %v2809 = vpop.f32.mrf.mxu0
      %v2810 = vadd.f32 0.0, %v2809
      %v2811 = vpop.f32.mrf.mxu0
      %2812 = vmatprep.mubr.bf16.mxu0 0
      %2813 = vmatmul.mubr.bf16.gmra.mxu0 %v2660
      %v2814 = vpop.f32.mrf.mxu0
      %v2815 = vadd.f32 0.0, %v2814
      %v2816 = vpop.f32.mrf.mxu0
      %v2817 = vpop.f32.mrf.mxu0
      %v2818 = vadd.f32 0.0, %v2817
      %v2819 = vpop.f32.mrf.mxu0
      %2820 = vmatprep.mubr.bf16.mxu0 0
      %2821 = vmatmul.mubr.bf16.gmra.mxu0 %v2663
      %v2822 = vpop.f32.mrf.mxu0
      %v2823 = vadd.f32 0.0, %v2822
      %v2824 = vpop.f32.mrf.mxu0
      %v2825 = vpop.f32.mrf.mxu0
      %v2826 = vadd.f32 0.0, %v2825
      %v2827 = vpop.f32.mrf.mxu0
      %2828 = vdwg.mxu0
      %v2829 = vadd.f32 %v2535, %v2703
      %v2830 = vadd.f32 %v2536, %v2706
      %v2831 = vadd.f32 %v2537, %v2711
      %v2832 = vadd.f32 %v2538, %v2714
      %v2833 = vadd.f32 %v2539, %v2719
      %v2834 = vadd.f32 %v2540, %v2722
      %v2835 = vadd.f32 %v2541, %v2727
      %v2836 = vadd.f32 %v2542, %v2730
      %v2837 = vadd.f32 %v2543, %v2735
      %v2838 = vadd.f32 %v2544, %v2738
      %v2839 = vadd.f32 %v2545, %v2743
      %v2840 = vadd.f32 %v2546, %v2746
      %v2841 = vadd.f32 %v2547, %v2751
      %v2842 = vadd.f32 %v2548, %v2754
      %v2843 = vadd.f32 %v2549, %v2759
      %v2844 = vadd.f32 %v2550, %v2762
      %v2845 = vadd.f32 %v2551, %v2767
      %v2846 = vadd.f32 %v2552, %v2770
      %v2847 = vadd.f32 %v2553, %v2775
      %v2848 = vadd.f32 %v2554, %v2778
      %v2849 = vadd.f32 %v2555, %v2783
      %v2850 = vadd.f32 %v2556, %v2786
      %v2851 = vadd.f32 %v2557, %v2791
      %v2852 = vadd.f32 %v2558, %v2794
      %v2853 = vadd.f32 %v2559, %v2799
      %v2854 = vadd.f32 %v2560, %v2802
      %v2855 = vadd.f32 %v2561, %v2807
      %v2856 = vadd.f32 %v2562, %v2810
      %v2857 = vadd.f32 %v2563, %v2815
      %v2858 = vadd.f32 %v2564, %v2818
      %v2859 = vadd.f32 %v2565, %v2823
      %v2860 = vadd.f32 %v2566, %v2826
      %v2861 = vld [vmem:[%s3] sm:$0x1]
      %v2863 = vlaneseq
      %v2864 = vshrl.u32 %v2863, 7
      %v2865 = vsub.s32 0, %v2864
      %v2866 = vrot.slane %v2861, %v2865
      %v2868 = vadd.f32 %v2829, %v2866
      %v2869 = vadd.f32 %v2830, %v2866
      %v2870 = vadd.f32 %v2831, %v2866
      %v2871 = vadd.f32 %v2832, %v2866
      %v2872 = vadd.f32 %v2833, %v2866
      %v2873 = vadd.f32 %v2834, %v2866
      %v2874 = vadd.f32 %v2835, %v2866
      %v2875 = vadd.f32 %v2836, %v2866
      %v2876 = vadd.f32 %v2837, %v2866
      %v2877 = vadd.f32 %v2838, %v2866
      %v2878 = vadd.f32 %v2839, %v2866
      %v2879 = vadd.f32 %v2840, %v2866
      %v2880 = vadd.f32 %v2841, %v2866
      %v2881 = vadd.f32 %v2842, %v2866
      %v2882 = vadd.f32 %v2843, %v2866
      %v2883 = vadd.f32 %v2844, %v2866
      %v2884 = vadd.f32 %v2845, %v2866
      %v2885 = vadd.f32 %v2846, %v2866
      %v2886 = vadd.f32 %v2847, %v2866
      %v2887 = vadd.f32 %v2848, %v2866
      %v2888 = vadd.f32 %v2849, %v2866
      %v2889 = vadd.f32 %v2850, %v2866
      %v2890 = vadd.f32 %v2851, %v2866
      %v2891 = vadd.f32 %v2852, %v2866
      %v2892 = vadd.f32 %v2853, %v2866
      %v2893 = vadd.f32 %v2854, %v2866
      %v2894 = vadd.f32 %v2855, %v2866
      %v2895 = vadd.f32 %v2856, %v2866
      %v2896 = vadd.f32 %v2857, %v2866
      %v2897 = vadd.f32 %v2858, %v2866
      %v2898 = vadd.f32 %v2859, %v2866
      %v2899 = vadd.f32 %v2860, %v2866
      %v2900 = vmax.f32 %v2868, 0.0
      %v2901 = vmax.f32 %v2869, 0.0
      %v2902 = vmax.f32 %v2870, 0.0
      %v2903 = vmax.f32 %v2871, 0.0
      %v2904 = vmax.f32 %v2872, 0.0
      %v2905 = vmax.f32 %v2873, 0.0
      %v2906 = vmax.f32 %v2874, 0.0
      %v2907 = vmax.f32 %v2875, 0.0
      %v2908 = vmax.f32 %v2876, 0.0
      %v2909 = vmax.f32 %v2877, 0.0
      %v2910 = vmax.f32 %v2878, 0.0
      %v2911 = vmax.f32 %v2879, 0.0
      %v2912 = vmax.f32 %v2880, 0.0
      %v2913 = vmax.f32 %v2881, 0.0
      %v2914 = vmax.f32 %v2882, 0.0
      %v2915 = vmax.f32 %v2883, 0.0
      %v2916 = vmax.f32 %v2884, 0.0
      %v2917 = vmax.f32 %v2885, 0.0
      %v2918 = vmax.f32 %v2886, 0.0
      %v2919 = vmax.f32 %v2887, 0.0
      %v2920 = vmax.f32 %v2888, 0.0
      %v2921 = vmax.f32 %v2889, 0.0
      %v2922 = vmax.f32 %v2890, 0.0
      %v2923 = vmax.f32 %v2891, 0.0
      %v2924 = vmax.f32 %v2892, 0.0
      %v2925 = vmax.f32 %v2893, 0.0
      %v2926 = vmax.f32 %v2894, 0.0
      %v2927 = vmax.f32 %v2895, 0.0
      %v2928 = vmax.f32 %v2896, 0.0
      %v2929 = vmax.f32 %v2897, 0.0
      %v2930 = vmax.f32 %v2898, 0.0
      %v2931 = vmax.f32 %v2899, 0.0
      %vm2932 = vcmask 64512
      %2933 = vst.msk [vmem:[#allocation2] sm:$0xff] %vm2932, 0.0
      %2934 = vst.msk [vmem:[#allocation2 + $0x8] sm:$0xff] %vm2932, 0.0
      %vm2935 = vcmask 58368
      %2936 = vst.msk [vmem:[#allocation2 + $0x10] sm:$0x3] %vm2935, 0.0
      %2937 = vst.msk [vmem:[#allocation2 + $0x18] sm:$0xff] %vm2932, 0.0
      %2938 = vst.msk [vmem:[#allocation2 + $0x20] sm:$0xff] %vm2932, 0.0
      %2939 = vst.msk [vmem:[#allocation2 + $0x28] sm:$0x3] %vm2935, 0.0
      %2940 = vst.msk [vmem:[#allocation2 + $0x30] sm:$0xff] %vm2932, 0.0
      %2941 = vst.msk [vmem:[#allocation2 + $0x38] sm:$0xff] %vm2932, 0.0
      %2942 = vst.msk [vmem:[#allocation2 + $0x40] sm:$0x3] %vm2935, 0.0
      %2943 = vst.msk [vmem:[#allocation2 + $0x48] sm:$0xff] %vm2932, 0.0
      %2944 = vst.msk [vmem:[#allocation2 + $0x50] sm:$0xff] %vm2932, 0.0
      %2945 = vst.msk [vmem:[#allocation2 + $0x58] sm:$0x3] %vm2935, 0.0
      %2946 = vst.msk [vmem:[#allocation2 + $0x60] sm:$0xff] %vm2932, 0.0
      %2947 = vst.msk [vmem:[#allocation2 + $0x68] sm:$0xff] %vm2932, 0.0
      %2948 = vst.msk [vmem:[#allocation2 + $0x70] sm:$0x3] %vm2935, 0.0
      %2949 = vst.msk [vmem:[#allocation2 + $0x78] sm:$0xff] %vm2932, 0.0
      %2950 = vst.msk [vmem:[#allocation2 + $0x80] sm:$0xff] %vm2932, 0.0
      %2951 = vst.msk [vmem:[#allocation2 + $0x88] sm:$0x3] %vm2935, 0.0
      %2952 = vst.msk [vmem:[#allocation2 + $0x90] sm:$0xff] %vm2932, 0.0
      %2953 = vst.msk [vmem:[#allocation2 + $0x98] sm:$0xff] %vm2932, 0.0
      %2954 = vst.msk [vmem:[#allocation2 + $0xa0] sm:$0x3] %vm2935, 0.0
      %2955 = vst.msk [vmem:[#allocation2 + $0xa8] sm:$0xff] %vm2932, 0.0
      %2956 = vst.msk [vmem:[#allocation2 + $0xb0] sm:$0xff] %vm2932, 0.0
      %2957 = vst.msk [vmem:[#allocation2 + $0xb8] sm:$0x3] %vm2935, 0.0
      %2958 = vst.msk [vmem:[#allocation2 + $0xc0] sm:$0xff] %vm2932, 0.0
      %2959 = vst.msk [vmem:[#allocation2 + $0xc8] sm:$0xff] %vm2932, 0.0
      %2960 = vst.msk [vmem:[#allocation2 + $0xd0] sm:$0x3] %vm2935, 0.0
      %2961 = vst.msk [vmem:[#allocation2 + $0xd8] sm:$0xff] %vm2932, 0.0
      %2962 = vst.msk [vmem:[#allocation2 + $0xe0] sm:$0xff] %vm2932, 0.0
      %2963 = vst.msk [vmem:[#allocation2 + $0xe8] sm:$0x3] %vm2935, 0.0
      %2964 = vst.msk [vmem:[#allocation2 + $0xf0] sm:$0xff] %vm2932, 0.0
      %2965 = vst.msk [vmem:[#allocation2 + $0xf8] sm:$0xff] %vm2932, 0.0
      %2966 = vst.msk [vmem:[#allocation2 + $0x100] sm:$0x3] %vm2935, 0.0
      %2967 = vst.msk [vmem:[#allocation2 + $0x108] sm:$0xff] %vm2932, 0.0
      %2968 = vst.msk [vmem:[#allocation2 + $0x110] sm:$0xff] %vm2932, 0.0
      %2969 = vst.msk [vmem:[#allocation2 + $0x118] sm:$0x3] %vm2935, 0.0
      %2970 = vst.msk [vmem:[#allocation2 + $0x120] sm:$0xff] %vm2932, 0.0
      %2971 = vst.msk [vmem:[#allocation2 + $0x128] sm:$0xff] %vm2932, 0.0
      %2972 = vst.msk [vmem:[#allocation2 + $0x130] sm:$0x3] %vm2935, 0.0
      %2973 = vst.msk [vmem:[#allocation2 + $0x138] sm:$0xff] %vm2932, 0.0
      %2974 = vst.msk [vmem:[#allocation2 + $0x140] sm:$0xff] %vm2932, 0.0
      %2975 = vst.msk [vmem:[#allocation2 + $0x148] sm:$0x3] %vm2935, 0.0
      %2976 = vst.msk [vmem:[#allocation2 + $0x150] sm:$0xff] %vm2932, 0.0
      %2977 = vst.msk [vmem:[#allocation2 + $0x158] sm:$0xff] %vm2932, 0.0
      %2978 = vst.msk [vmem:[#allocation2 + $0x160] sm:$0x3] %vm2935, 0.0
      %2979 = vst.msk [vmem:[#allocation2 + $0x168] sm:$0xff] %vm2932, 0.0
      %2980 = vst.msk [vmem:[#allocation2 + $0x170] sm:$0xff] %vm2932, 0.0
      %2981 = vst.msk [vmem:[#allocation2 + $0x178] sm:$0x3] %vm2935, 0.0
      %2982 = vst.msk [vmem:[#allocation2 + $0x180] sm:$0xff] %vm2932, 0.0
      %2983 = vst.msk [vmem:[#allocation2 + $0x188] sm:$0xff] %vm2932, 0.0
      %2984 = vst.msk [vmem:[#allocation2 + $0x190] sm:$0x3] %vm2935, 0.0
      %2985 = vst.msk [vmem:[#allocation2 + $0x198] sm:$0xff] %vm2932, 0.0
      %2986 = vst.msk [vmem:[#allocation2 + $0x1a0] sm:$0xff] %vm2932, 0.0
      %2987 = vst.msk [vmem:[#allocation2 + $0x1a8] sm:$0x3] %vm2935, 0.0
      %s2988 = scalar_lea.vmem [#allocation2], 24
      %2989 = vst.msk [vmem:[%s2988 + $0x1] sm:$0xff] %vm2932, %v2900
      %2990 = vst.msk [vmem:[%s2988 + $0x9] sm:$0xff] %vm2932, %v2901
      %2991 = vst.msk [vmem:[%s2988 + $0x19] sm:$0xff] %vm2932, %v2902
      %2992 = vst.msk [vmem:[%s2988 + $0x21] sm:$0xff] %vm2932, %v2903
      %2993 = vst.msk [vmem:[%s2988 + $0x31] sm:$0xff] %vm2932, %v2904
      %2994 = vst.msk [vmem:[%s2988 + $0x39] sm:$0xff] %vm2932, %v2905
      %2995 = vst.msk [vmem:[%s2988 + $0x49] sm:$0xff] %vm2932, %v2906
      %2996 = vst.msk [vmem:[%s2988 + $0x51] sm:$0xff] %vm2932, %v2907
      %2997 = vst.msk [vmem:[%s2988 + $0x61] sm:$0xff] %vm2932, %v2908
      %2998 = vst.msk [vmem:[%s2988 + $0x69] sm:$0xff] %vm2932, %v2909
      %2999 = vst.msk [vmem:[%s2988 + $0x79] sm:$0xff] %vm2932, %v2910
      %3000 = vst.msk [vmem:[%s2988 + $0x81] sm:$0xff] %vm2932, %v2911
      %3001 = vst.msk [vmem:[%s2988 + $0x91] sm:$0xff] %vm2932, %v2912
      %3002 = vst.msk [vmem:[%s2988 + $0x99] sm:$0xff] %vm2932, %v2913
      %3003 = vst.msk [vmem:[%s2988 + $0xa9] sm:$0xff] %vm2932, %v2914
      %3004 = vst.msk [vmem:[%s2988 + $0xb1] sm:$0xff] %vm2932, %v2915
      %3005 = vst.msk [vmem:[%s2988 + $0xc1] sm:$0xff] %vm2932, %v2916
      %3006 = vst.msk [vmem:[%s2988 + $0xc9] sm:$0xff] %vm2932, %v2917
      %3007 = vst.msk [vmem:[%s2988 + $0xd9] sm:$0xff] %vm2932, %v2918
      %3008 = vst.msk [vmem:[%s2988 + $0xe1] sm:$0xff] %vm2932, %v2919
      %3009 = vst.msk [vmem:[%s2988 + $0xf1] sm:$0xff] %vm2932, %v2920
      %3010 = vst.msk [vmem:[%s2988 + $0xf9] sm:$0xff] %vm2932, %v2921
      %3011 = vst.msk [vmem:[%s2988 + $0x109] sm:$0xff] %vm2932, %v2922
      %3012 = vst.msk [vmem:[%s2988 + $0x111] sm:$0xff] %vm2932, %v2923
      %3013 = vst.msk [vmem:[%s2988 + $0x121] sm:$0xff] %vm2932, %v2924
      %3014 = vst.msk [vmem:[%s2988 + $0x129] sm:$0xff] %vm2932, %v2925
      %3015 = vst.msk [vmem:[%s2988 + $0x139] sm:$0xff] %vm2932, %v2926
      %3016 = vst.msk [vmem:[%s2988 + $0x141] sm:$0xff] %vm2932, %v2927
      %3017 = vst.msk [vmem:[%s2988 + $0x151] sm:$0xff] %vm2932, %v2928
      %3018 = vst.msk [vmem:[%s2988 + $0x159] sm:$0xff] %vm2932, %v2929
      %3019 = vst.msk [vmem:[%s2988 + $0x169] sm:$0xff] %vm2932, %v2930
      %3020 = vst.msk [vmem:[%s2988 + $0x171] sm:$0xff] %vm2932, %v2931
      %v3021 = vld [vmem:[#allocation2] sm:$0xff]
      %v3022 = vld [vmem:[#allocation2 + $0x8] sm:$0xff]
      %v3023 = vld [vmem:[#allocation2 + $0x18] sm:$0xff]
      %v3024 = vld [vmem:[#allocation2 + $0x20] sm:$0xff]
      %v3025 = vld [vmem:[#allocation2 + $0x30] sm:$0xff]
      %v3026 = vld [vmem:[#allocation2 + $0x38] sm:$0xff]
      %v3027 = vld [vmem:[#allocation2 + $0x48] sm:$0xff]
      %v3028 = vld [vmem:[#allocation2 + $0x50] sm:$0xff]
      %v3029 = vld [vmem:[#allocation2 + $0x60] sm:$0xff]
      %v3030 = vld [vmem:[#allocation2 + $0x68] sm:$0xff]
      %v3031 = vld [vmem:[#allocation2 + $0x78] sm:$0xff]
      %v3032 = vld [vmem:[#allocation2 + $0x80] sm:$0xff]
      %v3033 = vld [vmem:[#allocation2 + $0x90] sm:$0xff]
      %v3034 = vld [vmem:[#allocation2 + $0x98] sm:$0xff]
      %v3035 = vld [vmem:[#allocation2 + $0xa8] sm:$0xff]
      %v3036 = vld [vmem:[#allocation2 + $0xb0] sm:$0xff]
      %v3037 = vld [vmem:[#allocation2 + $0xc0] sm:$0xff]
      %v3038 = vld [vmem:[#allocation2 + $0xc8] sm:$0xff]
      %v3039 = vld [vmem:[#allocation2 + $0xd8] sm:$0xff]
      %v3040 = vld [vmem:[#allocation2 + $0xe0] sm:$0xff]
      %v3041 = vld [vmem:[#allocation2 + $0xf0] sm:$0xff]
      %v3042 = vld [vmem:[#allocation2 + $0xf8] sm:$0xff]
      %v3043 = vld [vmem:[#allocation2 + $0x108] sm:$0xff]
      %v3044 = vld [vmem:[#allocation2 + $0x110] sm:$0xff]
      %v3045 = vld [vmem:[#allocation2 + $0x120] sm:$0xff]
      %v3046 = vld [vmem:[#allocation2 + $0x128] sm:$0xff]
      %v3047 = vld [vmem:[#allocation2 + $0x138] sm:$0xff]
      %v3048 = vld [vmem:[#allocation2 + $0x140] sm:$0xff]
      %v3049 = vld [vmem:[#allocation2 + $0x150] sm:$0xff]
      %v3050 = vld [vmem:[#allocation2 + $0x158] sm:$0xff]
      %v3051 = vld [vmem:[#allocation2 + $0x168] sm:$0xff]
      %v3052 = vld [vmem:[#allocation2 + $0x170] sm:$0xff]
      %v3053 = vpack.c.bf16 %v3022, %v3021
      %v3054 = vpack.c.bf16 %v3024, %v3023
      %v3055 = vpack.c.bf16 %v3026, %v3025
      %v3056 = vpack.c.bf16 %v3028, %v3027
      %v3057 = vpack.c.bf16 %v3030, %v3029
      %v3058 = vpack.c.bf16 %v3032, %v3031
      %v3059 = vpack.c.bf16 %v3034, %v3033
      %v3060 = vpack.c.bf16 %v3036, %v3035
      %v3061 = vpack.c.bf16 %v3038, %v3037
      %v3062 = vpack.c.bf16 %v3040, %v3039
      %v3063 = vpack.c.bf16 %v3042, %v3041
      %v3064 = vpack.c.bf16 %v3044, %v3043
      %v3065 = vpack.c.bf16 %v3046, %v3045
      %v3066 = vpack.c.bf16 %v3048, %v3047
      %v3067 = vpack.c.bf16 %v3050, %v3049
      %v3068 = vpack.c.bf16 %v3052, %v3051
      %v3069 = vld [vmem:[%s4] sm:$0xf]
      %v3070 = vld [vmem:[#allocation2 + $0x1] sm:$0xff]
      %v3071 = vld [vmem:[#allocation2 + $0x9] sm:$0xff]
      %v3072 = vld [vmem:[#allocation2 + $0x19] sm:$0xff]
      %v3073 = vld [vmem:[#allocation2 + $0x21] sm:$0xff]
      %v3074 = vld [vmem:[#allocation2 + $0x31] sm:$0xff]
      %v3075 = vld [vmem:[#allocation2 + $0x39] sm:$0xff]
      %v3076 = vld [vmem:[#allocation2 + $0x49] sm:$0xff]
      %v3077 = vld [vmem:[#allocation2 + $0x51] sm:$0xff]
      %v3078 = vld [vmem:[#allocation2 + $0x61] sm:$0xff]
      %v3079 = vld [vmem:[#allocation2 + $0x69] sm:$0xff]
      %v3080 = vld [vmem:[#allocation2 + $0x79] sm:$0xff]
      %v3081 = vld [vmem:[#allocation2 + $0x81] sm:$0xff]
      %v3082 = vld [vmem:[#allocation2 + $0x91] sm:$0xff]
      %v3083 = vld [vmem:[#allocation2 + $0x99] sm:$0xff]
      %v3084 = vld [vmem:[#allocation2 + $0xa9] sm:$0xff]
      %v3085 = vld [vmem:[#allocation2 + $0xb1] sm:$0xff]
      %v3086 = vld [vmem:[#allocation2 + $0xc1] sm:$0xff]
      %v3087 = vld [vmem:[#allocation2 + $0xc9] sm:$0xff]
      %v3088 = vld [vmem:[#allocation2 + $0xd9] sm:$0xff]
      %v3089 = vld [vmem:[#allocation2 + $0xe1] sm:$0xff]
      %v3090 = vld [vmem:[#allocation2 + $0xf1] sm:$0xff]
      %v3091 = vld [vmem:[#allocation2 + $0xf9] sm:$0xff]
      %v3092 = vld [vmem:[#allocation2 + $0x109] sm:$0xff]
      %v3093 = vld [vmem:[#allocation2 + $0x111] sm:$0xff]
      %v3094 = vld [vmem:[#allocation2 + $0x121] sm:$0xff]
      %v3095 = vld [vmem:[#allocation2 + $0x129] sm:$0xff]
      %v3096 = vld [vmem:[#allocation2 + $0x139] sm:$0xff]
      %v3097 = vld [vmem:[#allocation2 + $0x141] sm:$0xff]
      %v3098 = vld [vmem:[#allocation2 + $0x151] sm:$0xff]
      %v3099 = vld [vmem:[#allocation2 + $0x159] sm:$0xff]
      %v3100 = vld [vmem:[#allocation2 + $0x169] sm:$0xff]
      %v3101 = vld [vmem:[#allocation2 + $0x171] sm:$0xff]
      %v3102 = vpack.c.bf16 %v3071, %v3070
      %v3103 = vpack.c.bf16 %v3073, %v3072
      %v3104 = vpack.c.bf16 %v3075, %v3074
      %v3105 = vpack.c.bf16 %v3077, %v3076
      %v3106 = vpack.c.bf16 %v3079, %v3078
      %v3107 = vpack.c.bf16 %v3081, %v3080
      %v3108 = vpack.c.bf16 %v3083, %v3082
      %v3109 = vpack.c.bf16 %v3085, %v3084
      %v3110 = vpack.c.bf16 %v3087, %v3086
      %v3111 = vpack.c.bf16 %v3089, %v3088
      %v3112 = vpack.c.bf16 %v3091, %v3090
      %v3113 = vpack.c.bf16 %v3093, %v3092
      %v3114 = vpack.c.bf16 %v3095, %v3094
      %v3115 = vpack.c.bf16 %v3097, %v3096
      %v3116 = vpack.c.bf16 %v3099, %v3098
      %v3117 = vpack.c.bf16 %v3101, %v3100
      %s3118 = scalar_lea.vmem %s4, 4
      %v3119 = vld [vmem:[%s3118] sm:$0xf]
      %v3121 = vsel %vm2932, %v3102, 0
      %v3124 = vsel %vm2932, %v3103, 0
      %v3127 = vsel %vm2932, %v3104, 0
      %v3130 = vsel %vm2932, %v3105, 0
      %v3133 = vsel %vm2932, %v3106, 0
      %v3136 = vsel %vm2932, %v3107, 0
      %v3139 = vsel %vm2932, %v3108, 0
      %v3142 = vsel %vm2932, %v3109, 0
      %v3145 = vsel %vm2932, %v3110, 0
      %v3148 = vsel %vm2932, %v3111, 0
      %v3151 = vsel %vm2932, %v3112, 0
      %v3154 = vsel %vm2932, %v3113, 0
      %v3157 = vsel %vm2932, %v3114, 0
      %v3160 = vsel %vm2932, %v3115, 0
      %v3163 = vsel %vm2932, %v3116, 0
      %v3166 = vsel %vm2932, %v3117, 0
      %vm3168 = vcmask 1043456
      %v3170 = vsel %vm3168, %v3119, 0
      %3172 = vmatprep.subr.bf16.mxu0 0
      %3173 = vmatpush1.bf16.msra.mxu0 0
      %3174 = vmatprep.subr.bf16.mxu0 0
      %3175 = vmatpush1.bf16.msra.mxu0 0
      %3176 = vmatprep.subr.bf16.mxu0 0
      %3177 = vmatpush1.bf16.msra.mxu0 0
      %3178 = vmatprep.subr.bf16.mxu0 0
      %3179 = vmatpush1.bf16.msra.mxu0 0
      %3180 = vmatprep.subr.bf16.mxu0 0
      %3181 = vmatpush1.bf16.msra.mxu0 0
      %3182 = vmatprep.subr.bf16.mxu0 0
      %3183 = vmatpush1.bf16.msra.mxu0 0
      %3184 = vmatprep.subr.bf16.mxu0 0
      %3185 = vmatpush1.bf16.msra.mxu0 0
      %3186 = vmatprep.subr.bf16.mxu0 0
      %3187 = vmatpush1.bf16.msra.mxu0 %v3170
      %3188 = vmatprep.subr.bf16.mxu0 0
      %3189 = vmatpush2.bf16.msra.mxu0 0
      %3190 = vmatprep.subr.bf16.mxu0 0
      %3191 = vmatpush2.bf16.msra.mxu0 0
      %3192 = vmatprep.subr.bf16.mxu0 0
      %3193 = vmatpush2.bf16.msra.mxu0 0
      %3194 = vmatprep.subr.bf16.mxu0 0
      %3195 = vmatpush2.bf16.msra.mxu0 0
      %3196 = vmatprep.subr.bf16.mxu0 0
      %3197 = vmatpush2.bf16.msra.mxu0 0
      %3198 = vmatprep.subr.bf16.mxu0 0
      %3199 = vmatpush2.bf16.msra.mxu0 0
      %3200 = vmatprep.subr.bf16.mxu0 0
      %3201 = vmatpush2.bf16.msra.mxu0 0
      %3202 = vmatprep.subr.bf16.mxu0 0
      %3203 = vmatpush2.bf16.msra.mxu0 0
      %3204 = vmatprep.mubr.bf16.mxu0 0
      %3205 = vmatmul.mubr.bf16.gmra.mxu0 %v3121
      %v3206 = vpop.f32.mrf.mxu0
      %v3207 = vadd.f32 0.0, %v3206
      %v3208 = vpop.f32.mrf.mxu0
      %v3209 = vpop.f32.mrf.mxu0
      %v3210 = vadd.f32 0.0, %v3209
      %v3211 = vpop.f32.mrf.mxu0
      %3212 = vmatprep.mubr.bf16.mxu0 0
      %3213 = vmatmul.mubr.bf16.gmra.mxu0 %v3124
      %v3214 = vpop.f32.mrf.mxu0
      %v3215 = vadd.f32 0.0, %v3214
      %v3216 = vpop.f32.mrf.mxu0
      %v3217 = vpop.f32.mrf.mxu0
      %v3218 = vadd.f32 0.0, %v3217
      %v3219 = vpop.f32.mrf.mxu0
      %3220 = vmatprep.mubr.bf16.mxu0 0
      %3221 = vmatmul.mubr.bf16.gmra.mxu0 %v3127
      %v3222 = vpop.f32.mrf.mxu0
      %v3223 = vadd.f32 0.0, %v3222
      %v3224 = vpop.f32.mrf.mxu0
      %v3225 = vpop.f32.mrf.mxu0
      %v3226 = vadd.f32 0.0, %v3225
      %v3227 = vpop.f32.mrf.mxu0
      %3228 = vmatprep.mubr.bf16.mxu0 0
      %3229 = vmatmul.mubr.bf16.gmra.mxu0 %v3130
      %v3230 = vpop.f32.mrf.mxu0
      %v3231 = vadd.f32 0.0, %v3230
      %v3232 = vpop.f32.mrf.mxu0
      %v3233 = vpop.f32.mrf.mxu0
      %v3234 = vadd.f32 0.0, %v3233
      %v3235 = vpop.f32.mrf.mxu0
      %3236 = vmatprep.mubr.bf16.mxu0 0
      %3237 = vmatmul.mubr.bf16.gmra.mxu0 %v3133
      %v3238 = vpop.f32.mrf.mxu0
      %v3239 = vadd.f32 0.0, %v3238
      %v3240 = vpop.f32.mrf.mxu0
      %v3241 = vpop.f32.mrf.mxu0
      %v3242 = vadd.f32 0.0, %v3241
      %v3243 = vpop.f32.mrf.mxu0
      %3244 = vmatprep.mubr.bf16.mxu0 0
      %3245 = vmatmul.mubr.bf16.gmra.mxu0 %v3136
      %v3246 = vpop.f32.mrf.mxu0
      %v3247 = vadd.f32 0.0, %v3246
      %v3248 = vpop.f32.mrf.mxu0
      %v3249 = vpop.f32.mrf.mxu0
      %v3250 = vadd.f32 0.0, %v3249
      %v3251 = vpop.f32.mrf.mxu0
      %3252 = vmatprep.mubr.bf16.mxu0 0
      %3253 = vmatmul.mubr.bf16.gmra.mxu0 %v3139
      %v3254 = vpop.f32.mrf.mxu0
      %v3255 = vadd.f32 0.0, %v3254
      %v3256 = vpop.f32.mrf.mxu0
      %v3257 = vpop.f32.mrf.mxu0
      %v3258 = vadd.f32 0.0, %v3257
      %v3259 = vpop.f32.mrf.mxu0
      %3260 = vmatprep.mubr.bf16.mxu0 0
      %3261 = vmatmul.mubr.bf16.gmra.mxu0 %v3142
      %v3262 = vpop.f32.mrf.mxu0
      %v3263 = vadd.f32 0.0, %v3262
      %v3264 = vpop.f32.mrf.mxu0
      %v3265 = vpop.f32.mrf.mxu0
      %v3266 = vadd.f32 0.0, %v3265
      %v3267 = vpop.f32.mrf.mxu0
      %3268 = vmatprep.mubr.bf16.mxu0 0
      %3269 = vmatmul.mubr.bf16.gmra.mxu0 %v3145
      %v3270 = vpop.f32.mrf.mxu0
      %v3271 = vadd.f32 0.0, %v3270
      %v3272 = vpop.f32.mrf.mxu0
      %v3273 = vpop.f32.mrf.mxu0
      %v3274 = vadd.f32 0.0, %v3273
      %v3275 = vpop.f32.mrf.mxu0
      %3276 = vmatprep.mubr.bf16.mxu0 0
      %3277 = vmatmul.mubr.bf16.gmra.mxu0 %v3148
      %v3278 = vpop.f32.mrf.mxu0
      %v3279 = vadd.f32 0.0, %v3278
      %v3280 = vpop.f32.mrf.mxu0
      %v3281 = vpop.f32.mrf.mxu0
      %v3282 = vadd.f32 0.0, %v3281
      %v3283 = vpop.f32.mrf.mxu0
      %3284 = vmatprep.mubr.bf16.mxu0 0
      %3285 = vmatmul.mubr.bf16.gmra.mxu0 %v3151
      %v3286 = vpop.f32.mrf.mxu0
      %v3287 = vadd.f32 0.0, %v3286
      %v3288 = vpop.f32.mrf.mxu0
      %v3289 = vpop.f32.mrf.mxu0
      %v3290 = vadd.f32 0.0, %v3289
      %v3291 = vpop.f32.mrf.mxu0
      %3292 = vmatprep.mubr.bf16.mxu0 0
      %3293 = vmatmul.mubr.bf16.gmra.mxu0 %v3154
      %v3294 = vpop.f32.mrf.mxu0
      %v3295 = vadd.f32 0.0, %v3294
      %v3296 = vpop.f32.mrf.mxu0
      %v3297 = vpop.f32.mrf.mxu0
      %v3298 = vadd.f32 0.0, %v3297
      %v3299 = vpop.f32.mrf.mxu0
      %3300 = vmatprep.mubr.bf16.mxu0 0
      %3301 = vmatmul.mubr.bf16.gmra.mxu0 %v3157
      %v3302 = vpop.f32.mrf.mxu0
      %v3303 = vadd.f32 0.0, %v3302
      %v3304 = vpop.f32.mrf.mxu0
      %v3305 = vpop.f32.mrf.mxu0
      %v3306 = vadd.f32 0.0, %v3305
      %v3307 = vpop.f32.mrf.mxu0
      %3308 = vmatprep.mubr.bf16.mxu0 0
      %3309 = vmatmul.mubr.bf16.gmra.mxu0 %v3160
      %v3310 = vpop.f32.mrf.mxu0
      %v3311 = vadd.f32 0.0, %v3310
      %v3312 = vpop.f32.mrf.mxu0
      %v3313 = vpop.f32.mrf.mxu0
      %v3314 = vadd.f32 0.0, %v3313
      %v3315 = vpop.f32.mrf.mxu0
      %3316 = vmatprep.mubr.bf16.mxu0 0
      %3317 = vmatmul.mubr.bf16.gmra.mxu0 %v3163
      %v3318 = vpop.f32.mrf.mxu0
      %v3319 = vadd.f32 0.0, %v3318
      %v3320 = vpop.f32.mrf.mxu0
      %v3321 = vpop.f32.mrf.mxu0
      %v3322 = vadd.f32 0.0, %v3321
      %v3323 = vpop.f32.mrf.mxu0
      %3324 = vmatprep.mubr.bf16.mxu0 0
      %3325 = vmatmul.mubr.bf16.gmra.mxu0 %v3166
      %v3326 = vpop.f32.mrf.mxu0
      %v3327 = vadd.f32 0.0, %v3326
      %v3328 = vpop.f32.mrf.mxu0
      %v3329 = vpop.f32.mrf.mxu0
      %v3330 = vadd.f32 0.0, %v3329
      %v3331 = vpop.f32.mrf.mxu0
      %3332 = vdwg.mxu0
      %v3334 = vsel %vm2932, %v3053, 0
      %v3337 = vsel %vm2932, %v3054, 0
      %v3340 = vsel %vm2932, %v3055, 0
      %v3343 = vsel %vm2932, %v3056, 0
      %v3346 = vsel %vm2932, %v3057, 0
      %v3349 = vsel %vm2932, %v3058, 0
      %v3352 = vsel %vm2932, %v3059, 0
      %v3355 = vsel %vm2932, %v3060, 0
      %v3358 = vsel %vm2932, %v3061, 0
      %v3361 = vsel %vm2932, %v3062, 0
      %v3364 = vsel %vm2932, %v3063, 0
      %v3367 = vsel %vm2932, %v3064, 0
      %v3370 = vsel %vm2932, %v3065, 0
      %v3373 = vsel %vm2932, %v3066, 0
      %v3376 = vsel %vm2932, %v3067, 0
      %v3379 = vsel %vm2932, %v3068, 0
      %v3382 = vsel %vm3168, %v3069, 0
      %3384 = vmatprep.subr.bf16.mxu0 0
      %3385 = vmatpush1.bf16.msra.mxu0 0
      %3386 = vmatprep.subr.bf16.mxu0 0
      %3387 = vmatpush1.bf16.msra.mxu0 0
      %3388 = vmatprep.subr.bf16.mxu0 0
      %3389 = vmatpush1.bf16.msra.mxu0 0
      %3390 = vmatprep.subr.bf16.mxu0 0
      %3391 = vmatpush1.bf16.msra.mxu0 0
      %3392 = vmatprep.subr.bf16.mxu0 0
      %3393 = vmatpush1.bf16.msra.mxu0 0
      %3394 = vmatprep.subr.bf16.mxu0 0
      %3395 = vmatpush1.bf16.msra.mxu0 0
      %3396 = vmatprep.subr.bf16.mxu0 0
      %3397 = vmatpush1.bf16.msra.mxu0 0
      %3398 = vmatprep.subr.bf16.mxu0 0
      %3399 = vmatpush1.bf16.msra.mxu0 %v3382
      %3400 = vmatprep.subr.bf16.mxu0 0
      %3401 = vmatpush2.bf16.msra.mxu0 0
      %3402 = vmatprep.subr.bf16.mxu0 0
      %3403 = vmatpush2.bf16.msra.mxu0 0
      %3404 = vmatprep.subr.bf16.mxu0 0
      %3405 = vmatpush2.bf16.msra.mxu0 0
      %3406 = vmatprep.subr.bf16.mxu0 0
      %3407 = vmatpush2.bf16.msra.mxu0 0
      %3408 = vmatprep.subr.bf16.mxu0 0
      %3409 = vmatpush2.bf16.msra.mxu0 0
      %3410 = vmatprep.subr.bf16.mxu0 0
      %3411 = vmatpush2.bf16.msra.mxu0 0
      %3412 = vmatprep.subr.bf16.mxu0 0
      %3413 = vmatpush2.bf16.msra.mxu0 0
      %3414 = vmatprep.subr.bf16.mxu0 0
      %3415 = vmatpush2.bf16.msra.mxu0 0
      %3416 = vmatprep.mubr.bf16.mxu0 0
      %3417 = vmatmul.mubr.bf16.gmra.mxu0 %v3334
      %v3418 = vpop.f32.mrf.mxu0
      %v3419 = vadd.f32 %v3207, %v3418
      %v3420 = vpop.f32.mrf.mxu0
      %v3421 = vpop.f32.mrf.mxu0
      %v3422 = vadd.f32 %v3210, %v3421
      %v3423 = vpop.f32.mrf.mxu0
      %3424 = vmatprep.mubr.bf16.mxu0 0
      %3425 = vmatmul.mubr.bf16.gmra.mxu0 %v3337
      %v3426 = vpop.f32.mrf.mxu0
      %v3427 = vadd.f32 %v3215, %v3426
      %v3428 = vpop.f32.mrf.mxu0
      %v3429 = vpop.f32.mrf.mxu0
      %v3430 = vadd.f32 %v3218, %v3429
      %v3431 = vpop.f32.mrf.mxu0
      %3432 = vmatprep.mubr.bf16.mxu0 0
      %3433 = vmatmul.mubr.bf16.gmra.mxu0 %v3340
      %v3434 = vpop.f32.mrf.mxu0
      %v3435 = vadd.f32 %v3223, %v3434
      %v3436 = vpop.f32.mrf.mxu0
      %v3437 = vpop.f32.mrf.mxu0
      %v3438 = vadd.f32 %v3226, %v3437
      %v3439 = vpop.f32.mrf.mxu0
      %3440 = vmatprep.mubr.bf16.mxu0 0
      %3441 = vmatmul.mubr.bf16.gmra.mxu0 %v3343
      %v3442 = vpop.f32.mrf.mxu0
      %v3443 = vadd.f32 %v3231, %v3442
      %v3444 = vpop.f32.mrf.mxu0
      %v3445 = vpop.f32.mrf.mxu0
      %v3446 = vadd.f32 %v3234, %v3445
      %v3447 = vpop.f32.mrf.mxu0
      %3448 = vmatprep.mubr.bf16.mxu0 0
      %3449 = vmatmul.mubr.bf16.gmra.mxu0 %v3346
      %v3450 = vpop.f32.mrf.mxu0
      %v3451 = vadd.f32 %v3239, %v3450
      %v3452 = vpop.f32.mrf.mxu0
      %v3453 = vpop.f32.mrf.mxu0
      %v3454 = vadd.f32 %v3242, %v3453
      %v3455 = vpop.f32.mrf.mxu0
      %3456 = vmatprep.mubr.bf16.mxu0 0
      %3457 = vmatmul.mubr.bf16.gmra.mxu0 %v3349
      %v3458 = vpop.f32.mrf.mxu0
      %v3459 = vadd.f32 %v3247, %v3458
      %v3460 = vpop.f32.mrf.mxu0
      %v3461 = vpop.f32.mrf.mxu0
      %v3462 = vadd.f32 %v3250, %v3461
      %v3463 = vpop.f32.mrf.mxu0
      %3464 = vmatprep.mubr.bf16.mxu0 0
      %3465 = vmatmul.mubr.bf16.gmra.mxu0 %v3352
      %v3466 = vpop.f32.mrf.mxu0
      %v3467 = vadd.f32 %v3255, %v3466
      %v3468 = vpop.f32.mrf.mxu0
      %v3469 = vpop.f32.mrf.mxu0
      %v3470 = vadd.f32 %v3258, %v3469
      %v3471 = vpop.f32.mrf.mxu0
      %3472 = vmatprep.mubr.bf16.mxu0 0
      %3473 = vmatmul.mubr.bf16.gmra.mxu0 %v3355
      %v3474 = vpop.f32.mrf.mxu0
      %v3475 = vadd.f32 %v3263, %v3474
      %v3476 = vpop.f32.mrf.mxu0
      %v3477 = vpop.f32.mrf.mxu0
      %v3478 = vadd.f32 %v3266, %v3477
      %v3479 = vpop.f32.mrf.mxu0
      %3480 = vmatprep.mubr.bf16.mxu0 0
      %3481 = vmatmul.mubr.bf16.gmra.mxu0 %v3358
      %v3482 = vpop.f32.mrf.mxu0
      %v3483 = vadd.f32 %v3271, %v3482
      %v3484 = vpop.f32.mrf.mxu0
      %v3485 = vpop.f32.mrf.mxu0
      %v3486 = vadd.f32 %v3274, %v3485
      %v3487 = vpop.f32.mrf.mxu0
      %3488 = vmatprep.mubr.bf16.mxu0 0
      %3489 = vmatmul.mubr.bf16.gmra.mxu0 %v3361
      %v3490 = vpop.f32.mrf.mxu0
      %v3491 = vadd.f32 %v3279, %v3490
      %v3492 = vpop.f32.mrf.mxu0
      %v3493 = vpop.f32.mrf.mxu0
      %v3494 = vadd.f32 %v3282, %v3493
      %v3495 = vpop.f32.mrf.mxu0
      %3496 = vmatprep.mubr.bf16.mxu0 0
      %3497 = vmatmul.mubr.bf16.gmra.mxu0 %v3364
      %v3498 = vpop.f32.mrf.mxu0
      %v3499 = vadd.f32 %v3287, %v3498
      %v3500 = vpop.f32.mrf.mxu0
      %v3501 = vpop.f32.mrf.mxu0
      %v3502 = vadd.f32 %v3290, %v3501
      %v3503 = vpop.f32.mrf.mxu0
      %3504 = vmatprep.mubr.bf16.mxu0 0
      %3505 = vmatmul.mubr.bf16.gmra.mxu0 %v3367
      %v3506 = vpop.f32.mrf.mxu0
      %v3507 = vadd.f32 %v3295, %v3506
      %v3508 = vpop.f32.mrf.mxu0
      %v3509 = vpop.f32.mrf.mxu0
      %v3510 = vadd.f32 %v3298, %v3509
      %v3511 = vpop.f32.mrf.mxu0
      %3512 = vmatprep.mubr.bf16.mxu0 0
      %3513 = vmatmul.mubr.bf16.gmra.mxu0 %v3370
      %v3514 = vpop.f32.mrf.mxu0
      %v3515 = vadd.f32 %v3303, %v3514
      %v3516 = vpop.f32.mrf.mxu0
      %v3517 = vpop.f32.mrf.mxu0
      %v3518 = vadd.f32 %v3306, %v3517
      %v3519 = vpop.f32.mrf.mxu0
      %3520 = vmatprep.mubr.bf16.mxu0 0
      %3521 = vmatmul.mubr.bf16.gmra.mxu0 %v3373
      %v3522 = vpop.f32.mrf.mxu0
      %v3523 = vadd.f32 %v3311, %v3522
      %v3524 = vpop.f32.mrf.mxu0
      %v3525 = vpop.f32.mrf.mxu0
      %v3526 = vadd.f32 %v3314, %v3525
      %v3527 = vpop.f32.mrf.mxu0
      %3528 = vmatprep.mubr.bf16.mxu0 0
      %3529 = vmatmul.mubr.bf16.gmra.mxu0 %v3376
      %v3530 = vpop.f32.mrf.mxu0
      %v3531 = vadd.f32 %v3319, %v3530
      %v3532 = vpop.f32.mrf.mxu0
      %v3533 = vpop.f32.mrf.mxu0
      %v3534 = vadd.f32 %v3322, %v3533
      %v3535 = vpop.f32.mrf.mxu0
      %3536 = vmatprep.mubr.bf16.mxu0 0
      %3537 = vmatmul.mubr.bf16.gmra.mxu0 %v3379
      %v3538 = vpop.f32.mrf.mxu0
      %v3539 = vadd.f32 %v3327, %v3538
      %v3540 = vpop.f32.mrf.mxu0
      %v3541 = vpop.f32.mrf.mxu0
      %v3542 = vadd.f32 %v3330, %v3541
      %v3543 = vpop.f32.mrf.mxu0
      %3544 = vdwg.mxu0
      %v3545 = vld [vmem:[#allocation2 + $0x2] sm:$0xff]
      %v3546 = vld [vmem:[#allocation2 + $0xa] sm:$0xff]
      %v3547 = vld [vmem:[#allocation2 + $0x1a] sm:$0xff]
      %v3548 = vld [vmem:[#allocation2 + $0x22] sm:$0xff]
      %v3549 = vld [vmem:[#allocation2 + $0x32] sm:$0xff]
      %v3550 = vld [vmem:[#allocation2 + $0x3a] sm:$0xff]
      %v3551 = vld [vmem:[#allocation2 + $0x4a] sm:$0xff]
      %v3552 = vld [vmem:[#allocation2 + $0x52] sm:$0xff]
      %v3553 = vld [vmem:[#allocation2 + $0x62] sm:$0xff]
      %v3554 = vld [vmem:[#allocation2 + $0x6a] sm:$0xff]
      %v3555 = vld [vmem:[#allocation2 + $0x7a] sm:$0xff]
      %v3556 = vld [vmem:[#allocation2 + $0x82] sm:$0xff]
      %v3557 = vld [vmem:[#allocation2 + $0x92] sm:$0xff]
      %v3558 = vld [vmem:[#allocation2 + $0x9a] sm:$0xff]
      %v3559 = vld [vmem:[#allocation2 + $0xaa] sm:$0xff]
      %v3560 = vld [vmem:[#allocation2 + $0xb2] sm:$0xff]
      %v3561 = vld [vmem:[#allocation2 + $0xc2] sm:$0xff]
      %v3562 = vld [vmem:[#allocation2 + $0xca] sm:$0xff]
      %v3563 = vld [vmem:[#allocation2 + $0xda] sm:$0xff]
      %v3564 = vld [vmem:[#allocation2 + $0xe2] sm:$0xff]
      %v3565 = vld [vmem:[#allocation2 + $0xf2] sm:$0xff]
      %v3566 = vld [vmem:[#allocation2 + $0xfa] sm:$0xff]
      %v3567 = vld [vmem:[#allocation2 + $0x10a] sm:$0xff]
      %v3568 = vld [vmem:[#allocation2 + $0x112] sm:$0xff]
      %v3569 = vld [vmem:[#allocation2 + $0x122] sm:$0xff]
      %v3570 = vld [vmem:[#allocation2 + $0x12a] sm:$0xff]
      %v3571 = vld [vmem:[#allocation2 + $0x13a] sm:$0xff]
      %v3572 = vld [vmem:[#allocation2 + $0x142] sm:$0xff]
      %v3573 = vld [vmem:[#allocation2 + $0x152] sm:$0xff]
      %v3574 = vld [vmem:[#allocation2 + $0x15a] sm:$0xff]
      %v3575 = vld [vmem:[#allocation2 + $0x16a] sm:$0xff]
      %v3576 = vld [vmem:[#allocation2 + $0x172] sm:$0xff]
      %v3577 = vpack.c.bf16 %v3546, %v3545
      %v3578 = vpack.c.bf16 %v3548, %v3547
      %v3579 = vpack.c.bf16 %v3550, %v3549
      %v3580 = vpack.c.bf16 %v3552, %v3551
      %v3581 = vpack.c.bf16 %v3554, %v3553
      %v3582 = vpack.c.bf16 %v3556, %v3555
      %v3583 = vpack.c.bf16 %v3558, %v3557
      %v3584 = vpack.c.bf16 %v3560, %v3559
      %v3585 = vpack.c.bf16 %v3562, %v3561
      %v3586 = vpack.c.bf16 %v3564, %v3563
      %v3587 = vpack.c.bf16 %v3566, %v3565
      %v3588 = vpack.c.bf16 %v3568, %v3567
      %v3589 = vpack.c.bf16 %v3570, %v3569
      %v3590 = vpack.c.bf16 %v3572, %v3571
      %v3591 = vpack.c.bf16 %v3574, %v3573
      %v3592 = vpack.c.bf16 %v3576, %v3575
      %s3593 = scalar_lea.vmem %s4, 8
      %v3594 = vld [vmem:[%s3593] sm:$0xf]
      %v3596 = vsel %vm2932, %v3577, 0
      %v3599 = vsel %vm2932, %v3578, 0
      %v3602 = vsel %vm2932, %v3579, 0
      %v3605 = vsel %vm2932, %v3580, 0
      %v3608 = vsel %vm2932, %v3581, 0
      %v3611 = vsel %vm2932, %v3582, 0
      %v3614 = vsel %vm2932, %v3583, 0
      %v3617 = vsel %vm2932, %v3584, 0
      %v3620 = vsel %vm2932, %v3585, 0
      %v3623 = vsel %vm2932, %v3586, 0
      %v3626 = vsel %vm2932, %v3587, 0
      %v3629 = vsel %vm2932, %v3588, 0
      %v3632 = vsel %vm2932, %v3589, 0
      %v3635 = vsel %vm2932, %v3590, 0
      %v3638 = vsel %vm2932, %v3591, 0
      %v3641 = vsel %vm2932, %v3592, 0
      %v3644 = vsel %vm3168, %v3594, 0
      %3646 = vmatprep.subr.bf16.mxu0 0
      %3647 = vmatpush1.bf16.msra.mxu0 0
      %3648 = vmatprep.subr.bf16.mxu0 0
      %3649 = vmatpush1.bf16.msra.mxu0 0
      %3650 = vmatprep.subr.bf16.mxu0 0
      %3651 = vmatpush1.bf16.msra.mxu0 0
      %3652 = vmatprep.subr.bf16.mxu0 0
      %3653 = vmatpush1.bf16.msra.mxu0 0
      %3654 = vmatprep.subr.bf16.mxu0 0
      %3655 = vmatpush1.bf16.msra.mxu0 0
      %3656 = vmatprep.subr.bf16.mxu0 0
      %3657 = vmatpush1.bf16.msra.mxu0 0
      %3658 = vmatprep.subr.bf16.mxu0 0
      %3659 = vmatpush1.bf16.msra.mxu0 0
      %3660 = vmatprep.subr.bf16.mxu0 0
      %3661 = vmatpush1.bf16.msra.mxu0 %v3644
      %3662 = vmatprep.subr.bf16.mxu0 0
      %3663 = vmatpush2.bf16.msra.mxu0 0
      %3664 = vmatprep.subr.bf16.mxu0 0
      %3665 = vmatpush2.bf16.msra.mxu0 0
      %3666 = vmatprep.subr.bf16.mxu0 0
      %3667 = vmatpush2.bf16.msra.mxu0 0
      %3668 = vmatprep.subr.bf16.mxu0 0
      %3669 = vmatpush2.bf16.msra.mxu0 0
      %3670 = vmatprep.subr.bf16.mxu0 0
      %3671 = vmatpush2.bf16.msra.mxu0 0
      %3672 = vmatprep.subr.bf16.mxu0 0
      %3673 = vmatpush2.bf16.msra.mxu0 0
      %3674 = vmatprep.subr.bf16.mxu0 0
      %3675 = vmatpush2.bf16.msra.mxu0 0
      %3676 = vmatprep.subr.bf16.mxu0 0
      %3677 = vmatpush2.bf16.msra.mxu0 0
      %3678 = vmatprep.mubr.bf16.mxu0 0
      %3679 = vmatmul.mubr.bf16.gmra.mxu0 %v3596
      %v3680 = vpop.f32.mrf.mxu0
      %v3681 = vadd.f32 0.0, %v3680
      %v3682 = vpop.f32.mrf.mxu0
      %v3683 = vpop.f32.mrf.mxu0
      %v3684 = vadd.f32 0.0, %v3683
      %v3685 = vpop.f32.mrf.mxu0
      %3686 = vmatprep.mubr.bf16.mxu0 0
      %3687 = vmatmul.mubr.bf16.gmra.mxu0 %v3599
      %v3688 = vpop.f32.mrf.mxu0
      %v3689 = vadd.f32 0.0, %v3688
      %v3690 = vpop.f32.mrf.mxu0
      %v3691 = vpop.f32.mrf.mxu0
      %v3692 = vadd.f32 0.0, %v3691
      %v3693 = vpop.f32.mrf.mxu0
      %3694 = vmatprep.mubr.bf16.mxu0 0
      %3695 = vmatmul.mubr.bf16.gmra.mxu0 %v3602
      %v3696 = vpop.f32.mrf.mxu0
      %v3697 = vadd.f32 0.0, %v3696
      %v3698 = vpop.f32.mrf.mxu0
      %v3699 = vpop.f32.mrf.mxu0
      %v3700 = vadd.f32 0.0, %v3699
      %v3701 = vpop.f32.mrf.mxu0
      %3702 = vmatprep.mubr.bf16.mxu0 0
      %3703 = vmatmul.mubr.bf16.gmra.mxu0 %v3605
      %v3704 = vpop.f32.mrf.mxu0
      %v3705 = vadd.f32 0.0, %v3704
      %v3706 = vpop.f32.mrf.mxu0
      %v3707 = vpop.f32.mrf.mxu0
      %v3708 = vadd.f32 0.0, %v3707
      %v3709 = vpop.f32.mrf.mxu0
      %3710 = vmatprep.mubr.bf16.mxu0 0
      %3711 = vmatmul.mubr.bf16.gmra.mxu0 %v3608
      %v3712 = vpop.f32.mrf.mxu0
      %v3713 = vadd.f32 0.0, %v3712
      %v3714 = vpop.f32.mrf.mxu0
      %v3715 = vpop.f32.mrf.mxu0
      %v3716 = vadd.f32 0.0, %v3715
      %v3717 = vpop.f32.mrf.mxu0
      %3718 = vmatprep.mubr.bf16.mxu0 0
      %3719 = vmatmul.mubr.bf16.gmra.mxu0 %v3611
      %v3720 = vpop.f32.mrf.mxu0
      %v3721 = vadd.f32 0.0, %v3720
      %v3722 = vpop.f32.mrf.mxu0
      %v3723 = vpop.f32.mrf.mxu0
      %v3724 = vadd.f32 0.0, %v3723
      %v3725 = vpop.f32.mrf.mxu0
      %3726 = vmatprep.mubr.bf16.mxu0 0
      %3727 = vmatmul.mubr.bf16.gmra.mxu0 %v3614
      %v3728 = vpop.f32.mrf.mxu0
      %v3729 = vadd.f32 0.0, %v3728
      %v3730 = vpop.f32.mrf.mxu0
      %v3731 = vpop.f32.mrf.mxu0
      %v3732 = vadd.f32 0.0, %v3731
      %v3733 = vpop.f32.mrf.mxu0
      %3734 = vmatprep.mubr.bf16.mxu0 0
      %3735 = vmatmul.mubr.bf16.gmra.mxu0 %v3617
      %v3736 = vpop.f32.mrf.mxu0
      %v3737 = vadd.f32 0.0, %v3736
      %v3738 = vpop.f32.mrf.mxu0
      %v3739 = vpop.f32.mrf.mxu0
      %v3740 = vadd.f32 0.0, %v3739
      %v3741 = vpop.f32.mrf.mxu0
      %3742 = vmatprep.mubr.bf16.mxu0 0
      %3743 = vmatmul.mubr.bf16.gmra.mxu0 %v3620
      %v3744 = vpop.f32.mrf.mxu0
      %v3745 = vadd.f32 0.0, %v3744
      %v3746 = vpop.f32.mrf.mxu0
      %v3747 = vpop.f32.mrf.mxu0
      %v3748 = vadd.f32 0.0, %v3747
      %v3749 = vpop.f32.mrf.mxu0
      %3750 = vmatprep.mubr.bf16.mxu0 0
      %3751 = vmatmul.mubr.bf16.gmra.mxu0 %v3623
      %v3752 = vpop.f32.mrf.mxu0
      %v3753 = vadd.f32 0.0, %v3752
      %v3754 = vpop.f32.mrf.mxu0
      %v3755 = vpop.f32.mrf.mxu0
      %v3756 = vadd.f32 0.0, %v3755
      %v3757 = vpop.f32.mrf.mxu0
      %3758 = vmatprep.mubr.bf16.mxu0 0
      %3759 = vmatmul.mubr.bf16.gmra.mxu0 %v3626
      %v3760 = vpop.f32.mrf.mxu0
      %v3761 = vadd.f32 0.0, %v3760
      %v3762 = vpop.f32.mrf.mxu0
      %v3763 = vpop.f32.mrf.mxu0
      %v3764 = vadd.f32 0.0, %v3763
      %v3765 = vpop.f32.mrf.mxu0
      %3766 = vmatprep.mubr.bf16.mxu0 0
      %3767 = vmatmul.mubr.bf16.gmra.mxu0 %v3629
      %v3768 = vpop.f32.mrf.mxu0
      %v3769 = vadd.f32 0.0, %v3768
      %v3770 = vpop.f32.mrf.mxu0
      %v3771 = vpop.f32.mrf.mxu0
      %v3772 = vadd.f32 0.0, %v3771
      %v3773 = vpop.f32.mrf.mxu0
      %3774 = vmatprep.mubr.bf16.mxu0 0
      %3775 = vmatmul.mubr.bf16.gmra.mxu0 %v3632
      %v3776 = vpop.f32.mrf.mxu0
      %v3777 = vadd.f32 0.0, %v3776
      %v3778 = vpop.f32.mrf.mxu0
      %v3779 = vpop.f32.mrf.mxu0
      %v3780 = vadd.f32 0.0, %v3779
      %v3781 = vpop.f32.mrf.mxu0
      %3782 = vmatprep.mubr.bf16.mxu0 0
      %3783 = vmatmul.mubr.bf16.gmra.mxu0 %v3635
      %v3784 = vpop.f32.mrf.mxu0
      %v3785 = vadd.f32 0.0, %v3784
      %v3786 = vpop.f32.mrf.mxu0
      %v3787 = vpop.f32.mrf.mxu0
      %v3788 = vadd.f32 0.0, %v3787
      %v3789 = vpop.f32.mrf.mxu0
      %3790 = vmatprep.mubr.bf16.mxu0 0
      %3791 = vmatmul.mubr.bf16.gmra.mxu0 %v3638
      %v3792 = vpop.f32.mrf.mxu0
      %v3793 = vadd.f32 0.0, %v3792
      %v3794 = vpop.f32.mrf.mxu0
      %v3795 = vpop.f32.mrf.mxu0
      %v3796 = vadd.f32 0.0, %v3795
      %v3797 = vpop.f32.mrf.mxu0
      %3798 = vmatprep.mubr.bf16.mxu0 0
      %3799 = vmatmul.mubr.bf16.gmra.mxu0 %v3641
      %v3800 = vpop.f32.mrf.mxu0
      %v3801 = vadd.f32 0.0, %v3800
      %v3802 = vpop.f32.mrf.mxu0
      %v3803 = vpop.f32.mrf.mxu0
      %v3804 = vadd.f32 0.0, %v3803
      %v3805 = vpop.f32.mrf.mxu0
      %3806 = vdwg.mxu0
      %v3807 = vadd.f32 %v3419, %v3681
      %v3808 = vadd.f32 %v3422, %v3684
      %v3809 = vadd.f32 %v3427, %v3689
      %v3810 = vadd.f32 %v3430, %v3692
      %v3811 = vadd.f32 %v3435, %v3697
      %v3812 = vadd.f32 %v3438, %v3700
      %v3813 = vadd.f32 %v3443, %v3705
      %v3814 = vadd.f32 %v3446, %v3708
      %v3815 = vadd.f32 %v3451, %v3713
      %v3816 = vadd.f32 %v3454, %v3716
      %v3817 = vadd.f32 %v3459, %v3721
      %v3818 = vadd.f32 %v3462, %v3724
      %v3819 = vadd.f32 %v3467, %v3729
      %v3820 = vadd.f32 %v3470, %v3732
      %v3821 = vadd.f32 %v3475, %v3737
      %v3822 = vadd.f32 %v3478, %v3740
      %v3823 = vadd.f32 %v3483, %v3745
      %v3824 = vadd.f32 %v3486, %v3748
      %v3825 = vadd.f32 %v3491, %v3753
      %v3826 = vadd.f32 %v3494, %v3756
      %v3827 = vadd.f32 %v3499, %v3761
      %v3828 = vadd.f32 %v3502, %v3764
      %v3829 = vadd.f32 %v3507, %v3769
      %v3830 = vadd.f32 %v3510, %v3772
      %v3831 = vadd.f32 %v3515, %v3777
      %v3832 = vadd.f32 %v3518, %v3780
      %v3833 = vadd.f32 %v3523, %v3785
      %v3834 = vadd.f32 %v3526, %v3788
      %v3835 = vadd.f32 %v3531, %v3793
      %v3836 = vadd.f32 %v3534, %v3796
      %v3837 = vadd.f32 %v3539, %v3801
      %v3838 = vadd.f32 %v3542, %v3804
      %v3839 = vld [vmem:[%s2988] sm:$0xff]
      %v3840 = vld [vmem:[%s2988 + $0x8] sm:$0xff]
      %v3841 = vld [vmem:[%s2988 + $0x18] sm:$0xff]
      %v3842 = vld [vmem:[%s2988 + $0x20] sm:$0xff]
      %v3843 = vld [vmem:[%s2988 + $0x30] sm:$0xff]
      %v3844 = vld [vmem:[%s2988 + $0x38] sm:$0xff]
      %v3845 = vld [vmem:[%s2988 + $0x48] sm:$0xff]
      %v3846 = vld [vmem:[%s2988 + $0x50] sm:$0xff]
      %v3847 = vld [vmem:[%s2988 + $0x60] sm:$0xff]
      %v3848 = vld [vmem:[%s2988 + $0x68] sm:$0xff]
      %v3849 = vld [vmem:[%s2988 + $0x78] sm:$0xff]
      %v3850 = vld [vmem:[%s2988 + $0x80] sm:$0xff]
      %v3851 = vld [vmem:[%s2988 + $0x90] sm:$0xff]
      %v3852 = vld [vmem:[%s2988 + $0x98] sm:$0xff]
      %v3853 = vld [vmem:[%s2988 + $0xa8] sm:$0xff]
      %v3854 = vld [vmem:[%s2988 + $0xb0] sm:$0xff]
      %v3855 = vld [vmem:[%s2988 + $0xc0] sm:$0xff]
      %v3856 = vld [vmem:[%s2988 + $0xc8] sm:$0xff]
      %v3857 = vld [vmem:[%s2988 + $0xd8] sm:$0xff]
      %v3858 = vld [vmem:[%s2988 + $0xe0] sm:$0xff]
      %v3859 = vld [vmem:[%s2988 + $0xf0] sm:$0xff]
      %v3860 = vld [vmem:[%s2988 + $0xf8] sm:$0xff]
      %v3861 = vld [vmem:[%s2988 + $0x108] sm:$0xff]
      %v3862 = vld [vmem:[%s2988 + $0x110] sm:$0xff]
      %v3863 = vld [vmem:[%s2988 + $0x120] sm:$0xff]
      %v3864 = vld [vmem:[%s2988 + $0x128] sm:$0xff]
      %v3865 = vld [vmem:[%s2988 + $0x138] sm:$0xff]
      %v3866 = vld [vmem:[%s2988 + $0x140] sm:$0xff]
      %v3867 = vld [vmem:[%s2988 + $0x150] sm:$0xff]
      %v3868 = vld [vmem:[%s2988 + $0x158] sm:$0xff]
      %v3869 = vld [vmem:[%s2988 + $0x168] sm:$0xff]
      %v3870 = vld [vmem:[%s2988 + $0x170] sm:$0xff]
      %v3871 = vpack.c.bf16 %v3840, %v3839
      %v3872 = vpack.c.bf16 %v3842, %v3841
      %v3873 = vpack.c.bf16 %v3844, %v3843
      %v3874 = vpack.c.bf16 %v3846, %v3845
      %v3875 = vpack.c.bf16 %v3848, %v3847
      %v3876 = vpack.c.bf16 %v3850, %v3849
      %v3877 = vpack.c.bf16 %v3852, %v3851
      %v3878 = vpack.c.bf16 %v3854, %v3853
      %v3879 = vpack.c.bf16 %v3856, %v3855
      %v3880 = vpack.c.bf16 %v3858, %v3857
      %v3881 = vpack.c.bf16 %v3860, %v3859
      %v3882 = vpack.c.bf16 %v3862, %v3861
      %v3883 = vpack.c.bf16 %v3864, %v3863
      %v3884 = vpack.c.bf16 %v3866, %v3865
      %v3885 = vpack.c.bf16 %v3868, %v3867
      %v3886 = vpack.c.bf16 %v3870, %v3869
      %s3887 = scalar_lea.vmem %s4, 12
      %v3888 = vld [vmem:[%s3887] sm:$0xf]
      %v3890 = vsel %vm2932, %v3871, 0
      %v3893 = vsel %vm2932, %v3872, 0
      %v3896 = vsel %vm2932, %v3873, 0
      %v3899 = vsel %vm2932, %v3874, 0
      %v3902 = vsel %vm2932, %v3875, 0
      %v3905 = vsel %vm2932, %v3876, 0
      %v3908 = vsel %vm2932, %v3877, 0
      %v3911 = vsel %vm2932, %v3878, 0
      %v3914 = vsel %vm2932, %v3879, 0
      %v3917 = vsel %vm2932, %v3880, 0
      %v3920 = vsel %vm2932, %v3881, 0
      %v3923 = vsel %vm2932, %v3882, 0
      %v3926 = vsel %vm2932, %v3883, 0
      %v3929 = vsel %vm2932, %v3884, 0
      %v3932 = vsel %vm2932, %v3885, 0
      %v3935 = vsel %vm2932, %v3886, 0
      %v3938 = vsel %vm3168, %v3888, 0
      %3940 = vmatprep.subr.bf16.mxu0 0
      %3941 = vmatpush1.bf16.msra.mxu0 0
      %3942 = vmatprep.subr.bf16.mxu0 0
      %3943 = vmatpush1.bf16.msra.mxu0 0
      %3944 = vmatprep.subr.bf16.mxu0 0
      %3945 = vmatpush1.bf16.msra.mxu0 0
      %3946 = vmatprep.subr.bf16.mxu0 0
      %3947 = vmatpush1.bf16.msra.mxu0 0
      %3948 = vmatprep.subr.bf16.mxu0 0
      %3949 = vmatpush1.bf16.msra.mxu0 0
      %3950 = vmatprep.subr.bf16.mxu0 0
      %3951 = vmatpush1.bf16.msra.mxu0 0
      %3952 = vmatprep.subr.bf16.mxu0 0
      %3953 = vmatpush1.bf16.msra.mxu0 0
      %3954 = vmatprep.subr.bf16.mxu0 0
      %3955 = vmatpush1.bf16.msra.mxu0 %v3938
      %3956 = vmatprep.subr.bf16.mxu0 0
      %3957 = vmatpush2.bf16.msra.mxu0 0
      %3958 = vmatprep.subr.bf16.mxu0 0
      %3959 = vmatpush2.bf16.msra.mxu0 0
      %3960 = vmatprep.subr.bf16.mxu0 0
      %3961 = vmatpush2.bf16.msra.mxu0 0
      %3962 = vmatprep.subr.bf16.mxu0 0
      %3963 = vmatpush2.bf16.msra.mxu0 0
      %3964 = vmatprep.subr.bf16.mxu0 0
      %3965 = vmatpush2.bf16.msra.mxu0 0
      %3966 = vmatprep.subr.bf16.mxu0 0
      %3967 = vmatpush2.bf16.msra.mxu0 0
      %3968 = vmatprep.subr.bf16.mxu0 0
      %3969 = vmatpush2.bf16.msra.mxu0 0
      %3970 = vmatprep.subr.bf16.mxu0 0
      %3971 = vmatpush2.bf16.msra.mxu0 0
      %3972 = vmatprep.mubr.bf16.mxu0 0
      %3973 = vmatmul.mubr.bf16.gmra.mxu0 %v3890
      %v3974 = vpop.f32.mrf.mxu0
      %v3975 = vadd.f32 0.0, %v3974
      %v3976 = vpop.f32.mrf.mxu0
      %v3977 = vpop.f32.mrf.mxu0
      %v3978 = vadd.f32 0.0, %v3977
      %v3979 = vpop.f32.mrf.mxu0
      %3980 = vmatprep.mubr.bf16.mxu0 0
      %3981 = vmatmul.mubr.bf16.gmra.mxu0 %v3893
      %v3982 = vpop.f32.mrf.mxu0
      %v3983 = vadd.f32 0.0, %v3982
      %v3984 = vpop.f32.mrf.mxu0
      %v3985 = vpop.f32.mrf.mxu0
      %v3986 = vadd.f32 0.0, %v3985
      %v3987 = vpop.f32.mrf.mxu0
      %3988 = vmatprep.mubr.bf16.mxu0 0
      %3989 = vmatmul.mubr.bf16.gmra.mxu0 %v3896
      %v3990 = vpop.f32.mrf.mxu0
      %v3991 = vadd.f32 0.0, %v3990
      %v3992 = vpop.f32.mrf.mxu0
      %v3993 = vpop.f32.mrf.mxu0
      %v3994 = vadd.f32 0.0, %v3993
      %v3995 = vpop.f32.mrf.mxu0
      %3996 = vmatprep.mubr.bf16.mxu0 0
      %3997 = vmatmul.mubr.bf16.gmra.mxu0 %v3899
      %v3998 = vpop.f32.mrf.mxu0
      %v3999 = vadd.f32 0.0, %v3998
      %v4000 = vpop.f32.mrf.mxu0
      %v4001 = vpop.f32.mrf.mxu0
      %v4002 = vadd.f32 0.0, %v4001
      %v4003 = vpop.f32.mrf.mxu0
      %4004 = vmatprep.mubr.bf16.mxu0 0
      %4005 = vmatmul.mubr.bf16.gmra.mxu0 %v3902
      %v4006 = vpop.f32.mrf.mxu0
      %v4007 = vadd.f32 0.0, %v4006
      %v4008 = vpop.f32.mrf.mxu0
      %v4009 = vpop.f32.mrf.mxu0
      %v4010 = vadd.f32 0.0, %v4009
      %v4011 = vpop.f32.mrf.mxu0
      %4012 = vmatprep.mubr.bf16.mxu0 0
      %4013 = vmatmul.mubr.bf16.gmra.mxu0 %v3905
      %v4014 = vpop.f32.mrf.mxu0
      %v4015 = vadd.f32 0.0, %v4014
      %v4016 = vpop.f32.mrf.mxu0
      %v4017 = vpop.f32.mrf.mxu0
      %v4018 = vadd.f32 0.0, %v4017
      %v4019 = vpop.f32.mrf.mxu0
      %4020 = vmatprep.mubr.bf16.mxu0 0
      %4021 = vmatmul.mubr.bf16.gmra.mxu0 %v3908
      %v4022 = vpop.f32.mrf.mxu0
      %v4023 = vadd.f32 0.0, %v4022
      %v4024 = vpop.f32.mrf.mxu0
      %v4025 = vpop.f32.mrf.mxu0
      %v4026 = vadd.f32 0.0, %v4025
      %v4027 = vpop.f32.mrf.mxu0
      %4028 = vmatprep.mubr.bf16.mxu0 0
      %4029 = vmatmul.mubr.bf16.gmra.mxu0 %v3911
      %v4030 = vpop.f32.mrf.mxu0
      %v4031 = vadd.f32 0.0, %v4030
      %v4032 = vpop.f32.mrf.mxu0
      %v4033 = vpop.f32.mrf.mxu0
      %v4034 = vadd.f32 0.0, %v4033
      %v4035 = vpop.f32.mrf.mxu0
      %4036 = vmatprep.mubr.bf16.mxu0 0
      %4037 = vmatmul.mubr.bf16.gmra.mxu0 %v3914
      %v4038 = vpop.f32.mrf.mxu0
      %v4039 = vadd.f32 0.0, %v4038
      %v4040 = vpop.f32.mrf.mxu0
      %v4041 = vpop.f32.mrf.mxu0
      %v4042 = vadd.f32 0.0, %v4041
      %v4043 = vpop.f32.mrf.mxu0
      %4044 = vmatprep.mubr.bf16.mxu0 0
      %4045 = vmatmul.mubr.bf16.gmra.mxu0 %v3917
      %v4046 = vpop.f32.mrf.mxu0
      %v4047 = vadd.f32 0.0, %v4046
      %v4048 = vpop.f32.mrf.mxu0
      %v4049 = vpop.f32.mrf.mxu0
      %v4050 = vadd.f32 0.0, %v4049
      %v4051 = vpop.f32.mrf.mxu0
      %4052 = vmatprep.mubr.bf16.mxu0 0
      %4053 = vmatmul.mubr.bf16.gmra.mxu0 %v3920
      %v4054 = vpop.f32.mrf.mxu0
      %v4055 = vadd.f32 0.0, %v4054
      %v4056 = vpop.f32.mrf.mxu0
      %v4057 = vpop.f32.mrf.mxu0
      %v4058 = vadd.f32 0.0, %v4057
      %v4059 = vpop.f32.mrf.mxu0
      %4060 = vmatprep.mubr.bf16.mxu0 0
      %4061 = vmatmul.mubr.bf16.gmra.mxu0 %v3923
      %v4062 = vpop.f32.mrf.mxu0
      %v4063 = vadd.f32 0.0, %v4062
      %v4064 = vpop.f32.mrf.mxu0
      %v4065 = vpop.f32.mrf.mxu0
      %v4066 = vadd.f32 0.0, %v4065
      %v4067 = vpop.f32.mrf.mxu0
      %4068 = vmatprep.mubr.bf16.mxu0 0
      %4069 = vmatmul.mubr.bf16.gmra.mxu0 %v3926
      %v4070 = vpop.f32.mrf.mxu0
      %v4071 = vadd.f32 0.0, %v4070
      %v4072 = vpop.f32.mrf.mxu0
      %v4073 = vpop.f32.mrf.mxu0
      %v4074 = vadd.f32 0.0, %v4073
      %v4075 = vpop.f32.mrf.mxu0
      %4076 = vmatprep.mubr.bf16.mxu0 0
      %4077 = vmatmul.mubr.bf16.gmra.mxu0 %v3929
      %v4078 = vpop.f32.mrf.mxu0
      %v4079 = vadd.f32 0.0, %v4078
      %v4080 = vpop.f32.mrf.mxu0
      %v4081 = vpop.f32.mrf.mxu0
      %v4082 = vadd.f32 0.0, %v4081
      %v4083 = vpop.f32.mrf.mxu0
      %4084 = vmatprep.mubr.bf16.mxu0 0
      %4085 = vmatmul.mubr.bf16.gmra.mxu0 %v3932
      %v4086 = vpop.f32.mrf.mxu0
      %v4087 = vadd.f32 0.0, %v4086
      %v4088 = vpop.f32.mrf.mxu0
      %v4089 = vpop.f32.mrf.mxu0
      %v4090 = vadd.f32 0.0, %v4089
      %v4091 = vpop.f32.mrf.mxu0
      %4092 = vmatprep.mubr.bf16.mxu0 0
      %4093 = vmatmul.mubr.bf16.gmra.mxu0 %v3935
      %v4094 = vpop.f32.mrf.mxu0
      %v4095 = vadd.f32 0.0, %v4094
      %v4096 = vpop.f32.mrf.mxu0
      %v4097 = vpop.f32.mrf.mxu0
      %v4098 = vadd.f32 0.0, %v4097
      %v4099 = vpop.f32.mrf.mxu0
      %4100 = vdwg.mxu0
      %v4101 = vadd.f32 %v3807, %v3975
      %v4102 = vadd.f32 %v3808, %v3978
      %v4103 = vadd.f32 %v3809, %v3983
      %v4104 = vadd.f32 %v3810, %v3986
      %v4105 = vadd.f32 %v3811, %v3991
      %v4106 = vadd.f32 %v3812, %v3994
      %v4107 = vadd.f32 %v3813, %v3999
      %v4108 = vadd.f32 %v3814, %v4002
      %v4109 = vadd.f32 %v3815, %v4007
      %v4110 = vadd.f32 %v3816, %v4010
      %v4111 = vadd.f32 %v3817, %v4015
      %v4112 = vadd.f32 %v3818, %v4018
      %v4113 = vadd.f32 %v3819, %v4023
      %v4114 = vadd.f32 %v3820, %v4026
      %v4115 = vadd.f32 %v3821, %v4031
      %v4116 = vadd.f32 %v3822, %v4034
      %v4117 = vadd.f32 %v3823, %v4039
      %v4118 = vadd.f32 %v3824, %v4042
      %v4119 = vadd.f32 %v3825, %v4047
      %v4120 = vadd.f32 %v3826, %v4050
      %v4121 = vadd.f32 %v3827, %v4055
      %v4122 = vadd.f32 %v3828, %v4058
      %v4123 = vadd.f32 %v3829, %v4063
      %v4124 = vadd.f32 %v3830, %v4066
      %v4125 = vadd.f32 %v3831, %v4071
      %v4126 = vadd.f32 %v3832, %v4074
      %v4127 = vadd.f32 %v3833, %v4079
      %v4128 = vadd.f32 %v3834, %v4082
      %v4129 = vadd.f32 %v3835, %v4087
      %v4130 = vadd.f32 %v3836, %v4090
      %v4131 = vadd.f32 %v3837, %v4095
      %v4132 = vadd.f32 %v3838, %v4098
      %v4133 = vld [vmem:[%s2988 + $0x1] sm:$0xff]
      %v4134 = vld [vmem:[%s2988 + $0x9] sm:$0xff]
      %v4135 = vld [vmem:[%s2988 + $0x19] sm:$0xff]
      %v4136 = vld [vmem:[%s2988 + $0x21] sm:$0xff]
      %v4137 = vld [vmem:[%s2988 + $0x31] sm:$0xff]
      %v4138 = vld [vmem:[%s2988 + $0x39] sm:$0xff]
      %v4139 = vld [vmem:[%s2988 + $0x49] sm:$0xff]
      %v4140 = vld [vmem:[%s2988 + $0x51] sm:$0xff]
      %v4141 = vld [vmem:[%s2988 + $0x61] sm:$0xff]
      %v4142 = vld [vmem:[%s2988 + $0x69] sm:$0xff]
      %v4143 = vld [vmem:[%s2988 + $0x79] sm:$0xff]
      %v4144 = vld [vmem:[%s2988 + $0x81] sm:$0xff]
      %v4145 = vld [vmem:[%s2988 + $0x91] sm:$0xff]
      %v4146 = vld [vmem:[%s2988 + $0x99] sm:$0xff]
      %v4147 = vld [vmem:[%s2988 + $0xa9] sm:$0xff]
      %v4148 = vld [vmem:[%s2988 + $0xb1] sm:$0xff]
      %v4149 = vld [vmem:[%s2988 + $0xc1] sm:$0xff]
      %v4150 = vld [vmem:[%s2988 + $0xc9] sm:$0xff]
      %v4151 = vld [vmem:[%s2988 + $0xd9] sm:$0xff]
      %v4152 = vld [vmem:[%s2988 + $0xe1] sm:$0xff]
      %v4153 = vld [vmem:[%s2988 + $0xf1] sm:$0xff]
      %v4154 = vld [vmem:[%s2988 + $0xf9] sm:$0xff]
      %v4155 = vld [vmem:[%s2988 + $0x109] sm:$0xff]
      %v4156 = vld [vmem:[%s2988 + $0x111] sm:$0xff]
      %v4157 = vld [vmem:[%s2988 + $0x121] sm:$0xff]
      %v4158 = vld [vmem:[%s2988 + $0x129] sm:$0xff]
      %v4159 = vld [vmem:[%s2988 + $0x139] sm:$0xff]
      %v4160 = vld [vmem:[%s2988 + $0x141] sm:$0xff]
      %v4161 = vld [vmem:[%s2988 + $0x151] sm:$0xff]
      %v4162 = vld [vmem:[%s2988 + $0x159] sm:$0xff]
      %v4163 = vld [vmem:[%s2988 + $0x169] sm:$0xff]
      %v4164 = vld [vmem:[%s2988 + $0x171] sm:$0xff]
      %v4165 = vpack.c.bf16 %v4134, %v4133
      %v4166 = vpack.c.bf16 %v4136, %v4135
      %v4167 = vpack.c.bf16 %v4138, %v4137
      %v4168 = vpack.c.bf16 %v4140, %v4139
      %v4169 = vpack.c.bf16 %v4142, %v4141
      %v4170 = vpack.c.bf16 %v4144, %v4143
      %v4171 = vpack.c.bf16 %v4146, %v4145
      %v4172 = vpack.c.bf16 %v4148, %v4147
      %v4173 = vpack.c.bf16 %v4150, %v4149
      %v4174 = vpack.c.bf16 %v4152, %v4151
      %v4175 = vpack.c.bf16 %v4154, %v4153
      %v4176 = vpack.c.bf16 %v4156, %v4155
      %v4177 = vpack.c.bf16 %v4158, %v4157
      %v4178 = vpack.c.bf16 %v4160, %v4159
      %v4179 = vpack.c.bf16 %v4162, %v4161
      %v4180 = vpack.c.bf16 %v4164, %v4163
      %s4181 = scalar_lea.vmem %s4, 16
      %v4182 = vld [vmem:[%s4181] sm:$0xf]
      %v4184 = vsel %vm2932, %v4165, 0
      %v4187 = vsel %vm2932, %v4166, 0
      %v4190 = vsel %vm2932, %v4167, 0
      %v4193 = vsel %vm2932, %v4168, 0
      %v4196 = vsel %vm2932, %v4169, 0
      %v4199 = vsel %vm2932, %v4170, 0
      %v4202 = vsel %vm2932, %v4171, 0
      %v4205 = vsel %vm2932, %v4172, 0
      %v4208 = vsel %vm2932, %v4173, 0
      %v4211 = vsel %vm2932, %v4174, 0
      %v4214 = vsel %vm2932, %v4175, 0
      %v4217 = vsel %vm2932, %v4176, 0
      %v4220 = vsel %vm2932, %v4177, 0
      %v4223 = vsel %vm2932, %v4178, 0
      %v4226 = vsel %vm2932, %v4179, 0
      %v4229 = vsel %vm2932, %v4180, 0
      %v4232 = vsel %vm3168, %v4182, 0
      %4234 = vmatprep.subr.bf16.mxu0 0
      %4235 = vmatpush1.bf16.msra.mxu0 0
      %4236 = vmatprep.subr.bf16.mxu0 0
      %4237 = vmatpush1.bf16.msra.mxu0 0
      %4238 = vmatprep.subr.bf16.mxu0 0
      %4239 = vmatpush1.bf16.msra.mxu0 0
      %4240 = vmatprep.subr.bf16.mxu0 0
      %4241 = vmatpush1.bf16.msra.mxu0 0
      %4242 = vmatprep.subr.bf16.mxu0 0
      %4243 = vmatpush1.bf16.msra.mxu0 0
      %4244 = vmatprep.subr.bf16.mxu0 0
      %4245 = vmatpush1.bf16.msra.mxu0 0
      %4246 = vmatprep.subr.bf16.mxu0 0
      %4247 = vmatpush1.bf16.msra.mxu0 0
      %4248 = vmatprep.subr.bf16.mxu0 0
      %4249 = vmatpush1.bf16.msra.mxu0 %v4232
      %4250 = vmatprep.subr.bf16.mxu0 0
      %4251 = vmatpush2.bf16.msra.mxu0 0
      %4252 = vmatprep.subr.bf16.mxu0 0
      %4253 = vmatpush2.bf16.msra.mxu0 0
      %4254 = vmatprep.subr.bf16.mxu0 0
      %4255 = vmatpush2.bf16.msra.mxu0 0
      %4256 = vmatprep.subr.bf16.mxu0 0
      %4257 = vmatpush2.bf16.msra.mxu0 0
      %4258 = vmatprep.subr.bf16.mxu0 0
      %4259 = vmatpush2.bf16.msra.mxu0 0
      %4260 = vmatprep.subr.bf16.mxu0 0
      %4261 = vmatpush2.bf16.msra.mxu0 0
      %4262 = vmatprep.subr.bf16.mxu0 0
      %4263 = vmatpush2.bf16.msra.mxu0 0
      %4264 = vmatprep.subr.bf16.mxu0 0
      %4265 = vmatpush2.bf16.msra.mxu0 0
      %4266 = vmatprep.mubr.bf16.mxu0 0
      %4267 = vmatmul.mubr.bf16.gmra.mxu0 %v4184
      %v4268 = vpop.f32.mrf.mxu0
      %v4269 = vadd.f32 0.0, %v4268
      %v4270 = vpop.f32.mrf.mxu0
      %v4271 = vpop.f32.mrf.mxu0
      %v4272 = vadd.f32 0.0, %v4271
      %v4273 = vpop.f32.mrf.mxu0
      %4274 = vmatprep.mubr.bf16.mxu0 0
      %4275 = vmatmul.mubr.bf16.gmra.mxu0 %v4187
      %v4276 = vpop.f32.mrf.mxu0
      %v4277 = vadd.f32 0.0, %v4276
      %v4278 = vpop.f32.mrf.mxu0
      %v4279 = vpop.f32.mrf.mxu0
      %v4280 = vadd.f32 0.0, %v4279
      %v4281 = vpop.f32.mrf.mxu0
      %4282 = vmatprep.mubr.bf16.mxu0 0
      %4283 = vmatmul.mubr.bf16.gmra.mxu0 %v4190
      %v4284 = vpop.f32.mrf.mxu0
      %v4285 = vadd.f32 0.0, %v4284
      %v4286 = vpop.f32.mrf.mxu0
      %v4287 = vpop.f32.mrf.mxu0
      %v4288 = vadd.f32 0.0, %v4287
      %v4289 = vpop.f32.mrf.mxu0
      %4290 = vmatprep.mubr.bf16.mxu0 0
      %4291 = vmatmul.mubr.bf16.gmra.mxu0 %v4193
      %v4292 = vpop.f32.mrf.mxu0
      %v4293 = vadd.f32 0.0, %v4292
      %v4294 = vpop.f32.mrf.mxu0
      %v4295 = vpop.f32.mrf.mxu0
      %v4296 = vadd.f32 0.0, %v4295
      %v4297 = vpop.f32.mrf.mxu0
      %4298 = vmatprep.mubr.bf16.mxu0 0
      %4299 = vmatmul.mubr.bf16.gmra.mxu0 %v4196
      %v4300 = vpop.f32.mrf.mxu0
      %v4301 = vadd.f32 0.0, %v4300
      %v4302 = vpop.f32.mrf.mxu0
      %v4303 = vpop.f32.mrf.mxu0
      %v4304 = vadd.f32 0.0, %v4303
      %v4305 = vpop.f32.mrf.mxu0
      %4306 = vmatprep.mubr.bf16.mxu0 0
      %4307 = vmatmul.mubr.bf16.gmra.mxu0 %v4199
      %v4308 = vpop.f32.mrf.mxu0
      %v4309 = vadd.f32 0.0, %v4308
      %v4310 = vpop.f32.mrf.mxu0
      %v4311 = vpop.f32.mrf.mxu0
      %v4312 = vadd.f32 0.0, %v4311
      %v4313 = vpop.f32.mrf.mxu0
      %4314 = vmatprep.mubr.bf16.mxu0 0
      %4315 = vmatmul.mubr.bf16.gmra.mxu0 %v4202
      %v4316 = vpop.f32.mrf.mxu0
      %v4317 = vadd.f32 0.0, %v4316
      %v4318 = vpop.f32.mrf.mxu0
      %v4319 = vpop.f32.mrf.mxu0
      %v4320 = vadd.f32 0.0, %v4319
      %v4321 = vpop.f32.mrf.mxu0
      %4322 = vmatprep.mubr.bf16.mxu0 0
      %4323 = vmatmul.mubr.bf16.gmra.mxu0 %v4205
      %v4324 = vpop.f32.mrf.mxu0
      %v4325 = vadd.f32 0.0, %v4324
      %v4326 = vpop.f32.mrf.mxu0
      %v4327 = vpop.f32.mrf.mxu0
      %v4328 = vadd.f32 0.0, %v4327
      %v4329 = vpop.f32.mrf.mxu0
      %4330 = vmatprep.mubr.bf16.mxu0 0
      %4331 = vmatmul.mubr.bf16.gmra.mxu0 %v4208
      %v4332 = vpop.f32.mrf.mxu0
      %v4333 = vadd.f32 0.0, %v4332
      %v4334 = vpop.f32.mrf.mxu0
      %v4335 = vpop.f32.mrf.mxu0
      %v4336 = vadd.f32 0.0, %v4335
      %v4337 = vpop.f32.mrf.mxu0
      %4338 = vmatprep.mubr.bf16.mxu0 0
      %4339 = vmatmul.mubr.bf16.gmra.mxu0 %v4211
      %v4340 = vpop.f32.mrf.mxu0
      %v4341 = vadd.f32 0.0, %v4340
      %v4342 = vpop.f32.mrf.mxu0
      %v4343 = vpop.f32.mrf.mxu0
      %v4344 = vadd.f32 0.0, %v4343
      %v4345 = vpop.f32.mrf.mxu0
      %4346 = vmatprep.mubr.bf16.mxu0 0
      %4347 = vmatmul.mubr.bf16.gmra.mxu0 %v4214
      %v4348 = vpop.f32.mrf.mxu0
      %v4349 = vadd.f32 0.0, %v4348
      %v4350 = vpop.f32.mrf.mxu0
      %v4351 = vpop.f32.mrf.mxu0
      %v4352 = vadd.f32 0.0, %v4351
      %v4353 = vpop.f32.mrf.mxu0
      %4354 = vmatprep.mubr.bf16.mxu0 0
      %4355 = vmatmul.mubr.bf16.gmra.mxu0 %v4217
      %v4356 = vpop.f32.mrf.mxu0
      %v4357 = vadd.f32 0.0, %v4356
      %v4358 = vpop.f32.mrf.mxu0
      %v4359 = vpop.f32.mrf.mxu0
      %v4360 = vadd.f32 0.0, %v4359
      %v4361 = vpop.f32.mrf.mxu0
      %4362 = vmatprep.mubr.bf16.mxu0 0
      %4363 = vmatmul.mubr.bf16.gmra.mxu0 %v4220
      %v4364 = vpop.f32.mrf.mxu0
      %v4365 = vadd.f32 0.0, %v4364
      %v4366 = vpop.f32.mrf.mxu0
      %v4367 = vpop.f32.mrf.mxu0
      %v4368 = vadd.f32 0.0, %v4367
      %v4369 = vpop.f32.mrf.mxu0
      %4370 = vmatprep.mubr.bf16.mxu0 0
      %4371 = vmatmul.mubr.bf16.gmra.mxu0 %v4223
      %v4372 = vpop.f32.mrf.mxu0
      %v4373 = vadd.f32 0.0, %v4372
      %v4374 = vpop.f32.mrf.mxu0
      %v4375 = vpop.f32.mrf.mxu0
      %v4376 = vadd.f32 0.0, %v4375
      %v4377 = vpop.f32.mrf.mxu0
      %4378 = vmatprep.mubr.bf16.mxu0 0
      %4379 = vmatmul.mubr.bf16.gmra.mxu0 %v4226
      %v4380 = vpop.f32.mrf.mxu0
      %v4381 = vadd.f32 0.0, %v4380
      %v4382 = vpop.f32.mrf.mxu0
      %v4383 = vpop.f32.mrf.mxu0
      %v4384 = vadd.f32 0.0, %v4383
      %v4385 = vpop.f32.mrf.mxu0
      %4386 = vmatprep.mubr.bf16.mxu0 0
      %4387 = vmatmul.mubr.bf16.gmra.mxu0 %v4229
      %v4388 = vpop.f32.mrf.mxu0
      %v4389 = vadd.f32 0.0, %v4388
      %v4390 = vpop.f32.mrf.mxu0
      %v4391 = vpop.f32.mrf.mxu0
      %v4392 = vadd.f32 0.0, %v4391
      %v4393 = vpop.f32.mrf.mxu0
      %4394 = vdwg.mxu0
      %v4395 = vadd.f32 %v4101, %v4269
      %v4396 = vadd.f32 %v4102, %v4272
      %v4397 = vadd.f32 %v4103, %v4277
      %v4398 = vadd.f32 %v4104, %v4280
      %v4399 = vadd.f32 %v4105, %v4285
      %v4400 = vadd.f32 %v4106, %v4288
      %v4401 = vadd.f32 %v4107, %v4293
      %v4402 = vadd.f32 %v4108, %v4296
      %v4403 = vadd.f32 %v4109, %v4301
      %v4404 = vadd.f32 %v4110, %v4304
      %v4405 = vadd.f32 %v4111, %v4309
      %v4406 = vadd.f32 %v4112, %v4312
      %v4407 = vadd.f32 %v4113, %v4317
      %v4408 = vadd.f32 %v4114, %v4320
      %v4409 = vadd.f32 %v4115, %v4325
      %v4410 = vadd.f32 %v4116, %v4328
      %v4411 = vadd.f32 %v4117, %v4333
      %v4412 = vadd.f32 %v4118, %v4336
      %v4413 = vadd.f32 %v4119, %v4341
      %v4414 = vadd.f32 %v4120, %v4344
      %v4415 = vadd.f32 %v4121, %v4349
      %v4416 = vadd.f32 %v4122, %v4352
      %v4417 = vadd.f32 %v4123, %v4357
      %v4418 = vadd.f32 %v4124, %v4360
      %v4419 = vadd.f32 %v4125, %v4365
      %v4420 = vadd.f32 %v4126, %v4368
      %v4421 = vadd.f32 %v4127, %v4373
      %v4422 = vadd.f32 %v4128, %v4376
      %v4423 = vadd.f32 %v4129, %v4381
      %v4424 = vadd.f32 %v4130, %v4384
      %v4425 = vadd.f32 %v4131, %v4389
      %v4426 = vadd.f32 %v4132, %v4392
      %v4427 = vld [vmem:[%s2988 + $0x2] sm:$0xff]
      %v4428 = vld [vmem:[%s2988 + $0xa] sm:$0xff]
      %v4429 = vld [vmem:[%s2988 + $0x1a] sm:$0xff]
      %v4430 = vld [vmem:[%s2988 + $0x22] sm:$0xff]
      %v4431 = vld [vmem:[%s2988 + $0x32] sm:$0xff]
      %v4432 = vld [vmem:[%s2988 + $0x3a] sm:$0xff]
      %v4433 = vld [vmem:[%s2988 + $0x4a] sm:$0xff]
      %v4434 = vld [vmem:[%s2988 + $0x52] sm:$0xff]
      %v4435 = vld [vmem:[%s2988 + $0x62] sm:$0xff]
      %v4436 = vld [vmem:[%s2988 + $0x6a] sm:$0xff]
      %v4437 = vld [vmem:[%s2988 + $0x7a] sm:$0xff]
      %v4438 = vld [vmem:[%s2988 + $0x82] sm:$0xff]
      %v4439 = vld [vmem:[%s2988 + $0x92] sm:$0xff]
      %v4440 = vld [vmem:[%s2988 + $0x9a] sm:$0xff]
      %v4441 = vld [vmem:[%s2988 + $0xaa] sm:$0xff]
      %v4442 = vld [vmem:[%s2988 + $0xb2] sm:$0xff]
      %v4443 = vld [vmem:[%s2988 + $0xc2] sm:$0xff]
      %v4444 = vld [vmem:[%s2988 + $0xca] sm:$0xff]
      %v4445 = vld [vmem:[%s2988 + $0xda] sm:$0xff]
      %v4446 = vld [vmem:[%s2988 + $0xe2] sm:$0xff]
      %v4447 = vld [vmem:[%s2988 + $0xf2] sm:$0xff]
      %v4448 = vld [vmem:[%s2988 + $0xfa] sm:$0xff]
      %v4449 = vld [vmem:[%s2988 + $0x10a] sm:$0xff]
      %v4450 = vld [vmem:[%s2988 + $0x112] sm:$0xff]
      %v4451 = vld [vmem:[%s2988 + $0x122] sm:$0xff]
      %v4452 = vld [vmem:[%s2988 + $0x12a] sm:$0xff]
      %v4453 = vld [vmem:[%s2988 + $0x13a] sm:$0xff]
      %v4454 = vld [vmem:[%s2988 + $0x142] sm:$0xff]
      %v4455 = vld [vmem:[%s2988 + $0x152] sm:$0xff]
      %v4456 = vld [vmem:[%s2988 + $0x15a] sm:$0xff]
      %v4457 = vld [vmem:[%s2988 + $0x16a] sm:$0xff]
      %v4458 = vld [vmem:[%s2988 + $0x172] sm:$0xff]
      %v4459 = vpack.c.bf16 %v4428, %v4427
      %v4460 = vpack.c.bf16 %v4430, %v4429
      %v4461 = vpack.c.bf16 %v4432, %v4431
      %v4462 = vpack.c.bf16 %v4434, %v4433
      %v4463 = vpack.c.bf16 %v4436, %v4435
      %v4464 = vpack.c.bf16 %v4438, %v4437
      %v4465 = vpack.c.bf16 %v4440, %v4439
      %v4466 = vpack.c.bf16 %v4442, %v4441
      %v4467 = vpack.c.bf16 %v4444, %v4443
      %v4468 = vpack.c.bf16 %v4446, %v4445
      %v4469 = vpack.c.bf16 %v4448, %v4447
      %v4470 = vpack.c.bf16 %v4450, %v4449
      %v4471 = vpack.c.bf16 %v4452, %v4451
      %v4472 = vpack.c.bf16 %v4454, %v4453
      %v4473 = vpack.c.bf16 %v4456, %v4455
      %v4474 = vpack.c.bf16 %v4458, %v4457
      %s4475 = scalar_lea.vmem %s4, 20
      %v4476 = vld [vmem:[%s4475] sm:$0xf]
      %v4478 = vsel %vm2932, %v4459, 0
      %v4481 = vsel %vm2932, %v4460, 0
      %v4484 = vsel %vm2932, %v4461, 0
      %v4487 = vsel %vm2932, %v4462, 0
      %v4490 = vsel %vm2932, %v4463, 0
      %v4493 = vsel %vm2932, %v4464, 0
      %v4496 = vsel %vm2932, %v4465, 0
      %v4499 = vsel %vm2932, %v4466, 0
      %v4502 = vsel %vm2932, %v4467, 0
      %v4505 = vsel %vm2932, %v4468, 0
      %v4508 = vsel %vm2932, %v4469, 0
      %v4511 = vsel %vm2932, %v4470, 0
      %v4514 = vsel %vm2932, %v4471, 0
      %v4517 = vsel %vm2932, %v4472, 0
      %v4520 = vsel %vm2932, %v4473, 0
      %v4523 = vsel %vm2932, %v4474, 0
      %v4526 = vsel %vm3168, %v4476, 0
      %4528 = vmatprep.subr.bf16.mxu0 0
      %4529 = vmatpush1.bf16.msra.mxu0 0
      %4530 = vmatprep.subr.bf16.mxu0 0
      %4531 = vmatpush1.bf16.msra.mxu0 0
      %4532 = vmatprep.subr.bf16.mxu0 0
      %4533 = vmatpush1.bf16.msra.mxu0 0
      %4534 = vmatprep.subr.bf16.mxu0 0
      %4535 = vmatpush1.bf16.msra.mxu0 0
      %4536 = vmatprep.subr.bf16.mxu0 0
      %4537 = vmatpush1.bf16.msra.mxu0 0
      %4538 = vmatprep.subr.bf16.mxu0 0
      %4539 = vmatpush1.bf16.msra.mxu0 0
      %4540 = vmatprep.subr.bf16.mxu0 0
      %4541 = vmatpush1.bf16.msra.mxu0 0
      %4542 = vmatprep.subr.bf16.mxu0 0
      %4543 = vmatpush1.bf16.msra.mxu0 %v4526
      %4544 = vmatprep.subr.bf16.mxu0 0
      %4545 = vmatpush2.bf16.msra.mxu0 0
      %4546 = vmatprep.subr.bf16.mxu0 0
      %4547 = vmatpush2.bf16.msra.mxu0 0
      %4548 = vmatprep.subr.bf16.mxu0 0
      %4549 = vmatpush2.bf16.msra.mxu0 0
      %4550 = vmatprep.subr.bf16.mxu0 0
      %4551 = vmatpush2.bf16.msra.mxu0 0
      %4552 = vmatprep.subr.bf16.mxu0 0
      %4553 = vmatpush2.bf16.msra.mxu0 0
      %4554 = vmatprep.subr.bf16.mxu0 0
      %4555 = vmatpush2.bf16.msra.mxu0 0
      %4556 = vmatprep.subr.bf16.mxu0 0
      %4557 = vmatpush2.bf16.msra.mxu0 0
      %4558 = vmatprep.subr.bf16.mxu0 0
      %4559 = vmatpush2.bf16.msra.mxu0 0
      %4560 = vmatprep.mubr.bf16.mxu0 0
      %4561 = vmatmul.mubr.bf16.gmra.mxu0 %v4478
      %v4562 = vpop.f32.mrf.mxu0
      %v4563 = vadd.f32 0.0, %v4562
      %v4564 = vpop.f32.mrf.mxu0
      %v4565 = vpop.f32.mrf.mxu0
      %v4566 = vadd.f32 0.0, %v4565
      %v4567 = vpop.f32.mrf.mxu0
      %4568 = vmatprep.mubr.bf16.mxu0 0
      %4569 = vmatmul.mubr.bf16.gmra.mxu0 %v4481
      %v4570 = vpop.f32.mrf.mxu0
      %v4571 = vadd.f32 0.0, %v4570
      %v4572 = vpop.f32.mrf.mxu0
      %v4573 = vpop.f32.mrf.mxu0
      %v4574 = vadd.f32 0.0, %v4573
      %v4575 = vpop.f32.mrf.mxu0
      %4576 = vmatprep.mubr.bf16.mxu0 0
      %4577 = vmatmul.mubr.bf16.gmra.mxu0 %v4484
      %v4578 = vpop.f32.mrf.mxu0
      %v4579 = vadd.f32 0.0, %v4578
      %v4580 = vpop.f32.mrf.mxu0
      %v4581 = vpop.f32.mrf.mxu0
      %v4582 = vadd.f32 0.0, %v4581
      %v4583 = vpop.f32.mrf.mxu0
      %4584 = vmatprep.mubr.bf16.mxu0 0
      %4585 = vmatmul.mubr.bf16.gmra.mxu0 %v4487
      %v4586 = vpop.f32.mrf.mxu0
      %v4587 = vadd.f32 0.0, %v4586
      %v4588 = vpop.f32.mrf.mxu0
      %v4589 = vpop.f32.mrf.mxu0
      %v4590 = vadd.f32 0.0, %v4589
      %v4591 = vpop.f32.mrf.mxu0
      %4592 = vmatprep.mubr.bf16.mxu0 0
      %4593 = vmatmul.mubr.bf16.gmra.mxu0 %v4490
      %v4594 = vpop.f32.mrf.mxu0
      %v4595 = vadd.f32 0.0, %v4594
      %v4596 = vpop.f32.mrf.mxu0
      %v4597 = vpop.f32.mrf.mxu0
      %v4598 = vadd.f32 0.0, %v4597
      %v4599 = vpop.f32.mrf.mxu0
      %4600 = vmatprep.mubr.bf16.mxu0 0
      %4601 = vmatmul.mubr.bf16.gmra.mxu0 %v4493
      %v4602 = vpop.f32.mrf.mxu0
      %v4603 = vadd.f32 0.0, %v4602
      %v4604 = vpop.f32.mrf.mxu0
      %v4605 = vpop.f32.mrf.mxu0
      %v4606 = vadd.f32 0.0, %v4605
      %v4607 = vpop.f32.mrf.mxu0
      %4608 = vmatprep.mubr.bf16.mxu0 0
      %4609 = vmatmul.mubr.bf16.gmra.mxu0 %v4496
      %v4610 = vpop.f32.mrf.mxu0
      %v4611 = vadd.f32 0.0, %v4610
      %v4612 = vpop.f32.mrf.mxu0
      %v4613 = vpop.f32.mrf.mxu0
      %v4614 = vadd.f32 0.0, %v4613
      %v4615 = vpop.f32.mrf.mxu0
      %4616 = vmatprep.mubr.bf16.mxu0 0
      %4617 = vmatmul.mubr.bf16.gmra.mxu0 %v4499
      %v4618 = vpop.f32.mrf.mxu0
      %v4619 = vadd.f32 0.0, %v4618
      %v4620 = vpop.f32.mrf.mxu0
      %v4621 = vpop.f32.mrf.mxu0
      %v4622 = vadd.f32 0.0, %v4621
      %v4623 = vpop.f32.mrf.mxu0
      %4624 = vmatprep.mubr.bf16.mxu0 0
      %4625 = vmatmul.mubr.bf16.gmra.mxu0 %v4502
      %v4626 = vpop.f32.mrf.mxu0
      %v4627 = vadd.f32 0.0, %v4626
      %v4628 = vpop.f32.mrf.mxu0
      %v4629 = vpop.f32.mrf.mxu0
      %v4630 = vadd.f32 0.0, %v4629
      %v4631 = vpop.f32.mrf.mxu0
      %4632 = vmatprep.mubr.bf16.mxu0 0
      %4633 = vmatmul.mubr.bf16.gmra.mxu0 %v4505
      %v4634 = vpop.f32.mrf.mxu0
      %v4635 = vadd.f32 0.0, %v4634
      %v4636 = vpop.f32.mrf.mxu0
      %v4637 = vpop.f32.mrf.mxu0
      %v4638 = vadd.f32 0.0, %v4637
      %v4639 = vpop.f32.mrf.mxu0
      %4640 = vmatprep.mubr.bf16.mxu0 0
      %4641 = vmatmul.mubr.bf16.gmra.mxu0 %v4508
      %v4642 = vpop.f32.mrf.mxu0
      %v4643 = vadd.f32 0.0, %v4642
      %v4644 = vpop.f32.mrf.mxu0
      %v4645 = vpop.f32.mrf.mxu0
      %v4646 = vadd.f32 0.0, %v4645
      %v4647 = vpop.f32.mrf.mxu0
      %4648 = vmatprep.mubr.bf16.mxu0 0
      %4649 = vmatmul.mubr.bf16.gmra.mxu0 %v4511
      %v4650 = vpop.f32.mrf.mxu0
      %v4651 = vadd.f32 0.0, %v4650
      %v4652 = vpop.f32.mrf.mxu0
      %v4653 = vpop.f32.mrf.mxu0
      %v4654 = vadd.f32 0.0, %v4653
      %v4655 = vpop.f32.mrf.mxu0
      %4656 = vmatprep.mubr.bf16.mxu0 0
      %4657 = vmatmul.mubr.bf16.gmra.mxu0 %v4514
      %v4658 = vpop.f32.mrf.mxu0
      %v4659 = vadd.f32 0.0, %v4658
      %v4660 = vpop.f32.mrf.mxu0
      %v4661 = vpop.f32.mrf.mxu0
      %v4662 = vadd.f32 0.0, %v4661
      %v4663 = vpop.f32.mrf.mxu0
      %4664 = vmatprep.mubr.bf16.mxu0 0
      %4665 = vmatmul.mubr.bf16.gmra.mxu0 %v4517
      %v4666 = vpop.f32.mrf.mxu0
      %v4667 = vadd.f32 0.0, %v4666
      %v4668 = vpop.f32.mrf.mxu0
      %v4669 = vpop.f32.mrf.mxu0
      %v4670 = vadd.f32 0.0, %v4669
      %v4671 = vpop.f32.mrf.mxu0
      %4672 = vmatprep.mubr.bf16.mxu0 0
      %4673 = vmatmul.mubr.bf16.gmra.mxu0 %v4520
      %v4674 = vpop.f32.mrf.mxu0
      %v4675 = vadd.f32 0.0, %v4674
      %v4676 = vpop.f32.mrf.mxu0
      %v4677 = vpop.f32.mrf.mxu0
      %v4678 = vadd.f32 0.0, %v4677
      %v4679 = vpop.f32.mrf.mxu0
      %4680 = vmatprep.mubr.bf16.mxu0 0
      %4681 = vmatmul.mubr.bf16.gmra.mxu0 %v4523
      %v4682 = vpop.f32.mrf.mxu0
      %v4683 = vadd.f32 0.0, %v4682
      %v4684 = vpop.f32.mrf.mxu0
      %v4685 = vpop.f32.mrf.mxu0
      %v4686 = vadd.f32 0.0, %v4685
      %v4687 = vpop.f32.mrf.mxu0
      %4688 = vdwg.mxu0
      %v4689 = vadd.f32 %v4395, %v4563
      %v4690 = vadd.f32 %v4396, %v4566
      %v4691 = vadd.f32 %v4397, %v4571
      %v4692 = vadd.f32 %v4398, %v4574
      %v4693 = vadd.f32 %v4399, %v4579
      %v4694 = vadd.f32 %v4400, %v4582
      %v4695 = vadd.f32 %v4401, %v4587
      %v4696 = vadd.f32 %v4402, %v4590
      %v4697 = vadd.f32 %v4403, %v4595
      %v4698 = vadd.f32 %v4404, %v4598
      %v4699 = vadd.f32 %v4405, %v4603
      %v4700 = vadd.f32 %v4406, %v4606
      %v4701 = vadd.f32 %v4407, %v4611
      %v4702 = vadd.f32 %v4408, %v4614
      %v4703 = vadd.f32 %v4409, %v4619
      %v4704 = vadd.f32 %v4410, %v4622
      %v4705 = vadd.f32 %v4411, %v4627
      %v4706 = vadd.f32 %v4412, %v4630
      %v4707 = vadd.f32 %v4413, %v4635
      %v4708 = vadd.f32 %v4414, %v4638
      %v4709 = vadd.f32 %v4415, %v4643
      %v4710 = vadd.f32 %v4416, %v4646
      %v4711 = vadd.f32 %v4417, %v4651
      %v4712 = vadd.f32 %v4418, %v4654
      %v4713 = vadd.f32 %v4419, %v4659
      %v4714 = vadd.f32 %v4420, %v4662
      %v4715 = vadd.f32 %v4421, %v4667
      %v4716 = vadd.f32 %v4422, %v4670
      %v4717 = vadd.f32 %v4423, %v4675
      %v4718 = vadd.f32 %v4424, %v4678
      %v4719 = vadd.f32 %v4425, %v4683
      %v4720 = vadd.f32 %v4426, %v4686
      %s4721 = scalar_lea.vmem [#allocation2], 48
      %v4722 = vld [vmem:[%s4721] sm:$0xff]
      %v4723 = vld [vmem:[%s4721 + $0x8] sm:$0xff]
      %v4724 = vld [vmem:[%s4721 + $0x18] sm:$0xff]
      %v4725 = vld [vmem:[%s4721 + $0x20] sm:$0xff]
      %v4726 = vld [vmem:[%s4721 + $0x30] sm:$0xff]
      %v4727 = vld [vmem:[%s4721 + $0x38] sm:$0xff]
      %v4728 = vld [vmem:[%s4721 + $0x48] sm:$0xff]
      %v4729 = vld [vmem:[%s4721 + $0x50] sm:$0xff]
      %v4730 = vld [vmem:[%s4721 + $0x60] sm:$0xff]
      %v4731 = vld [vmem:[%s4721 + $0x68] sm:$0xff]
      %v4732 = vld [vmem:[%s4721 + $0x78] sm:$0xff]
      %v4733 = vld [vmem:[%s4721 + $0x80] sm:$0xff]
      %v4734 = vld [vmem:[%s4721 + $0x90] sm:$0xff]
      %v4735 = vld [vmem:[%s4721 + $0x98] sm:$0xff]
      %v4736 = vld [vmem:[%s4721 + $0xa8] sm:$0xff]
      %v4737 = vld [vmem:[%s4721 + $0xb0] sm:$0xff]
      %v4738 = vld [vmem:[%s4721 + $0xc0] sm:$0xff]
      %v4739 = vld [vmem:[%s4721 + $0xc8] sm:$0xff]
      %v4740 = vld [vmem:[%s4721 + $0xd8] sm:$0xff]
      %v4741 = vld [vmem:[%s4721 + $0xe0] sm:$0xff]
      %v4742 = vld [vmem:[%s4721 + $0xf0] sm:$0xff]
      %v4743 = vld [vmem:[%s4721 + $0xf8] sm:$0xff]
      %v4744 = vld [vmem:[%s4721 + $0x108] sm:$0xff]
      %v4745 = vld [vmem:[%s4721 + $0x110] sm:$0xff]
      %v4746 = vld [vmem:[%s4721 + $0x120] sm:$0xff]
      %v4747 = vld [vmem:[%s4721 + $0x128] sm:$0xff]
      %v4748 = vld [vmem:[%s4721 + $0x138] sm:$0xff]
      %v4749 = vld [vmem:[%s4721 + $0x140] sm:$0xff]
      %v4750 = vld [vmem:[%s4721 + $0x150] sm:$0xff]
      %v4751 = vld [vmem:[%s4721 + $0x158] sm:$0xff]
      %v4752 = vld [vmem:[%s4721 + $0x168] sm:$0xff]
      %v4753 = vld [vmem:[%s4721 + $0x170] sm:$0xff]
      %v4754 = vpack.c.bf16 %v4723, %v4722
      %v4755 = vpack.c.bf16 %v4725, %v4724
      %v4756 = vpack.c.bf16 %v4727, %v4726
      %v4757 = vpack.c.bf16 %v4729, %v4728
      %v4758 = vpack.c.bf16 %v4731, %v4730
      %v4759 = vpack.c.bf16 %v4733, %v4732
      %v4760 = vpack.c.bf16 %v4735, %v4734
      %v4761 = vpack.c.bf16 %v4737, %v4736
      %v4762 = vpack.c.bf16 %v4739, %v4738
      %v4763 = vpack.c.bf16 %v4741, %v4740
      %v4764 = vpack.c.bf16 %v4743, %v4742
      %v4765 = vpack.c.bf16 %v4745, %v4744
      %v4766 = vpack.c.bf16 %v4747, %v4746
      %v4767 = vpack.c.bf16 %v4749, %v4748
      %v4768 = vpack.c.bf16 %v4751, %v4750
      %v4769 = vpack.c.bf16 %v4753, %v4752
      %s4770 = scalar_lea.vmem %s4, 24
      %v4771 = vld [vmem:[%s4770] sm:$0xf]
      %v4773 = vsel %vm2932, %v4754, 0
      %v4776 = vsel %vm2932, %v4755, 0
      %v4779 = vsel %vm2932, %v4756, 0
      %v4782 = vsel %vm2932, %v4757, 0
      %v4785 = vsel %vm2932, %v4758, 0
      %v4788 = vsel %vm2932, %v4759, 0
      %v4791 = vsel %vm2932, %v4760, 0
      %v4794 = vsel %vm2932, %v4761, 0
      %v4797 = vsel %vm2932, %v4762, 0
      %v4800 = vsel %vm2932, %v4763, 0
      %v4803 = vsel %vm2932, %v4764, 0
      %v4806 = vsel %vm2932, %v4765, 0
      %v4809 = vsel %vm2932, %v4766, 0
      %v4812 = vsel %vm2932, %v4767, 0
      %v4815 = vsel %vm2932, %v4768, 0
      %v4818 = vsel %vm2932, %v4769, 0
      %v4821 = vsel %vm3168, %v4771, 0
      %4823 = vmatprep.subr.bf16.mxu0 0
      %4824 = vmatpush1.bf16.msra.mxu0 0
      %4825 = vmatprep.subr.bf16.mxu0 0
      %4826 = vmatpush1.bf16.msra.mxu0 0
      %4827 = vmatprep.subr.bf16.mxu0 0
      %4828 = vmatpush1.bf16.msra.mxu0 0
      %4829 = vmatprep.subr.bf16.mxu0 0
      %4830 = vmatpush1.bf16.msra.mxu0 0
      %4831 = vmatprep.subr.bf16.mxu0 0
      %4832 = vmatpush1.bf16.msra.mxu0 0
      %4833 = vmatprep.subr.bf16.mxu0 0
      %4834 = vmatpush1.bf16.msra.mxu0 0
      %4835 = vmatprep.subr.bf16.mxu0 0
      %4836 = vmatpush1.bf16.msra.mxu0 0
      %4837 = vmatprep.subr.bf16.mxu0 0
      %4838 = vmatpush1.bf16.msra.mxu0 %v4821
      %4839 = vmatprep.subr.bf16.mxu0 0
      %4840 = vmatpush2.bf16.msra.mxu0 0
      %4841 = vmatprep.subr.bf16.mxu0 0
      %4842 = vmatpush2.bf16.msra.mxu0 0
      %4843 = vmatprep.subr.bf16.mxu0 0
      %4844 = vmatpush2.bf16.msra.mxu0 0
      %4845 = vmatprep.subr.bf16.mxu0 0
      %4846 = vmatpush2.bf16.msra.mxu0 0
      %4847 = vmatprep.subr.bf16.mxu0 0
      %4848 = vmatpush2.bf16.msra.mxu0 0
      %4849 = vmatprep.subr.bf16.mxu0 0
      %4850 = vmatpush2.bf16.msra.mxu0 0
      %4851 = vmatprep.subr.bf16.mxu0 0
      %4852 = vmatpush2.bf16.msra.mxu0 0
      %4853 = vmatprep.subr.bf16.mxu0 0
      %4854 = vmatpush2.bf16.msra.mxu0 0
      %4855 = vmatprep.mubr.bf16.mxu0 0
      %4856 = vmatmul.mubr.bf16.gmra.mxu0 %v4773
      %v4857 = vpop.f32.mrf.mxu0
      %v4858 = vadd.f32 0.0, %v4857
      %v4859 = vpop.f32.mrf.mxu0
      %v4860 = vpop.f32.mrf.mxu0
      %v4861 = vadd.f32 0.0, %v4860
      %v4862 = vpop.f32.mrf.mxu0
      %4863 = vmatprep.mubr.bf16.mxu0 0
      %4864 = vmatmul.mubr.bf16.gmra.mxu0 %v4776
      %v4865 = vpop.f32.mrf.mxu0
      %v4866 = vadd.f32 0.0, %v4865
      %v4867 = vpop.f32.mrf.mxu0
      %v4868 = vpop.f32.mrf.mxu0
      %v4869 = vadd.f32 0.0, %v4868
      %v4870 = vpop.f32.mrf.mxu0
      %4871 = vmatprep.mubr.bf16.mxu0 0
      %4872 = vmatmul.mubr.bf16.gmra.mxu0 %v4779
      %v4873 = vpop.f32.mrf.mxu0
      %v4874 = vadd.f32 0.0, %v4873
      %v4875 = vpop.f32.mrf.mxu0
      %v4876 = vpop.f32.mrf.mxu0
      %v4877 = vadd.f32 0.0, %v4876
      %v4878 = vpop.f32.mrf.mxu0
      %4879 = vmatprep.mubr.bf16.mxu0 0
      %4880 = vmatmul.mubr.bf16.gmra.mxu0 %v4782
      %v4881 = vpop.f32.mrf.mxu0
      %v4882 = vadd.f32 0.0, %v4881
      %v4883 = vpop.f32.mrf.mxu0
      %v4884 = vpop.f32.mrf.mxu0
      %v4885 = vadd.f32 0.0, %v4884
      %v4886 = vpop.f32.mrf.mxu0
      %4887 = vmatprep.mubr.bf16.mxu0 0
      %4888 = vmatmul.mubr.bf16.gmra.mxu0 %v4785
      %v4889 = vpop.f32.mrf.mxu0
      %v4890 = vadd.f32 0.0, %v4889
      %v4891 = vpop.f32.mrf.mxu0
      %v4892 = vpop.f32.mrf.mxu0
      %v4893 = vadd.f32 0.0, %v4892
      %v4894 = vpop.f32.mrf.mxu0
      %4895 = vmatprep.mubr.bf16.mxu0 0
      %4896 = vmatmul.mubr.bf16.gmra.mxu0 %v4788
      %v4897 = vpop.f32.mrf.mxu0
      %v4898 = vadd.f32 0.0, %v4897
      %v4899 = vpop.f32.mrf.mxu0
      %v4900 = vpop.f32.mrf.mxu0
      %v4901 = vadd.f32 0.0, %v4900
      %v4902 = vpop.f32.mrf.mxu0
      %4903 = vmatprep.mubr.bf16.mxu0 0
      %4904 = vmatmul.mubr.bf16.gmra.mxu0 %v4791
      %v4905 = vpop.f32.mrf.mxu0
      %v4906 = vadd.f32 0.0, %v4905
      %v4907 = vpop.f32.mrf.mxu0
      %v4908 = vpop.f32.mrf.mxu0
      %v4909 = vadd.f32 0.0, %v4908
      %v4910 = vpop.f32.mrf.mxu0
      %4911 = vmatprep.mubr.bf16.mxu0 0
      %4912 = vmatmul.mubr.bf16.gmra.mxu0 %v4794
      %v4913 = vpop.f32.mrf.mxu0
      %v4914 = vadd.f32 0.0, %v4913
      %v4915 = vpop.f32.mrf.mxu0
      %v4916 = vpop.f32.mrf.mxu0
      %v4917 = vadd.f32 0.0, %v4916
      %v4918 = vpop.f32.mrf.mxu0
      %4919 = vmatprep.mubr.bf16.mxu0 0
      %4920 = vmatmul.mubr.bf16.gmra.mxu0 %v4797
      %v4921 = vpop.f32.mrf.mxu0
      %v4922 = vadd.f32 0.0, %v4921
      %v4923 = vpop.f32.mrf.mxu0
      %v4924 = vpop.f32.mrf.mxu0
      %v4925 = vadd.f32 0.0, %v4924
      %v4926 = vpop.f32.mrf.mxu0
      %4927 = vmatprep.mubr.bf16.mxu0 0
      %4928 = vmatmul.mubr.bf16.gmra.mxu0 %v4800
      %v4929 = vpop.f32.mrf.mxu0
      %v4930 = vadd.f32 0.0, %v4929
      %v4931 = vpop.f32.mrf.mxu0
      %v4932 = vpop.f32.mrf.mxu0
      %v4933 = vadd.f32 0.0, %v4932
      %v4934 = vpop.f32.mrf.mxu0
      %4935 = vmatprep.mubr.bf16.mxu0 0
      %4936 = vmatmul.mubr.bf16.gmra.mxu0 %v4803
      %v4937 = vpop.f32.mrf.mxu0
      %v4938 = vadd.f32 0.0, %v4937
      %v4939 = vpop.f32.mrf.mxu0
      %v4940 = vpop.f32.mrf.mxu0
      %v4941 = vadd.f32 0.0, %v4940
      %v4942 = vpop.f32.mrf.mxu0
      %4943 = vmatprep.mubr.bf16.mxu0 0
      %4944 = vmatmul.mubr.bf16.gmra.mxu0 %v4806
      %v4945 = vpop.f32.mrf.mxu0
      %v4946 = vadd.f32 0.0, %v4945
      %v4947 = vpop.f32.mrf.mxu0
      %v4948 = vpop.f32.mrf.mxu0
      %v4949 = vadd.f32 0.0, %v4948
      %v4950 = vpop.f32.mrf.mxu0
      %4951 = vmatprep.mubr.bf16.mxu0 0
      %4952 = vmatmul.mubr.bf16.gmra.mxu0 %v4809
      %v4953 = vpop.f32.mrf.mxu0
      %v4954 = vadd.f32 0.0, %v4953
      %v4955 = vpop.f32.mrf.mxu0
      %v4956 = vpop.f32.mrf.mxu0
      %v4957 = vadd.f32 0.0, %v4956
      %v4958 = vpop.f32.mrf.mxu0
      %4959 = vmatprep.mubr.bf16.mxu0 0
      %4960 = vmatmul.mubr.bf16.gmra.mxu0 %v4812
      %v4961 = vpop.f32.mrf.mxu0
      %v4962 = vadd.f32 0.0, %v4961
      %v4963 = vpop.f32.mrf.mxu0
      %v4964 = vpop.f32.mrf.mxu0
      %v4965 = vadd.f32 0.0, %v4964
      %v4966 = vpop.f32.mrf.mxu0
      %4967 = vmatprep.mubr.bf16.mxu0 0
      %4968 = vmatmul.mubr.bf16.gmra.mxu0 %v4815
      %v4969 = vpop.f32.mrf.mxu0
      %v4970 = vadd.f32 0.0, %v4969
      %v4971 = vpop.f32.mrf.mxu0
      %v4972 = vpop.f32.mrf.mxu0
      %v4973 = vadd.f32 0.0, %v4972
      %v4974 = vpop.f32.mrf.mxu0
      %4975 = vmatprep.mubr.bf16.mxu0 0
      %4976 = vmatmul.mubr.bf16.gmra.mxu0 %v4818
      %v4977 = vpop.f32.mrf.mxu0
      %v4978 = vadd.f32 0.0, %v4977
      %v4979 = vpop.f32.mrf.mxu0
      %v4980 = vpop.f32.mrf.mxu0
      %v4981 = vadd.f32 0.0, %v4980
      %v4982 = vpop.f32.mrf.mxu0
      %4983 = vdwg.mxu0
      %v4984 = vadd.f32 %v4689, %v4858
      %v4985 = vadd.f32 %v4690, %v4861
      %v4986 = vadd.f32 %v4691, %v4866
      %v4987 = vadd.f32 %v4692, %v4869
      %v4988 = vadd.f32 %v4693, %v4874
      %v4989 = vadd.f32 %v4694, %v4877
      %v4990 = vadd.f32 %v4695, %v4882
      %v4991 = vadd.f32 %v4696, %v4885
      %v4992 = vadd.f32 %v4697, %v4890
      %v4993 = vadd.f32 %v4698, %v4893
      %v4994 = vadd.f32 %v4699, %v4898
      %v4995 = vadd.f32 %v4700, %v4901
      %v4996 = vadd.f32 %v4701, %v4906
      %v4997 = vadd.f32 %v4702, %v4909
      %v4998 = vadd.f32 %v4703, %v4914
      %v4999 = vadd.f32 %v4704, %v4917
      %v5000 = vadd.f32 %v4705, %v4922
      %v5001 = vadd.f32 %v4706, %v4925
      %v5002 = vadd.f32 %v4707, %v4930
      %v5003 = vadd.f32 %v4708, %v4933
      %v5004 = vadd.f32 %v4709, %v4938
      %v5005 = vadd.f32 %v4710, %v4941
      %v5006 = vadd.f32 %v4711, %v4946
      %v5007 = vadd.f32 %v4712, %v4949
      %v5008 = vadd.f32 %v4713, %v4954
      %v5009 = vadd.f32 %v4714, %v4957
      %v5010 = vadd.f32 %v4715, %v4962
      %v5011 = vadd.f32 %v4716, %v4965
      %v5012 = vadd.f32 %v4717, %v4970
      %v5013 = vadd.f32 %v4718, %v4973
      %v5014 = vadd.f32 %v4719, %v4978
      %v5015 = vadd.f32 %v4720, %v4981
      %v5016 = vld [vmem:[%s4721 + $0x1] sm:$0xff]
      %v5017 = vld [vmem:[%s4721 + $0x9] sm:$0xff]
      %v5018 = vld [vmem:[%s4721 + $0x19] sm:$0xff]
      %v5019 = vld [vmem:[%s4721 + $0x21] sm:$0xff]
      %v5020 = vld [vmem:[%s4721 + $0x31] sm:$0xff]
      %v5021 = vld [vmem:[%s4721 + $0x39] sm:$0xff]
      %v5022 = vld [vmem:[%s4721 + $0x49] sm:$0xff]
      %v5023 = vld [vmem:[%s4721 + $0x51] sm:$0xff]
      %v5024 = vld [vmem:[%s4721 + $0x61] sm:$0xff]
      %v5025 = vld [vmem:[%s4721 + $0x69] sm:$0xff]
      %v5026 = vld [vmem:[%s4721 + $0x79] sm:$0xff]
      %v5027 = vld [vmem:[%s4721 + $0x81] sm:$0xff]
      %v5028 = vld [vmem:[%s4721 + $0x91] sm:$0xff]
      %v5029 = vld [vmem:[%s4721 + $0x99] sm:$0xff]
      %v5030 = vld [vmem:[%s4721 + $0xa9] sm:$0xff]
      %v5031 = vld [vmem:[%s4721 + $0xb1] sm:$0xff]
      %v5032 = vld [vmem:[%s4721 + $0xc1] sm:$0xff]
      %v5033 = vld [vmem:[%s4721 + $0xc9] sm:$0xff]
      %v5034 = vld [vmem:[%s4721 + $0xd9] sm:$0xff]
      %v5035 = vld [vmem:[%s4721 + $0xe1] sm:$0xff]
      %v5036 = vld [vmem:[%s4721 + $0xf1] sm:$0xff]
      %v5037 = vld [vmem:[%s4721 + $0xf9] sm:$0xff]
      %v5038 = vld [vmem:[%s4721 + $0x109] sm:$0xff]
      %v5039 = vld [vmem:[%s4721 + $0x111] sm:$0xff]
      %v5040 = vld [vmem:[%s4721 + $0x121] sm:$0xff]
      %v5041 = vld [vmem:[%s4721 + $0x129] sm:$0xff]
      %v5042 = vld [vmem:[%s4721 + $0x139] sm:$0xff]
      %v5043 = vld [vmem:[%s4721 + $0x141] sm:$0xff]
      %v5044 = vld [vmem:[%s4721 + $0x151] sm:$0xff]
      %v5045 = vld [vmem:[%s4721 + $0x159] sm:$0xff]
      %v5046 = vld [vmem:[%s4721 + $0x169] sm:$0xff]
      %v5047 = vld [vmem:[%s4721 + $0x171] sm:$0xff]
      %v5048 = vpack.c.bf16 %v5017, %v5016
      %v5049 = vpack.c.bf16 %v5019, %v5018
      %v5050 = vpack.c.bf16 %v5021, %v5020
      %v5051 = vpack.c.bf16 %v5023, %v5022
      %v5052 = vpack.c.bf16 %v5025, %v5024
      %v5053 = vpack.c.bf16 %v5027, %v5026
      %v5054 = vpack.c.bf16 %v5029, %v5028
      %v5055 = vpack.c.bf16 %v5031, %v5030
      %v5056 = vpack.c.bf16 %v5033, %v5032
      %v5057 = vpack.c.bf16 %v5035, %v5034
      %v5058 = vpack.c.bf16 %v5037, %v5036
      %v5059 = vpack.c.bf16 %v5039, %v5038
      %v5060 = vpack.c.bf16 %v5041, %v5040
      %v5061 = vpack.c.bf16 %v5043, %v5042
      %v5062 = vpack.c.bf16 %v5045, %v5044
      %v5063 = vpack.c.bf16 %v5047, %v5046
      %s5064 = scalar_lea.vmem %s4, 28
      %v5065 = vld [vmem:[%s5064] sm:$0xf]
      %v5067 = vsel %vm2932, %v5048, 0
      %v5070 = vsel %vm2932, %v5049, 0
      %v5073 = vsel %vm2932, %v5050, 0
      %v5076 = vsel %vm2932, %v5051, 0
      %v5079 = vsel %vm2932, %v5052, 0
      %v5082 = vsel %vm2932, %v5053, 0
      %v5085 = vsel %vm2932, %v5054, 0
      %v5088 = vsel %vm2932, %v5055, 0
      %v5091 = vsel %vm2932, %v5056, 0
      %v5094 = vsel %vm2932, %v5057, 0
      %v5097 = vsel %vm2932, %v5058, 0
      %v5100 = vsel %vm2932, %v5059, 0
      %v5103 = vsel %vm2932, %v5060, 0
      %v5106 = vsel %vm2932, %v5061, 0
      %v5109 = vsel %vm2932, %v5062, 0
      %v5112 = vsel %vm2932, %v5063, 0
      %v5115 = vsel %vm3168, %v5065, 0
      %5117 = vmatprep.subr.bf16.mxu0 0
      %5118 = vmatpush1.bf16.msra.mxu0 0
      %5119 = vmatprep.subr.bf16.mxu0 0
      %5120 = vmatpush1.bf16.msra.mxu0 0
      %5121 = vmatprep.subr.bf16.mxu0 0
      %5122 = vmatpush1.bf16.msra.mxu0 0
      %5123 = vmatprep.subr.bf16.mxu0 0
      %5124 = vmatpush1.bf16.msra.mxu0 0
      %5125 = vmatprep.subr.bf16.mxu0 0
      %5126 = vmatpush1.bf16.msra.mxu0 0
      %5127 = vmatprep.subr.bf16.mxu0 0
      %5128 = vmatpush1.bf16.msra.mxu0 0
      %5129 = vmatprep.subr.bf16.mxu0 0
      %5130 = vmatpush1.bf16.msra.mxu0 0
      %5131 = vmatprep.subr.bf16.mxu0 0
      %5132 = vmatpush1.bf16.msra.mxu0 %v5115
      %5133 = vmatprep.subr.bf16.mxu0 0
      %5134 = vmatpush2.bf16.msra.mxu0 0
      %5135 = vmatprep.subr.bf16.mxu0 0
      %5136 = vmatpush2.bf16.msra.mxu0 0
      %5137 = vmatprep.subr.bf16.mxu0 0
      %5138 = vmatpush2.bf16.msra.mxu0 0
      %5139 = vmatprep.subr.bf16.mxu0 0
      %5140 = vmatpush2.bf16.msra.mxu0 0
      %5141 = vmatprep.subr.bf16.mxu0 0
      %5142 = vmatpush2.bf16.msra.mxu0 0
      %5143 = vmatprep.subr.bf16.mxu0 0
      %5144 = vmatpush2.bf16.msra.mxu0 0
      %5145 = vmatprep.subr.bf16.mxu0 0
      %5146 = vmatpush2.bf16.msra.mxu0 0
      %5147 = vmatprep.subr.bf16.mxu0 0
      %5148 = vmatpush2.bf16.msra.mxu0 0
      %5149 = vmatprep.mubr.bf16.mxu0 0
      %5150 = vmatmul.mubr.bf16.gmra.mxu0 %v5067
      %v5151 = vpop.f32.mrf.mxu0
      %v5152 = vadd.f32 0.0, %v5151
      %v5153 = vpop.f32.mrf.mxu0
      %v5154 = vpop.f32.mrf.mxu0
      %v5155 = vadd.f32 0.0, %v5154
      %v5156 = vpop.f32.mrf.mxu0
      %5157 = vmatprep.mubr.bf16.mxu0 0
      %5158 = vmatmul.mubr.bf16.gmra.mxu0 %v5070
      %v5159 = vpop.f32.mrf.mxu0
      %v5160 = vadd.f32 0.0, %v5159
      %v5161 = vpop.f32.mrf.mxu0
      %v5162 = vpop.f32.mrf.mxu0
      %v5163 = vadd.f32 0.0, %v5162
      %v5164 = vpop.f32.mrf.mxu0
      %5165 = vmatprep.mubr.bf16.mxu0 0
      %5166 = vmatmul.mubr.bf16.gmra.mxu0 %v5073
      %v5167 = vpop.f32.mrf.mxu0
      %v5168 = vadd.f32 0.0, %v5167
      %v5169 = vpop.f32.mrf.mxu0
      %v5170 = vpop.f32.mrf.mxu0
      %v5171 = vadd.f32 0.0, %v5170
      %v5172 = vpop.f32.mrf.mxu0
      %5173 = vmatprep.mubr.bf16.mxu0 0
      %5174 = vmatmul.mubr.bf16.gmra.mxu0 %v5076
      %v5175 = vpop.f32.mrf.mxu0
      %v5176 = vadd.f32 0.0, %v5175
      %v5177 = vpop.f32.mrf.mxu0
      %v5178 = vpop.f32.mrf.mxu0
      %v5179 = vadd.f32 0.0, %v5178
      %v5180 = vpop.f32.mrf.mxu0
      %5181 = vmatprep.mubr.bf16.mxu0 0
      %5182 = vmatmul.mubr.bf16.gmra.mxu0 %v5079
      %v5183 = vpop.f32.mrf.mxu0
      %v5184 = vadd.f32 0.0, %v5183
      %v5185 = vpop.f32.mrf.mxu0
      %v5186 = vpop.f32.mrf.mxu0
      %v5187 = vadd.f32 0.0, %v5186
      %v5188 = vpop.f32.mrf.mxu0
      %5189 = vmatprep.mubr.bf16.mxu0 0
      %5190 = vmatmul.mubr.bf16.gmra.mxu0 %v5082
      %v5191 = vpop.f32.mrf.mxu0
      %v5192 = vadd.f32 0.0, %v5191
      %v5193 = vpop.f32.mrf.mxu0
      %v5194 = vpop.f32.mrf.mxu0
      %v5195 = vadd.f32 0.0, %v5194
      %v5196 = vpop.f32.mrf.mxu0
      %5197 = vmatprep.mubr.bf16.mxu0 0
      %5198 = vmatmul.mubr.bf16.gmra.mxu0 %v5085
      %v5199 = vpop.f32.mrf.mxu0
      %v5200 = vadd.f32 0.0, %v5199
      %v5201 = vpop.f32.mrf.mxu0
      %v5202 = vpop.f32.mrf.mxu0
      %v5203 = vadd.f32 0.0, %v5202
      %v5204 = vpop.f32.mrf.mxu0
      %5205 = vmatprep.mubr.bf16.mxu0 0
      %5206 = vmatmul.mubr.bf16.gmra.mxu0 %v5088
      %v5207 = vpop.f32.mrf.mxu0
      %v5208 = vadd.f32 0.0, %v5207
      %v5209 = vpop.f32.mrf.mxu0
      %v5210 = vpop.f32.mrf.mxu0
      %v5211 = vadd.f32 0.0, %v5210
      %v5212 = vpop.f32.mrf.mxu0
      %5213 = vmatprep.mubr.bf16.mxu0 0
      %5214 = vmatmul.mubr.bf16.gmra.mxu0 %v5091
      %v5215 = vpop.f32.mrf.mxu0
      %v5216 = vadd.f32 0.0, %v5215
      %v5217 = vpop.f32.mrf.mxu0
      %v5218 = vpop.f32.mrf.mxu0
      %v5219 = vadd.f32 0.0, %v5218
      %v5220 = vpop.f32.mrf.mxu0
      %5221 = vmatprep.mubr.bf16.mxu0 0
      %5222 = vmatmul.mubr.bf16.gmra.mxu0 %v5094
      %v5223 = vpop.f32.mrf.mxu0
      %v5224 = vadd.f32 0.0, %v5223
      %v5225 = vpop.f32.mrf.mxu0
      %v5226 = vpop.f32.mrf.mxu0
      %v5227 = vadd.f32 0.0, %v5226
      %v5228 = vpop.f32.mrf.mxu0
      %5229 = vmatprep.mubr.bf16.mxu0 0
      %5230 = vmatmul.mubr.bf16.gmra.mxu0 %v5097
      %v5231 = vpop.f32.mrf.mxu0
      %v5232 = vadd.f32 0.0, %v5231
      %v5233 = vpop.f32.mrf.mxu0
      %v5234 = vpop.f32.mrf.mxu0
      %v5235 = vadd.f32 0.0, %v5234
      %v5236 = vpop.f32.mrf.mxu0
      %5237 = vmatprep.mubr.bf16.mxu0 0
      %5238 = vmatmul.mubr.bf16.gmra.mxu0 %v5100
      %v5239 = vpop.f32.mrf.mxu0
      %v5240 = vadd.f32 0.0, %v5239
      %v5241 = vpop.f32.mrf.mxu0
      %v5242 = vpop.f32.mrf.mxu0
      %v5243 = vadd.f32 0.0, %v5242
      %v5244 = vpop.f32.mrf.mxu0
      %5245 = vmatprep.mubr.bf16.mxu0 0
      %5246 = vmatmul.mubr.bf16.gmra.mxu0 %v5103
      %v5247 = vpop.f32.mrf.mxu0
      %v5248 = vadd.f32 0.0, %v5247
      %v5249 = vpop.f32.mrf.mxu0
      %v5250 = vpop.f32.mrf.mxu0
      %v5251 = vadd.f32 0.0, %v5250
      %v5252 = vpop.f32.mrf.mxu0
      %5253 = vmatprep.mubr.bf16.mxu0 0
      %5254 = vmatmul.mubr.bf16.gmra.mxu0 %v5106
      %v5255 = vpop.f32.mrf.mxu0
      %v5256 = vadd.f32 0.0, %v5255
      %v5257 = vpop.f32.mrf.mxu0
      %v5258 = vpop.f32.mrf.mxu0
      %v5259 = vadd.f32 0.0, %v5258
      %v5260 = vpop.f32.mrf.mxu0
      %5261 = vmatprep.mubr.bf16.mxu0 0
      %5262 = vmatmul.mubr.bf16.gmra.mxu0 %v5109
      %v5263 = vpop.f32.mrf.mxu0
      %v5264 = vadd.f32 0.0, %v5263
      %v5265 = vpop.f32.mrf.mxu0
      %v5266 = vpop.f32.mrf.mxu0
      %v5267 = vadd.f32 0.0, %v5266
      %v5268 = vpop.f32.mrf.mxu0
      %5269 = vmatprep.mubr.bf16.mxu0 0
      %5270 = vmatmul.mubr.bf16.gmra.mxu0 %v5112
      %v5271 = vpop.f32.mrf.mxu0
      %v5272 = vadd.f32 0.0, %v5271
      %v5273 = vpop.f32.mrf.mxu0
      %v5274 = vpop.f32.mrf.mxu0
      %v5275 = vadd.f32 0.0, %v5274
      %v5276 = vpop.f32.mrf.mxu0
      %5277 = vdwg.mxu0
      %v5278 = vadd.f32 %v4984, %v5152
      %v5279 = vadd.f32 %v4985, %v5155
      %v5280 = vadd.f32 %v4986, %v5160
      %v5281 = vadd.f32 %v4987, %v5163
      %v5282 = vadd.f32 %v4988, %v5168
      %v5283 = vadd.f32 %v4989, %v5171
      %v5284 = vadd.f32 %v4990, %v5176
      %v5285 = vadd.f32 %v4991, %v5179
      %v5286 = vadd.f32 %v4992, %v5184
      %v5287 = vadd.f32 %v4993, %v5187
      %v5288 = vadd.f32 %v4994, %v5192
      %v5289 = vadd.f32 %v4995, %v5195
      %v5290 = vadd.f32 %v4996, %v5200
      %v5291 = vadd.f32 %v4997, %v5203
      %v5292 = vadd.f32 %v4998, %v5208
      %v5293 = vadd.f32 %v4999, %v5211
      %v5294 = vadd.f32 %v5000, %v5216
      %v5295 = vadd.f32 %v5001, %v5219
      %v5296 = vadd.f32 %v5002, %v5224
      %v5297 = vadd.f32 %v5003, %v5227
      %v5298 = vadd.f32 %v5004, %v5232
      %v5299 = vadd.f32 %v5005, %v5235
      %v5300 = vadd.f32 %v5006, %v5240
      %v5301 = vadd.f32 %v5007, %v5243
      %v5302 = vadd.f32 %v5008, %v5248
      %v5303 = vadd.f32 %v5009, %v5251
      %v5304 = vadd.f32 %v5010, %v5256
      %v5305 = vadd.f32 %v5011, %v5259
      %v5306 = vadd.f32 %v5012, %v5264
      %v5307 = vadd.f32 %v5013, %v5267
      %v5308 = vadd.f32 %v5014, %v5272
      %v5309 = vadd.f32 %v5015, %v5275
      %v5310 = vld [vmem:[%s4721 + $0x2] sm:$0xff]
      %v5311 = vld [vmem:[%s4721 + $0xa] sm:$0xff]
      %v5312 = vld [vmem:[%s4721 + $0x1a] sm:$0xff]
      %v5313 = vld [vmem:[%s4721 + $0x22] sm:$0xff]
      %v5314 = vld [vmem:[%s4721 + $0x32] sm:$0xff]
      %v5315 = vld [vmem:[%s4721 + $0x3a] sm:$0xff]
      %v5316 = vld [vmem:[%s4721 + $0x4a] sm:$0xff]
      %v5317 = vld [vmem:[%s4721 + $0x52] sm:$0xff]
      %v5318 = vld [vmem:[%s4721 + $0x62] sm:$0xff]
      %v5319 = vld [vmem:[%s4721 + $0x6a] sm:$0xff]
      %v5320 = vld [vmem:[%s4721 + $0x7a] sm:$0xff]
      %v5321 = vld [vmem:[%s4721 + $0x82] sm:$0xff]
      %v5322 = vld [vmem:[%s4721 + $0x92] sm:$0xff]
      %v5323 = vld [vmem:[%s4721 + $0x9a] sm:$0xff]
      %v5324 = vld [vmem:[%s4721 + $0xaa] sm:$0xff]
      %v5325 = vld [vmem:[%s4721 + $0xb2] sm:$0xff]
      %v5326 = vld [vmem:[%s4721 + $0xc2] sm:$0xff]
      %v5327 = vld [vmem:[%s4721 + $0xca] sm:$0xff]
      %v5328 = vld [vmem:[%s4721 + $0xda] sm:$0xff]
      %v5329 = vld [vmem:[%s4721 + $0xe2] sm:$0xff]
      %v5330 = vld [vmem:[%s4721 + $0xf2] sm:$0xff]
      %v5331 = vld [vmem:[%s4721 + $0xfa] sm:$0xff]
      %v5332 = vld [vmem:[%s4721 + $0x10a] sm:$0xff]
      %v5333 = vld [vmem:[%s4721 + $0x112] sm:$0xff]
      %v5334 = vld [vmem:[%s4721 + $0x122] sm:$0xff]
      %v5335 = vld [vmem:[%s4721 + $0x12a] sm:$0xff]
      %v5336 = vld [vmem:[%s4721 + $0x13a] sm:$0xff]
      %v5337 = vld [vmem:[%s4721 + $0x142] sm:$0xff]
      %v5338 = vld [vmem:[%s4721 + $0x152] sm:$0xff]
      %v5339 = vld [vmem:[%s4721 + $0x15a] sm:$0xff]
      %v5340 = vld [vmem:[%s4721 + $0x16a] sm:$0xff]
      %v5341 = vld [vmem:[%s4721 + $0x172] sm:$0xff]
      %v5342 = vpack.c.bf16 %v5311, %v5310
      %v5343 = vpack.c.bf16 %v5313, %v5312
      %v5344 = vpack.c.bf16 %v5315, %v5314
      %v5345 = vpack.c.bf16 %v5317, %v5316
      %v5346 = vpack.c.bf16 %v5319, %v5318
      %v5347 = vpack.c.bf16 %v5321, %v5320
      %v5348 = vpack.c.bf16 %v5323, %v5322
      %v5349 = vpack.c.bf16 %v5325, %v5324
      %v5350 = vpack.c.bf16 %v5327, %v5326
      %v5351 = vpack.c.bf16 %v5329, %v5328
      %v5352 = vpack.c.bf16 %v5331, %v5330
      %v5353 = vpack.c.bf16 %v5333, %v5332
      %v5354 = vpack.c.bf16 %v5335, %v5334
      %v5355 = vpack.c.bf16 %v5337, %v5336
      %v5356 = vpack.c.bf16 %v5339, %v5338
      %v5357 = vpack.c.bf16 %v5341, %v5340
      %s5358 = scalar_lea.vmem %s4, 32
      %v5359 = vld [vmem:[%s5358] sm:$0xf]
      %v5361 = vsel %vm2932, %v5342, 0
      %v5364 = vsel %vm2932, %v5343, 0
      %v5367 = vsel %vm2932, %v5344, 0
      %v5370 = vsel %vm2932, %v5345, 0
      %v5373 = vsel %vm2932, %v5346, 0
      %v5376 = vsel %vm2932, %v5347, 0
      %v5379 = vsel %vm2932, %v5348, 0
      %v5382 = vsel %vm2932, %v5349, 0
      %v5385 = vsel %vm2932, %v5350, 0
      %v5388 = vsel %vm2932, %v5351, 0
      %v5391 = vsel %vm2932, %v5352, 0
      %v5394 = vsel %vm2932, %v5353, 0
      %v5397 = vsel %vm2932, %v5354, 0
      %v5400 = vsel %vm2932, %v5355, 0
      %v5403 = vsel %vm2932, %v5356, 0
      %v5406 = vsel %vm2932, %v5357, 0
      %v5409 = vsel %vm3168, %v5359, 0
      %5411 = vmatprep.subr.bf16.mxu0 0
      %5412 = vmatpush1.bf16.msra.mxu0 0
      %5413 = vmatprep.subr.bf16.mxu0 0
      %5414 = vmatpush1.bf16.msra.mxu0 0
      %5415 = vmatprep.subr.bf16.mxu0 0
      %5416 = vmatpush1.bf16.msra.mxu0 0
      %5417 = vmatprep.subr.bf16.mxu0 0
      %5418 = vmatpush1.bf16.msra.mxu0 0
      %5419 = vmatprep.subr.bf16.mxu0 0
      %5420 = vmatpush1.bf16.msra.mxu0 0
      %5421 = vmatprep.subr.bf16.mxu0 0
      %5422 = vmatpush1.bf16.msra.mxu0 0
      %5423 = vmatprep.subr.bf16.mxu0 0
      %5424 = vmatpush1.bf16.msra.mxu0 0
      %5425 = vmatprep.subr.bf16.mxu0 0
      %5426 = vmatpush1.bf16.msra.mxu0 %v5409
      %5427 = vmatprep.subr.bf16.mxu0 0
      %5428 = vmatpush2.bf16.msra.mxu0 0
      %5429 = vmatprep.subr.bf16.mxu0 0
      %5430 = vmatpush2.bf16.msra.mxu0 0
      %5431 = vmatprep.subr.bf16.mxu0 0
      %5432 = vmatpush2.bf16.msra.mxu0 0
      %5433 = vmatprep.subr.bf16.mxu0 0
      %5434 = vmatpush2.bf16.msra.mxu0 0
      %5435 = vmatprep.subr.bf16.mxu0 0
      %5436 = vmatpush2.bf16.msra.mxu0 0
      %5437 = vmatprep.subr.bf16.mxu0 0
      %5438 = vmatpush2.bf16.msra.mxu0 0
      %5439 = vmatprep.subr.bf16.mxu0 0
      %5440 = vmatpush2.bf16.msra.mxu0 0
      %5441 = vmatprep.subr.bf16.mxu0 0
      %5442 = vmatpush2.bf16.msra.mxu0 0
      %5443 = vmatprep.mubr.bf16.mxu0 0
      %5444 = vmatmul.mubr.bf16.gmra.mxu0 %v5361
      %v5445 = vpop.f32.mrf.mxu0
      %v5446 = vadd.f32 0.0, %v5445
      %v5447 = vpop.f32.mrf.mxu0
      %v5448 = vpop.f32.mrf.mxu0
      %v5449 = vadd.f32 0.0, %v5448
      %v5450 = vpop.f32.mrf.mxu0
      %5451 = vmatprep.mubr.bf16.mxu0 0
      %5452 = vmatmul.mubr.bf16.gmra.mxu0 %v5364
      %v5453 = vpop.f32.mrf.mxu0
      %v5454 = vadd.f32 0.0, %v5453
      %v5455 = vpop.f32.mrf.mxu0
      %v5456 = vpop.f32.mrf.mxu0
      %v5457 = vadd.f32 0.0, %v5456
      %v5458 = vpop.f32.mrf.mxu0
      %5459 = vmatprep.mubr.bf16.mxu0 0
      %5460 = vmatmul.mubr.bf16.gmra.mxu0 %v5367
      %v5461 = vpop.f32.mrf.mxu0
      %v5462 = vadd.f32 0.0, %v5461
      %v5463 = vpop.f32.mrf.mxu0
      %v5464 = vpop.f32.mrf.mxu0
      %v5465 = vadd.f32 0.0, %v5464
      %v5466 = vpop.f32.mrf.mxu0
      %5467 = vmatprep.mubr.bf16.mxu0 0
      %5468 = vmatmul.mubr.bf16.gmra.mxu0 %v5370
      %v5469 = vpop.f32.mrf.mxu0
      %v5470 = vadd.f32 0.0, %v5469
      %v5471 = vpop.f32.mrf.mxu0
      %v5472 = vpop.f32.mrf.mxu0
      %v5473 = vadd.f32 0.0, %v5472
      %v5474 = vpop.f32.mrf.mxu0
      %5475 = vmatprep.mubr.bf16.mxu0 0
      %5476 = vmatmul.mubr.bf16.gmra.mxu0 %v5373
      %v5477 = vpop.f32.mrf.mxu0
      %v5478 = vadd.f32 0.0, %v5477
      %v5479 = vpop.f32.mrf.mxu0
      %v5480 = vpop.f32.mrf.mxu0
      %v5481 = vadd.f32 0.0, %v5480
      %v5482 = vpop.f32.mrf.mxu0
      %5483 = vmatprep.mubr.bf16.mxu0 0
      %5484 = vmatmul.mubr.bf16.gmra.mxu0 %v5376
      %v5485 = vpop.f32.mrf.mxu0
      %v5486 = vadd.f32 0.0, %v5485
      %v5487 = vpop.f32.mrf.mxu0
      %v5488 = vpop.f32.mrf.mxu0
      %v5489 = vadd.f32 0.0, %v5488
      %v5490 = vpop.f32.mrf.mxu0
      %5491 = vmatprep.mubr.bf16.mxu0 0
      %5492 = vmatmul.mubr.bf16.gmra.mxu0 %v5379
      %v5493 = vpop.f32.mrf.mxu0
      %v5494 = vadd.f32 0.0, %v5493
      %v5495 = vpop.f32.mrf.mxu0
      %v5496 = vpop.f32.mrf.mxu0
      %v5497 = vadd.f32 0.0, %v5496
      %v5498 = vpop.f32.mrf.mxu0
      %5499 = vmatprep.mubr.bf16.mxu0 0
      %5500 = vmatmul.mubr.bf16.gmra.mxu0 %v5382
      %v5501 = vpop.f32.mrf.mxu0
      %v5502 = vadd.f32 0.0, %v5501
      %v5503 = vpop.f32.mrf.mxu0
      %v5504 = vpop.f32.mrf.mxu0
      %v5505 = vadd.f32 0.0, %v5504
      %v5506 = vpop.f32.mrf.mxu0
      %5507 = vmatprep.mubr.bf16.mxu0 0
      %5508 = vmatmul.mubr.bf16.gmra.mxu0 %v5385
      %v5509 = vpop.f32.mrf.mxu0
      %v5510 = vadd.f32 0.0, %v5509
      %v5511 = vpop.f32.mrf.mxu0
      %v5512 = vpop.f32.mrf.mxu0
      %v5513 = vadd.f32 0.0, %v5512
      %v5514 = vpop.f32.mrf.mxu0
      %5515 = vmatprep.mubr.bf16.mxu0 0
      %5516 = vmatmul.mubr.bf16.gmra.mxu0 %v5388
      %v5517 = vpop.f32.mrf.mxu0
      %v5518 = vadd.f32 0.0, %v5517
      %v5519 = vpop.f32.mrf.mxu0
      %v5520 = vpop.f32.mrf.mxu0
      %v5521 = vadd.f32 0.0, %v5520
      %v5522 = vpop.f32.mrf.mxu0
      %5523 = vmatprep.mubr.bf16.mxu0 0
      %5524 = vmatmul.mubr.bf16.gmra.mxu0 %v5391
      %v5525 = vpop.f32.mrf.mxu0
      %v5526 = vadd.f32 0.0, %v5525
      %v5527 = vpop.f32.mrf.mxu0
      %v5528 = vpop.f32.mrf.mxu0
      %v5529 = vadd.f32 0.0, %v5528
      %v5530 = vpop.f32.mrf.mxu0
      %5531 = vmatprep.mubr.bf16.mxu0 0
      %5532 = vmatmul.mubr.bf16.gmra.mxu0 %v5394
      %v5533 = vpop.f32.mrf.mxu0
      %v5534 = vadd.f32 0.0, %v5533
      %v5535 = vpop.f32.mrf.mxu0
      %v5536 = vpop.f32.mrf.mxu0
      %v5537 = vadd.f32 0.0, %v5536
      %v5538 = vpop.f32.mrf.mxu0
      %5539 = vmatprep.mubr.bf16.mxu0 0
      %5540 = vmatmul.mubr.bf16.gmra.mxu0 %v5397
      %v5541 = vpop.f32.mrf.mxu0
      %v5542 = vadd.f32 0.0, %v5541
      %v5543 = vpop.f32.mrf.mxu0
      %v5544 = vpop.f32.mrf.mxu0
      %v5545 = vadd.f32 0.0, %v5544
      %v5546 = vpop.f32.mrf.mxu0
      %5547 = vmatprep.mubr.bf16.mxu0 0
      %5548 = vmatmul.mubr.bf16.gmra.mxu0 %v5400
      %v5549 = vpop.f32.mrf.mxu0
      %v5550 = vadd.f32 0.0, %v5549
      %v5551 = vpop.f32.mrf.mxu0
      %v5552 = vpop.f32.mrf.mxu0
      %v5553 = vadd.f32 0.0, %v5552
      %v5554 = vpop.f32.mrf.mxu0
      %5555 = vmatprep.mubr.bf16.mxu0 0
      %5556 = vmatmul.mubr.bf16.gmra.mxu0 %v5403
      %v5557 = vpop.f32.mrf.mxu0
      %v5558 = vadd.f32 0.0, %v5557
      %v5559 = vpop.f32.mrf.mxu0
      %v5560 = vpop.f32.mrf.mxu0
      %v5561 = vadd.f32 0.0, %v5560
      %v5562 = vpop.f32.mrf.mxu0
      %5563 = vmatprep.mubr.bf16.mxu0 0
      %5564 = vmatmul.mubr.bf16.gmra.mxu0 %v5406
      %v5565 = vpop.f32.mrf.mxu0
      %v5566 = vadd.f32 0.0, %v5565
      %v5567 = vpop.f32.mrf.mxu0
      %v5568 = vpop.f32.mrf.mxu0
      %v5569 = vadd.f32 0.0, %v5568
      %v5570 = vpop.f32.mrf.mxu0
      %5571 = vdwg.mxu0
      %v5572 = vadd.f32 %v5278, %v5446
      %v5573 = vadd.f32 %v5279, %v5449
      %v5574 = vadd.f32 %v5280, %v5454
      %v5575 = vadd.f32 %v5281, %v5457
      %v5576 = vadd.f32 %v5282, %v5462
      %v5577 = vadd.f32 %v5283, %v5465
      %v5578 = vadd.f32 %v5284, %v5470
      %v5579 = vadd.f32 %v5285, %v5473
      %v5580 = vadd.f32 %v5286, %v5478
      %v5581 = vadd.f32 %v5287, %v5481
      %v5582 = vadd.f32 %v5288, %v5486
      %v5583 = vadd.f32 %v5289, %v5489
      %v5584 = vadd.f32 %v5290, %v5494
      %v5585 = vadd.f32 %v5291, %v5497
      %v5586 = vadd.f32 %v5292, %v5502
      %v5587 = vadd.f32 %v5293, %v5505
      %v5588 = vadd.f32 %v5294, %v5510
      %v5589 = vadd.f32 %v5295, %v5513
      %v5590 = vadd.f32 %v5296, %v5518
      %v5591 = vadd.f32 %v5297, %v5521
      %v5592 = vadd.f32 %v5298, %v5526
      %v5593 = vadd.f32 %v5299, %v5529
      %v5594 = vadd.f32 %v5300, %v5534
      %v5595 = vadd.f32 %v5301, %v5537
      %v5596 = vadd.f32 %v5302, %v5542
      %v5597 = vadd.f32 %v5303, %v5545
      %v5598 = vadd.f32 %v5304, %v5550
      %v5599 = vadd.f32 %v5305, %v5553
      %v5600 = vadd.f32 %v5306, %v5558
      %v5601 = vadd.f32 %v5307, %v5561
      %v5602 = vadd.f32 %v5308, %v5566
      %v5603 = vadd.f32 %v5309, %v5569
      %v5604 = vld [vmem:[%s5] sm:$0x1]
      %v5606 = vlaneseq
      %v5607 = vshrl.u32 %v5606, 7
      %v5608 = vsub.s32 0, %v5607
      %v5609 = vrot.slane %v5604, %v5608
      %v5611 = vadd.f32 %v5572, %v5609
      %v5612 = vadd.f32 %v5573, %v5609
      %v5613 = vadd.f32 %v5574, %v5609
      %v5614 = vadd.f32 %v5575, %v5609
      %v5615 = vadd.f32 %v5576, %v5609
      %v5616 = vadd.f32 %v5577, %v5609
      %v5617 = vadd.f32 %v5578, %v5609
      %v5618 = vadd.f32 %v5579, %v5609
      %v5619 = vadd.f32 %v5580, %v5609
      %v5620 = vadd.f32 %v5581, %v5609
      %v5621 = vadd.f32 %v5582, %v5609
      %v5622 = vadd.f32 %v5583, %v5609
      %v5623 = vadd.f32 %v5584, %v5609
      %v5624 = vadd.f32 %v5585, %v5609
      %v5625 = vadd.f32 %v5586, %v5609
      %v5626 = vadd.f32 %v5587, %v5609
      %v5627 = vadd.f32 %v5588, %v5609
      %v5628 = vadd.f32 %v5589, %v5609
      %v5629 = vadd.f32 %v5590, %v5609
      %v5630 = vadd.f32 %v5591, %v5609
      %v5631 = vadd.f32 %v5592, %v5609
      %v5632 = vadd.f32 %v5593, %v5609
      %v5633 = vadd.f32 %v5594, %v5609
      %v5634 = vadd.f32 %v5595, %v5609
      %v5635 = vadd.f32 %v5596, %v5609
      %v5636 = vadd.f32 %v5597, %v5609
      %v5637 = vadd.f32 %v5598, %v5609
      %v5638 = vadd.f32 %v5599, %v5609
      %v5639 = vadd.f32 %v5600, %v5609
      %v5640 = vadd.f32 %v5601, %v5609
      %v5641 = vadd.f32 %v5602, %v5609
      %v5642 = vadd.f32 %v5603, %v5609
      %v5643 = vmul.f32 %v5611, %v5611
      %v5644 = vmul.f32 %v5612, %v5612
      %v5645 = vmul.f32 %v5613, %v5613
      %v5646 = vmul.f32 %v5614, %v5614
      %v5647 = vmul.f32 %v5615, %v5615
      %v5648 = vmul.f32 %v5616, %v5616
      %v5649 = vmul.f32 %v5617, %v5617
      %v5650 = vmul.f32 %v5618, %v5618
      %v5651 = vmul.f32 %v5619, %v5619
      %v5652 = vmul.f32 %v5620, %v5620
      %v5653 = vmul.f32 %v5621, %v5621
      %v5654 = vmul.f32 %v5622, %v5622
      %v5655 = vmul.f32 %v5623, %v5623
      %v5656 = vmul.f32 %v5624, %v5624
      %v5657 = vmul.f32 %v5625, %v5625
      %v5658 = vmul.f32 %v5626, %v5626
      %v5659 = vmul.f32 %v5627, %v5627
      %v5660 = vmul.f32 %v5628, %v5628
      %v5661 = vmul.f32 %v5629, %v5629
      %v5662 = vmul.f32 %v5630, %v5630
      %v5663 = vmul.f32 %v5631, %v5631
      %v5664 = vmul.f32 %v5632, %v5632
      %v5665 = vmul.f32 %v5633, %v5633
      %v5666 = vmul.f32 %v5634, %v5634
      %v5667 = vmul.f32 %v5635, %v5635
      %v5668 = vmul.f32 %v5636, %v5636
      %v5669 = vmul.f32 %v5637, %v5637
      %v5670 = vmul.f32 %v5638, %v5638
      %v5671 = vmul.f32 %v5639, %v5639
      %v5672 = vmul.f32 %v5640, %v5640
      %v5673 = vmul.f32 %v5641, %v5641
      %v5674 = vmul.f32 %v5642, %v5642
      %vm5675 = vcmask 130048
      %v5676 = vsel %vm5675, %v5643, 0.0
      %5677 = vadd.xlane.f32.xlu0 %v5676
      %v5678 = vpop.xlane.xlu0 %5677
      %v5679 = vsel %vm5675, %v5644, 0.0
      %5680 = vadd.xlane.f32.xlu0 %v5679
      %v5681 = vpop.xlane.xlu0 %5680
      %v5682 = vsel %vm5675, %v5645, 0.0
      %5683 = vadd.xlane.f32.xlu0 %v5682
      %v5684 = vpop.xlane.xlu0 %5683
      %v5685 = vsel %vm5675, %v5646, 0.0
      %5686 = vadd.xlane.f32.xlu0 %v5685
      %v5687 = vpop.xlane.xlu0 %5686
      %v5688 = vsel %vm5675, %v5647, 0.0
      %5689 = vadd.xlane.f32.xlu0 %v5688
      %v5690 = vpop.xlane.xlu0 %5689
      %v5691 = vsel %vm5675, %v5648, 0.0
      %5692 = vadd.xlane.f32.xlu0 %v5691
      %v5693 = vpop.xlane.xlu0 %5692
      %v5694 = vsel %vm5675, %v5649, 0.0
      %5695 = vadd.xlane.f32.xlu0 %v5694
      %v5696 = vpop.xlane.xlu0 %5695
      %v5697 = vsel %vm5675, %v5650, 0.0
      %5698 = vadd.xlane.f32.xlu0 %v5697
      %v5699 = vpop.xlane.xlu0 %5698
      %v5700 = vsel %vm5675, %v5651, 0.0
      %5701 = vadd.xlane.f32.xlu0 %v5700
      %v5702 = vpop.xlane.xlu0 %5701
      %v5703 = vsel %vm5675, %v5652, 0.0
      %5704 = vadd.xlane.f32.xlu0 %v5703
      %v5705 = vpop.xlane.xlu0 %5704
      %v5706 = vsel %vm5675, %v5653, 0.0
      %5707 = vadd.xlane.f32.xlu0 %v5706
      %v5708 = vpop.xlane.xlu0 %5707
      %v5709 = vsel %vm5675, %v5654, 0.0
      %5710 = vadd.xlane.f32.xlu0 %v5709
      %v5711 = vpop.xlane.xlu0 %5710
      %v5712 = vsel %vm5675, %v5655, 0.0
      %5713 = vadd.xlane.f32.xlu0 %v5712
      %v5714 = vpop.xlane.xlu0 %5713
      %v5715 = vsel %vm5675, %v5656, 0.0
      %5716 = vadd.xlane.f32.xlu0 %v5715
      %v5717 = vpop.xlane.xlu0 %5716
      %v5718 = vsel %vm5675, %v5657, 0.0
      %5719 = vadd.xlane.f32.xlu0 %v5718
      %v5720 = vpop.xlane.xlu0 %5719
      %v5721 = vsel %vm5675, %v5658, 0.0
      %5722 = vadd.xlane.f32.xlu0 %v5721
      %v5723 = vpop.xlane.xlu0 %5722
      %v5724 = vsel %vm5675, %v5659, 0.0
      %5725 = vadd.xlane.f32.xlu0 %v5724
      %v5726 = vpop.xlane.xlu0 %5725
      %v5727 = vsel %vm5675, %v5660, 0.0
      %5728 = vadd.xlane.f32.xlu0 %v5727
      %v5729 = vpop.xlane.xlu0 %5728
      %v5730 = vsel %vm5675, %v5661, 0.0
      %5731 = vadd.xlane.f32.xlu0 %v5730
      %v5732 = vpop.xlane.xlu0 %5731
      %v5733 = vsel %vm5675, %v5662, 0.0
      %5734 = vadd.xlane.f32.xlu0 %v5733
      %v5735 = vpop.xlane.xlu0 %5734
      %v5736 = vsel %vm5675, %v5663, 0.0
      %5737 = vadd.xlane.f32.xlu0 %v5736
      %v5738 = vpop.xlane.xlu0 %5737
      %v5739 = vsel %vm5675, %v5664, 0.0
      %5740 = vadd.xlane.f32.xlu0 %v5739
      %v5741 = vpop.xlane.xlu0 %5740
      %v5742 = vsel %vm5675, %v5665, 0.0
      %5743 = vadd.xlane.f32.xlu0 %v5742
      %v5744 = vpop.xlane.xlu0 %5743
      %v5745 = vsel %vm5675, %v5666, 0.0
      %5746 = vadd.xlane.f32.xlu0 %v5745
      %v5747 = vpop.xlane.xlu0 %5746
      %v5748 = vsel %vm5675, %v5667, 0.0
      %5749 = vadd.xlane.f32.xlu0 %v5748
      %v5750 = vpop.xlane.xlu0 %5749
      %v5751 = vsel %vm5675, %v5668, 0.0
      %5752 = vadd.xlane.f32.xlu0 %v5751
      %v5753 = vpop.xlane.xlu0 %5752
      %v5754 = vsel %vm5675, %v5669, 0.0
      %5755 = vadd.xlane.f32.xlu0 %v5754
      %v5756 = vpop.xlane.xlu0 %5755
      %v5757 = vsel %vm5675, %v5670, 0.0
      %5758 = vadd.xlane.f32.xlu0 %v5757
      %v5759 = vpop.xlane.xlu0 %5758
      %v5760 = vsel %vm5675, %v5671, 0.0
      %5761 = vadd.xlane.f32.xlu0 %v5760
      %v5762 = vpop.xlane.xlu0 %5761
      %v5763 = vsel %vm5675, %v5672, 0.0
      %5764 = vadd.xlane.f32.xlu0 %v5763
      %v5765 = vpop.xlane.xlu0 %5764
      %v5766 = vsel %vm5675, %v5673, 0.0
      %5767 = vadd.xlane.f32.xlu0 %v5766
      %v5768 = vpop.xlane.xlu0 %5767
      %v5769 = vsel %vm5675, %v5674, 0.0
      %5770 = vadd.xlane.f32.xlu0 %v5769
      %v5771 = vpop.xlane.xlu0 %5770
      %v5772 = vmax.f32 %v5678, 1e-12
      %v5773 = vmax.f32 %v5681, 1e-12
      %v5774 = vmax.f32 %v5684, 1e-12
      %v5775 = vmax.f32 %v5687, 1e-12
      %v5776 = vmax.f32 %v5690, 1e-12
      %v5777 = vmax.f32 %v5693, 1e-12
      %v5778 = vmax.f32 %v5696, 1e-12
      %v5779 = vmax.f32 %v5699, 1e-12
      %v5780 = vmax.f32 %v5702, 1e-12
      %v5781 = vmax.f32 %v5705, 1e-12
      %v5782 = vmax.f32 %v5708, 1e-12
      %v5783 = vmax.f32 %v5711, 1e-12
      %v5784 = vmax.f32 %v5714, 1e-12
      %v5785 = vmax.f32 %v5717, 1e-12
      %v5786 = vmax.f32 %v5720, 1e-12
      %v5787 = vmax.f32 %v5723, 1e-12
      %v5788 = vmax.f32 %v5726, 1e-12
      %v5789 = vmax.f32 %v5729, 1e-12
      %v5790 = vmax.f32 %v5732, 1e-12
      %v5791 = vmax.f32 %v5735, 1e-12
      %v5792 = vmax.f32 %v5738, 1e-12
      %v5793 = vmax.f32 %v5741, 1e-12
      %v5794 = vmax.f32 %v5744, 1e-12
      %v5795 = vmax.f32 %v5747, 1e-12
      %v5796 = vmax.f32 %v5750, 1e-12
      %v5797 = vmax.f32 %v5753, 1e-12
      %v5798 = vmax.f32 %v5756, 1e-12
      %v5799 = vmax.f32 %v5759, 1e-12
      %v5800 = vmax.f32 %v5762, 1e-12
      %v5801 = vmax.f32 %v5765, 1e-12
      %v5802 = vmax.f32 %v5768, 1e-12
      %v5803 = vmax.f32 %v5771, 1e-12
      %v5804 = vrsqrt.pop %v5772
      %v5805 = vrsqrt.pop %v5773
      %v5806 = vrsqrt.pop %v5774
      %v5807 = vrsqrt.pop %v5775
      %v5808 = vrsqrt.pop %v5776
      %v5809 = vrsqrt.pop %v5777
      %v5810 = vrsqrt.pop %v5778
      %v5811 = vrsqrt.pop %v5779
      %v5812 = vrsqrt.pop %v5780
      %v5813 = vrsqrt.pop %v5781
      %v5814 = vrsqrt.pop %v5782
      %v5815 = vrsqrt.pop %v5783
      %v5816 = vrsqrt.pop %v5784
      %v5817 = vrsqrt.pop %v5785
      %v5818 = vrsqrt.pop %v5786
      %v5819 = vrsqrt.pop %v5787
      %v5820 = vrsqrt.pop %v5788
      %v5821 = vrsqrt.pop %v5789
      %v5822 = vrsqrt.pop %v5790
      %v5823 = vrsqrt.pop %v5791
      %v5824 = vrsqrt.pop %v5792
      %v5825 = vrsqrt.pop %v5793
      %v5826 = vrsqrt.pop %v5794
      %v5827 = vrsqrt.pop %v5795
      %v5828 = vrsqrt.pop %v5796
      %v5829 = vrsqrt.pop %v5797
      %v5830 = vrsqrt.pop %v5798
      %v5831 = vrsqrt.pop %v5799
      %v5832 = vrsqrt.pop %v5800
      %v5833 = vrsqrt.pop %v5801
      %v5834 = vrsqrt.pop %v5802
      %v5835 = vrsqrt.pop %v5803
      %v5836 = vmul.f32 %v5611, %v5804
      %v5837 = vmul.f32 %v5612, %v5805
      %v5838 = vmul.f32 %v5613, %v5806
      %v5839 = vmul.f32 %v5614, %v5807
      %v5840 = vmul.f32 %v5615, %v5808
      %v5841 = vmul.f32 %v5616, %v5809
      %v5842 = vmul.f32 %v5617, %v5810
      %v5843 = vmul.f32 %v5618, %v5811
      %v5844 = vmul.f32 %v5619, %v5812
      %v5845 = vmul.f32 %v5620, %v5813
      %v5846 = vmul.f32 %v5621, %v5814
      %v5847 = vmul.f32 %v5622, %v5815
      %v5848 = vmul.f32 %v5623, %v5816
      %v5849 = vmul.f32 %v5624, %v5817
      %v5850 = vmul.f32 %v5625, %v5818
      %v5851 = vmul.f32 %v5626, %v5819
      %v5852 = vmul.f32 %v5627, %v5820
      %v5853 = vmul.f32 %v5628, %v5821
      %v5854 = vmul.f32 %v5629, %v5822
      %v5855 = vmul.f32 %v5630, %v5823
      %v5856 = vmul.f32 %v5631, %v5824
      %v5857 = vmul.f32 %v5632, %v5825
      %v5858 = vmul.f32 %v5633, %v5826
      %v5859 = vmul.f32 %v5634, %v5827
      %v5860 = vmul.f32 %v5635, %v5828
      %v5861 = vmul.f32 %v5636, %v5829
      %v5862 = vmul.f32 %v5637, %v5830
      %v5863 = vmul.f32 %v5638, %v5831
      %v5864 = vmul.f32 %v5639, %v5832
      %v5865 = vmul.f32 %v5640, %v5833
      %v5866 = vmul.f32 %v5641, %v5834
      %v5867 = vmul.f32 %v5642, %v5835
      %v5868 = vld [vmem:[%s266] sm:$0xff]
      %v5869 = vld [vmem:[%s266 + $0x8] sm:$0xff]
      %v5870 = vld [vmem:[%s266 + $0x10] sm:$0xff]
      %v5871 = vlaneseq
      %v5872 = vand.u32 %v5871, 127
      %v5873 = vadd.s32 %v5872, 128
      %v5874 = vcvt.s32.f32 %v5872
      %v5875 = vcvt.s32.f32 %v5873
      %v5876 = vrcp.pop 16.0
      %v5877 = vmul.f32 %v5874, %v5876
      %v5878 = vmul.f32 %v5875, %v5876
      %v5879 = vfloor.f32 %v5877
      %v5880 = vfloor.f32 %v5878
      %v5881 = vmul.f32 %v5879, 16.0
      %v5882 = vmul.f32 %v5880, 16.0
      %v5883 = vsub.f32 %v5874, %v5881
      %v5884 = vsub.f32 %v5875, %v5882
      %v5885 = vmul.f32 %v5879, 0.5
      %v5886 = vmul.f32 %v5880, 0.5
      %v5887 = vmul.f32 %v5883, 0.5
      %v5888 = vmul.f32 %v5884, 0.5
      %v5889 = vfloor.f32 %v5887
      %v5890 = vfloor.f32 %v5888
      %vm5891 = vcmp.eq.f32.partialorder %v5887, %v5889
      %vm5892 = vcmp.eq.f32.partialorder %v5888, %v5890
      %v5893 = vfloor.f32 %v5885
      %v5894 = vfloor.f32 %v5886
      %vm5895 = vcmp.eq.f32.partialorder %v5885, %v5893
      %vm5896 = vcmp.eq.f32.partialorder %v5886, %v5894
      %vm5897 = vmand %vm5891, %vm5895
      %vm5898 = vmand %vm5892, %vm5896
      %5900 = vset.pattern.permute.xlu0 0
      %5901 = vperm.xlu0 %5900, %v5868
      %v5902 = vpop.permute.xlu0 %5901
      %5905 = vset.pattern.permute.xlu0 0
      %5906 = vperm.xlu0 %5905, %v5869
      %v5907 = vpop.permute.xlu0 %5906
      %5910 = vset.pattern.permute.xlu0 0
      %5911 = vperm.xlu0 %5910, %v5870
      %v5912 = vpop.permute.xlu0 %5911
      %v5914 = vsub.f32 %v5902, %v5887
      %v5915 = vsub.f32 %v5902, %v5888
      %v5916 = vsub.f32 %v5907, %v5887
      %v5917 = vsub.f32 %v5907, %v5888
      %v5918 = vsub.f32 %v5912, %v5887
      %v5919 = vsub.f32 %v5912, %v5888
      %v5920 = vand.u32 2147483647, %v5914
      %v5921 = vand.u32 2147483647, %v5915
      %v5922 = vand.u32 2147483647, %v5916
      %v5923 = vand.u32 2147483647, %v5917
      %v5924 = vand.u32 2147483647, %v5918
      %v5925 = vand.u32 2147483647, %v5919
      %v5926 = vsub.f32 1.0, %v5920
      %v5927 = vsub.f32 1.0, %v5921
      %v5928 = vsub.f32 1.0, %v5922
      %v5929 = vsub.f32 1.0, %v5923
      %v5930 = vsub.f32 1.0, %v5924
      %v5931 = vsub.f32 1.0, %v5925
      %v5932 = vmax.f32 %v5926, 0.0
      %v5933 = vmax.f32 %v5927, 0.0
      %v5934 = vmax.f32 %v5928, 0.0
      %v5935 = vmax.f32 %v5929, 0.0
      %v5936 = vmax.f32 %v5930, 0.0
      %v5937 = vmax.f32 %v5931, 0.0
      %5938 = vset.pattern.permute.xlu0 1
      %5939 = vperm.xlu0 %5938, %v5868
      %v5940 = vpop.permute.xlu0 %5939
      %5942 = vset.pattern.permute.xlu0 1
      %5943 = vperm.xlu0 %5942, %v5869
      %v5944 = vpop.permute.xlu0 %5943
      %5946 = vset.pattern.permute.xlu0 1
      %5947 = vperm.xlu0 %5946, %v5870
      %v5948 = vpop.permute.xlu0 %5947
      %v5950 = vsub.f32 %v5940, %v5885
      %v5951 = vsub.f32 %v5940, %v5886
      %v5952 = vsub.f32 %v5944, %v5885
      %v5953 = vsub.f32 %v5944, %v5886
      %v5954 = vsub.f32 %v5948, %v5885
      %v5955 = vsub.f32 %v5948, %v5886
      %v5956 = vand.u32 2147483647, %v5950
      %v5957 = vand.u32 2147483647, %v5951
      %v5958 = vand.u32 2147483647, %v5952
      %v5959 = vand.u32 2147483647, %v5953
      %v5960 = vand.u32 2147483647, %v5954
      %v5961 = vand.u32 2147483647, %v5955
      %v5962 = vsub.f32 1.0, %v5956
      %v5963 = vsub.f32 1.0, %v5957
      %v5964 = vsub.f32 1.0, %v5958
      %v5965 = vsub.f32 1.0, %v5959
      %v5966 = vsub.f32 1.0, %v5960
      %v5967 = vsub.f32 1.0, %v5961
      %v5968 = vmax.f32 %v5962, 0.0
      %v5969 = vmax.f32 %v5963, 0.0
      %v5970 = vmax.f32 %v5964, 0.0
      %v5971 = vmax.f32 %v5965, 0.0
      %v5972 = vmax.f32 %v5966, 0.0
      %v5973 = vmax.f32 %v5967, 0.0
      %v5974 = vmul.f32 %v5932, %v5968
      %v5975 = vmul.f32 %v5933, %v5969
      %v5976 = vmul.f32 %v5934, %v5970
      %v5977 = vmul.f32 %v5935, %v5971
      %v5978 = vmul.f32 %v5936, %v5972
      %v5979 = vmul.f32 %v5937, %v5973
      %v5980 = vsel %vm5897, 1, 0
      %v5981 = vsel %vm5898, 1, 0
      %vm5982 = vcmp.eq.s32.totalorder %v5980, 1
      %vm5983 = vcmp.eq.s32.totalorder %v5981, 1
      %v5984 = vsel %vm5982, %v5974, 0.0
      %v5985 = vsel %vm5983, %v5975, 0.0
      %v5986 = vsel %vm5982, %v5976, 0.0
      %v5987 = vsel %vm5983, %v5977, 0.0
      %v5988 = vsel %vm5982, %v5978, 0.0
      %v5989 = vsel %vm5983, %v5979, 0.0
      %v5990 = vpack.c.bf16 %v5986, %v5984
      %v5991 = vpack.c.bf16 %v5987, %v5985
      %v5992 = vpack.c.bf16 %v5988, %v5988
      %v5993 = vpack.c.bf16 %v5989, %v5989
      %v5994 = vpack.c.bf16 %v5837, %v5836
      %v5995 = vpack.c.bf16 %v5839, %v5838
      %v5996 = vpack.c.bf16 %v5841, %v5840
      %v5997 = vpack.c.bf16 %v5843, %v5842
      %v5998 = vpack.c.bf16 %v5845, %v5844
      %v5999 = vpack.c.bf16 %v5847, %v5846
      %v6000 = vpack.c.bf16 %v5849, %v5848
      %v6001 = vpack.c.bf16 %v5851, %v5850
      %v6002 = vpack.c.bf16 %v5853, %v5852
      %v6003 = vpack.c.bf16 %v5855, %v5854
      %v6004 = vpack.c.bf16 %v5857, %v5856
      %v6005 = vpack.c.bf16 %v5859, %v5858
      %v6006 = vpack.c.bf16 %v5861, %v5860
      %v6007 = vpack.c.bf16 %v5863, %v5862
      %v6008 = vpack.c.bf16 %v5865, %v5864
      %v6009 = vpack.c.bf16 %v5867, %v5866
      %6010 = vmatprep.subr.bf16.mxu0 0
      %6011 = vmatpush1.bf16.msra.mxu0 %v6001
      %6012 = vmatprep.subr.bf16.mxu0 0
      %6013 = vmatpush1.bf16.msra.mxu0 %v6000
      %6014 = vmatprep.subr.bf16.mxu0 0
      %6015 = vmatpush1.bf16.msra.mxu0 %v5999
      %6016 = vmatprep.subr.bf16.mxu0 0
      %6017 = vmatpush1.bf16.msra.mxu0 %v5998
      %6018 = vmatprep.subr.bf16.mxu0 0
      %6019 = vmatpush1.bf16.msra.mxu0 %v5997
      %6020 = vmatprep.subr.bf16.mxu0 0
      %6021 = vmatpush1.bf16.msra.mxu0 %v5996
      %6022 = vmatprep.subr.bf16.mxu0 0
      %6023 = vmatpush1.bf16.msra.mxu0 %v5995
      %6024 = vmatprep.subr.bf16.mxu0 0
      %6025 = vmatpush1.bf16.msra.mxu0 %v5994
      %6026 = vmatprep.subr.bf16.mxu0 0
      %6027 = vmatpush2.bf16.msra.mxu0 %v6009
      %6028 = vmatprep.subr.bf16.mxu0 0
      %6029 = vmatpush2.bf16.msra.mxu0 %v6008
      %6030 = vmatprep.subr.bf16.mxu0 0
      %6031 = vmatpush2.bf16.msra.mxu0 %v6007
      %6032 = vmatprep.subr.bf16.mxu0 0
      %6033 = vmatpush2.bf16.msra.mxu0 %v6006
      %6034 = vmatprep.subr.bf16.mxu0 0
      %6035 = vmatpush2.bf16.msra.mxu0 %v6005
      %6036 = vmatprep.subr.bf16.mxu0 0
      %6037 = vmatpush2.bf16.msra.mxu0 %v6004
      %6038 = vmatprep.subr.bf16.mxu0 0
      %6039 = vmatpush2.bf16.msra.mxu0 %v6003
      %6040 = vmatprep.subr.bf16.mxu0 0
      %6041 = vmatpush2.bf16.msra.mxu0 %v6002
      %6042 = vmatprep.mubr.bf16.mxu0 %v5991
      %6043 = vmatmul.mubr.bf16.gmra.mxu0 %v5990
      %v6044 = vpop.f32.mrf.mxu0
      %v6045 = vadd.f32 0.0, %v6044
      %v6046 = vpop.f32.mrf.mxu0
      %v6047 = vpop.f32.mrf.mxu0
      %v6048 = vadd.f32 0.0, %v6047
      %v6049 = vpop.f32.mrf.mxu0
      %6050 = vmatprep.mubr.bf16.mxu0 %v5993
      %6051 = vmatmul.mubr.bf16.gmra.mxu0 %v5992
      %v6052 = vpop.f32.mrf.mxu0
      %v6053 = vadd.f32 0.0, %v6052
      %v6054 = vpop.f32.mrf.mxu0
      %v6055 = vpop.f32.mrf.mxu0
      %v6056 = vpop.f32.mrf.mxu0
      %6057 = vdwg.mxu0
      %6058 = vst.msk [vmem:[%s271] sm:$0xff] %vm5675, %v6045
      %6059 = vst.msk [vmem:[%s271 + $0x8] sm:$0xff] %vm5675, %v6048
      %6060 = vst.msk [vmem:[%s271 + $0x10] sm:$0xff] %vm5675, %v6053
      %p6061 = scmp.lt.s32.totalorder %s17, 7
      %s6062 = scalar_select %p6061, %s17, 7
      %s6063 = smul.addr %s6062, 3
      %s6064 = smul.addr %s6063, 8
      %s6065 = scalar_lea.vmem %s6, %s6064
      // Predicated region
      $region45: #{tpu_custom_call.1} parent=43 // pred_check
        %p6066 = pneg %p171
      $region46: #{tpu_custom_call.1} parent=43 // pred_check_branch
        %6068 = sbr.rel (%p6066) target = $region48
      $region47: #{tpu_custom_call.1} parent=43 // pred_region
        _
      $region48: #{tpu_custom_call.1} parent=43 // pred_fallthru
        _
    $region44: #{tpu_custom_call.1} parent=5 // pred_fallthru
      _
    %p6069 = scmp.le.s32.totalorder 2, %s12
    // Predicated region
    $region49: #{tpu_custom_call.1} parent=5 // pred_check
      %p6070 = pneg %p6069
    $region50: #{tpu_custom_call.1} parent=5 // pred_check_branch
      %6072 = sbr.rel (%p6070) target = $region52
    $region51: #{tpu_custom_call.1} parent=5 // pred_region
      %s6073 = ssub.s32 %s12, 2
      // Predicated region
      $region53: #{tpu_custom_call.1} parent=51 // pred_check
        %p6074 = pneg %p177
      $region54: #{tpu_custom_call.1} parent=51 // pred_check_branch
        %6076 = sbr.rel (%p6074) target = $region56
      $region55: #{tpu_custom_call.1} parent=51 // pred_region
        %p6077 = scmp.lt.s32.totalorder %s18, 7
        %s6078 = scalar_select %p6077, %s18, 7
        %s6079 = smul.addr %s6078, 3
        %s6080 = smul.addr %s6079, 8
        %s6081 = scalar_lea.vmem %s6, %s6080
      $region56: #{tpu_custom_call.1} parent=51 // pred_fallthru
        _
    $region52: #{tpu_custom_call.1} parent=5 // pred_fallthru
      _
  $region6: #{tpu_custom_call.1} parent=0 // loop_footer
    %s16 = sadd.s32 1, %s12
  $region7: #{tpu_custom_call.1} parent=0 // loop_footer_branch
    %11 = sbr.rel target = $region3
  $region8: #{tpu_custom_call.1} parent=0 // loop_exit
    _

</llo_original>
